<compile_context>
chip_gen: v6e
topology: v6e:2x2x1
jax: 0.10.0
libtpu: 0.0.40
codegen_flags: <defaults>
</compile_context>

<pallas_src>
import functools

import jax
import jax.numpy as jnp
from jax import lax
from jax.experimental import pallas as pl
from jax.experimental.pallas import tpu as pltpu

EPS = 1e-5
LANE = 128


# ----------------------------- Pallas kernels ------------------------------

def _conv_bn_relu_kernel(taps_ref, w_ref, scale_ref, shift_ref, out_ref):
    # taps: (tm, K) bf16, w: (K, tn) bf16, scale/shift: (1, tn) f32.
    acc = jnp.dot(taps_ref[...], w_ref[...],
                  preferred_element_type=jnp.float32)
    y = acc * scale_ref[...] + shift_ref[...]
    out_ref[...] = jnp.maximum(y, 0.0).astype(out_ref.dtype)


def _conv_bn_ds_add_relu_kernel(taps_ref, w_ref, scale_ref, shift_ref,
                                xid_ref, wd_ref, scale_d_ref, shift_d_ref,
                                out_ref):
    # conv2 + BN2 + (1x1 downsample conv + BN) residual + ReLU.
    main = jnp.dot(taps_ref[...], w_ref[...],
                   preferred_element_type=jnp.float32)
    main = main * scale_ref[...] + shift_ref[...]
    ident = jnp.dot(xid_ref[...], wd_ref[...],
                    preferred_element_type=jnp.float32)
    ident = ident * scale_d_ref[...] + shift_d_ref[...]
    out_ref[...] = jnp.maximum(main + ident, 0.0).astype(out_ref.dtype)


def _conv_bn_identity_add_relu_kernel(taps_ref, w_ref, scale_ref, shift_ref,
                                      xid_ref, out_ref):
    # conv2 + BN2 + plain identity residual + ReLU (no MXU work on identity).
    main = jnp.dot(taps_ref[...], w_ref[...],
                   preferred_element_type=jnp.float32)
    main = main * scale_ref[...] + shift_ref[...]
    out_ref[...] = jnp.maximum(main + xid_ref[...], 0.0).astype(out_ref.dtype)


# --------------------------- pallas_call wrappers ----------------------------

def _compiler_params(block_bytes):
    # double-buffered blocks + margin, clamped to a range safe on v5e/v6e/v7x.
    vmem = int(min(max(2 * block_bytes + (2 << 20), 32 << 20), 48 << 20))
    return pltpu.CompilerParams(
        dimension_semantics=("parallel", "parallel"),
        vmem_limit_bytes=vmem)


def _conv1_call(taps, w, scale, shift, tm, tn):
    Mp, Kp = taps.shape
    Coutp = w.shape[1]
    grid = (Mp // tm, Coutp // tn)
    blk_bytes = tm * Kp * 2 + Kp * tn * 2 + 2 * tn * 4 + tm * tn * 2
    return pl.pallas_call(
        _conv_bn_relu_kernel,
        out_shape=jax.ShapeDtypeStruct((Mp, Coutp), jnp.bfloat16),
        grid_spec=pltpu.PrefetchScalarGridSpec(
            num_scalar_prefetch=0,
            grid=grid,
            in_specs=[
                pl.BlockSpec((tm, Kp), lambda i, j: (i, 0)),
                pl.BlockSpec((Kp, tn), lambda i, j: (0, j)),
                pl.BlockSpec((1, tn), lambda i, j: (0, j)),
                pl.BlockSpec((1, tn), lambda i, j: (0, j)),
            ],
            out_specs=pl.BlockSpec((tm, tn), lambda i, j: (i, j)),
        ),
        compiler_params=_compiler_params(blk_bytes),
    )(taps, w, scale, shift)


def _conv2_ds_call(taps, w, scale, shift, xid, wd, scale_d, shift_d, tm, tn):
    Mp, Kp = taps.shape
    Coutp = w.shape[1]
    Cinp = xid.shape[1]
    grid = (Mp // tm, Coutp // tn)
    blk_bytes = (tm * Kp * 2 + Kp * tn * 2 + 4 * tn * 4
                 + tm * Cinp * 2 + Cinp * tn * 2 + tm * tn * 4)
    return pl.pallas_call(
        _conv_bn_ds_add_relu_kernel,
        out_shape=jax.ShapeDtypeStruct((Mp, Coutp), jnp.float32),
        grid_spec=pltpu.PrefetchScalarGridSpec(
            num_scalar_prefetch=0,
            grid=grid,
            in_specs=[
                pl.BlockSpec((tm, Kp), lambda i, j: (i, 0)),
                pl.BlockSpec((Kp, tn), lambda i, j: (0, j)),
                pl.BlockSpec((1, tn), lambda i, j: (0, j)),
                pl.BlockSpec((1, tn), lambda i, j: (0, j)),
                pl.BlockSpec((tm, Cinp), lambda i, j: (i, 0)),
                pl.BlockSpec((Cinp, tn), lambda i, j: (0, j)),
                pl.BlockSpec((1, tn), lambda i, j: (0, j)),
                pl.BlockSpec((1, tn), lambda i, j: (0, j)),
            ],
            out_specs=pl.BlockSpec((tm, tn), lambda i, j: (i, j)),
        ),
        compiler_params=_compiler_params(blk_bytes),
    )(taps, w, scale, shift, xid, wd, scale_d, shift_d)


def _conv2_id_call(taps, w, scale, shift, xid, tm, tn):
    Mp, Kp = taps.shape
    Coutp = w.shape[1]
    grid = (Mp // tm, Coutp // tn)
    blk_bytes = (tm * Kp * 2 + Kp * tn * 2 + 2 * tn * 4
                 + tm * tn * 4 + tm * tn * 4)
    return pl.pallas_call(
        _conv_bn_identity_add_relu_kernel,
        out_shape=jax.ShapeDtypeStruct((Mp, Coutp), jnp.float32),
        grid_spec=pltpu.PrefetchScalarGridSpec(
            num_scalar_prefetch=0,
            grid=grid,
            in_specs=[
                pl.BlockSpec((tm, Kp), lambda i, j: (i, 0)),
                pl.BlockSpec((Kp, tn), lambda i, j: (0, j)),
                pl.BlockSpec((1, tn), lambda i, j: (0, j)),
                pl.BlockSpec((1, tn), lambda i, j: (0, j)),
                pl.BlockSpec((tm, tn), lambda i, j: (i, j)),
            ],
            out_specs=pl.BlockSpec((tm, tn), lambda i, j: (i, j)),
        ),
        compiler_params=_compiler_params(blk_bytes),
    )(taps, w, scale, shift, xid)


# ------------------------------- JAX glue -----------------------------------

def _round_up(x, m):
    return ((x + m - 1) // m) * m


def _pick_tiles(M, Coutp):
    # Cout tile <= 256 (vreg pressure); M tile as large as possible while
    # keeping >= 2 grid steps along M (v7x megacore sharding).
    tn = 256 if Coutp % 256 == 0 else 128
    tm = 256 if tn == 256 else 512
    while tm > 8 and M < 2 * tm:
        tm //= 2
    return tm, tn


def _bn_fold_padded(bn, cp):
    """Fold inference-mode BN to per-channel scale/shift, padded to cp lanes."""
    scale = bn["gamma"] / jnp.sqrt(bn["var"] + EPS)
    shift = bn["beta"] - bn["mean"] * scale
    c = scale.shape[0]
    scale = jnp.pad(scale, (0, cp - c), constant_values=1.0)
    shift = jnp.pad(shift, (0, cp - c))
    return (scale.reshape(1, cp).astype(jnp.float32),
            shift.reshape(1, cp).astype(jnp.float32))


def _extract_taps_concat(x_nhwc, stride):
    """3x3 / pad=1 im2col, taps concatenated along channels -> (M, 9*C)."""
    N, H, W, C = x_nhwc.shape
    Ho = (H - 1) // stride + 1
    Wo = (W - 1) // stride + 1
    xp = jnp.pad(x_nhwc, ((0, 0), (1, 1), (1, 1), (0, 0)))
    cols = []
    for ky in range(3):
        for kx in range(3):
            sl = xp[:, ky: ky + stride * (Ho - 1) + 1: stride,
                       kx: kx + stride * (Wo - 1) + 1: stride, :]
            cols.append(sl.reshape(N * Ho * Wo, C))
    return jnp.concatenate(cols, axis=1), (N, Ho, Wo)


def init_block_params(key, inplanes, outplanes, stride):
    ks = jax.random.split(key, 16)

    def bn_params(k, c):
        k1, k2, k3, k4 = jax.random.split(k, 4)
        return dict(
            gamma=1.0 + 0.1 * jax.random.normal(k1, (c,), jnp.float32),
            beta=0.1 * jax.random.normal(k2, (c,), jnp.float32),
            mean=0.1 * jax.random.normal(k3, (c,), jnp.float32),
            var=1.0 + 0.1 * jnp.abs(jax.random.normal(k4, (c,), jnp.float32)),
        )

    p = dict(
        w1=0.2 * jax.random.normal(ks[0], (outplanes, inplanes, 3, 3),
                                   jnp.float32),
        bn1=bn_params(ks[1], outplanes),
        w2=0.2 * jax.random.normal(ks[2], (outplanes, outplanes, 3, 3),
                                   jnp.float32),
        bn2=bn_params(ks[3], outplanes),
    )
    if stride != 1 or inplanes != outplanes:
        p["wd"] = 0.2 * jax.random.normal(ks[4], (outplanes, inplanes, 1, 1),
                                          jnp.float32)
        p["bnd"] = bn_params(ks[5], outplanes)
    return p


@functools.partial(jax.jit, static_argnames=("stride",))
def block_forward_pallas(x_nchw, params, stride=1):
    """BasicBlock forward (inference-mode BN), NCHW in -> NCHW out."""
    x = jnp.transpose(x_nchw, (0, 2, 3, 1)).astype(jnp.float32)   # NHWC
    N, H, W, Cin = x.shape
    Cout = params["w1"].shape[0]
    has_ds = "wd" in params

    Coutp = _round_up(Cout, LANE)
    Cinp = _round_up(Cin, LANE)

    # ---- conv1 (3x3, stride) + bn1 + relu -> bf16 intermediate ----
    taps1, (_, Ho, Wo) = _extract_taps_concat(x, stride)          # (M, 9*Cin)
    M = N * Ho * Wo
    tm, tn = _pick_tiles(M, Coutp)
    Mp = _round_up(M, tm)

    K1 = taps1.shape[1]
    Kp1 = _round_up(K1, LANE)
    taps1 = jnp.pad(taps1, ((0, Mp - M), (0, Kp1 - K1))).astype(jnp.bfloat16)

    w1 = jnp.transpose(params["w1"], (2, 3, 1, 0)).reshape(K1, Cout)
    w1 = jnp.pad(w1, ((0, Kp1 - K1), (0, Coutp - Cout))).astype(jnp.bfloat16)
    s1, b1 = _bn_fold_padded(params["bn1"], Coutp)

    y1 = _conv1_call(taps1, w1, s1, b1, tm, tn)                   # (Mp, Coutp) bf16
    y1_img = y1[:M].reshape(N, Ho, Wo, Coutp)      # padded channels are exactly 0

    # ---- conv2 (3x3, stride 1) + bn2 + residual (+downsample) + relu ----
    taps2, _ = _extract_taps_concat(y1_img, 1)                    # (M, 9*Coutp) bf16
    Kp2 = 9 * Coutp
    taps2 = jnp.pad(taps2, ((0, Mp - M), (0, 0)))

    w2t = jnp.transpose(params["w2"], (2, 3, 1, 0))               # (3,3,Cmid,Cout)
    w2t = jnp.pad(w2t, ((0, 0), (0, 0),
                        (0, Coutp - Cout), (0, Coutp - Cout)))
    w2 = w2t.reshape(Kp2, Coutp).astype(jnp.bfloat16)
    s2, b2 = _bn_fold_padded(params["bn2"], Coutp)

    if has_ds:
        x_ds = x[:, 0: stride * (Ho - 1) + 1: stride,
                    0: stride * (Wo - 1) + 1: stride, :].reshape(M, Cin)
        x_ds = jnp.pad(x_ds, ((0, Mp - M), (0, Cinp - Cin))).astype(jnp.bfloat16)
        wd = jnp.pad(params["wd"][:, :, 0, 0].T,
                     ((0, Cinp - Cin), (0, Coutp - Cout))).astype(jnp.bfloat16)
        sd, bd = _bn_fold_padded(params["bnd"], Coutp)
        out = _conv2_ds_call(taps2, w2, s2, b2, x_ds, wd, sd, bd, tm, tn)
    else:
        # identity residual: no downsample means Cin == Cout and stride == 1
        xid = jnp.pad(x.reshape(M, Cin),
                      ((0, Mp - M), (0, Coutp - Cin))).astype(jnp.float32)
        out = _conv2_id_call(taps2, w2, s2, b2, xid, tm, tn)

    out_img = out[:M, :Cout].reshape(N, Ho, Wo, Cout)
    return jnp.transpose(out_img, (0, 3, 1, 2))                   # back to NCHW


# ---------------------------- pure-JAX reference -----------------------------

def _ref_bn(x_nchw, gamma, beta, mean, var):
    r = lambda a: a.reshape(1, -1, 1, 1)
    return (x_nchw - r(mean)) / jnp.sqrt(r(var) + EPS) * r(gamma) + r(beta)


def block_forward_ref(x_nchw, params, stride=1):
    conv = lambda x, w, s, p: lax.conv_general_dilated(
        x, w, (s, s), [(p, p), (p, p)],
        dimension_numbers=("NCHW", "OIHW", "NCHW"))
    out = conv(x_nchw, params["w1"], stride, 1)
    out = jnp.maximum(_ref_bn(out, **params["bn1"]), 0.0)
    out = conv(out, params["w2"], 1, 1)
    out = _ref_bn(out, **params["bn2"])
    if "wd" in params:
        identity = _ref_bn(conv(x_nchw, params["wd"], stride, 0),
                           **params["bnd"])
    else:
        identity = x_nchw
    return jnp.maximum(out + identity, 0.0)


# --------------------------------- main --------------------------------------

def _check(x, params, stride):
    out = jax.block_until_ready(block_forward_pallas(x, params, stride=stride))
    ref = block_forward_ref(x, params, stride=stride)
    assert out.shape == ref.shape, (out.shape, ref.shape)
    err = float(jnp.max(jnp.abs(out - ref)))
    scale = max(1.0, float(jnp.max(jnp.abs(ref))))
    # bf16 MXU inputs + bf16 intermediate activation -> relaxed tolerance
    assert err <= 4e-2 * scale, (err, scale)


if __name__ == "__main__":
    key = jax.random.PRNGKey(0)
    k_x1, k_p1, k_x2, k_p2 = jax.random.split(key, 4)

    # Case 1: channel change -> downsample path (1x1 conv + BN) exercised.
    inplanes, outplanes, stride = 4, 8, 1
    N, H, W = 2, 16, 16
    x1 = jax.random.normal(k_x1, (N, inplanes, H, W), jnp.float32)
    p1 = init_block_params(k_p1, inplanes, outplanes, stride)
    _check(x1, p1, stride)

    # Case 2: identity residual (no downsample) -> dedicated kernel exercised.
    x2 = jax.random.normal(k_x2, (N, outplanes, H, W), jnp.float32)
    p2 = init_block_params(k_p2, outplanes, outplanes, 1)
    _check(x2, p2, 1)

    print("KERNEL_OK")
</pallas_src>

<mosaic_0001>
module attributes {stable_mosaic.version = 11 : i64} {
  func.func @_conv_bn_relu_kernel(%arg0: i32, %arg1: i32, %arg2: memref<256x128xbf16, #tpu.memory_space<vmem>>, %arg3: memref<128x128xbf16, #tpu.memory_space<vmem>>, %arg4: memref<1x128xf32, #tpu.memory_space<vmem>>, %arg5: memref<1x128xf32, #tpu.memory_space<vmem>>, %arg6: memref<256x128xbf16, #tpu.memory_space<vmem>>) attributes {dimension_semantics = [#tpu.dimension_semantics<parallel>, #tpu.dimension_semantics<parallel>], iteration_bounds = array<i64: 2, 1>, scalar_prefetch = 0 : i64, scratch_operands = 0 : i64, tpu.core_type = #tpu.core_type<tc>, window_params = [{transform_indices = @transform_0, window_bounds = array<i64: 256, 128>}, {transform_indices = @transform_1, window_bounds = array<i64: 128, 128>}, {transform_indices = @transform_2, window_bounds = array<i64: 1, 128>}, {transform_indices = @transform_3, window_bounds = array<i64: 1, 128>}, {transform_indices = @transform_4, window_bounds = array<i64: 256, 128>}]} {
    %c0 = arith.constant 0 : index
    %c0_0 = arith.constant 0 : index
    %0 = vector.load %arg2[%c0, %c0_0] : memref<256x128xbf16, #tpu.memory_space<vmem>>, vector<256x128xbf16>
    %c0_1 = arith.constant 0 : index
    %c0_2 = arith.constant 0 : index
    %1 = vector.load %arg3[%c0_1, %c0_2] : memref<128x128xbf16, #tpu.memory_space<vmem>>, vector<128x128xbf16>
    %cst = arith.constant dense<0.000000e+00> : vector<256x128xf32>
    %2 = tpu.matmul %0, %1, %cst {dimension_numbers = #tpu.dot_dimension_numbers<[1], [0], [0], [1], [0, 0, 1, 1], [], []>} : vector<256x128xbf16>, vector<128x128xbf16>, vector<256x128xf32> -> vector<256x128xf32>
    %c0_3 = arith.constant 0 : index
    %c0_4 = arith.constant 0 : index
    %3 = vector.load %arg4[%c0_3, %c0_4] : memref<1x128xf32, #tpu.memory_space<vmem>>, vector<1x128xf32>
    %4 = vector.broadcast %3 : vector<1x128xf32> to vector<256x128xf32>
    %5 = arith.mulf %2, %4 : vector<256x128xf32>
    %c0_5 = arith.constant 0 : index
    %c0_6 = arith.constant 0 : index
    %6 = vector.load %arg5[%c0_5, %c0_6] : memref<1x128xf32, #tpu.memory_space<vmem>>, vector<1x128xf32>
    %7 = vector.broadcast %6 : vector<1x128xf32> to vector<256x128xf32>
    %8 = arith.addf %5, %7 : vector<256x128xf32>
    %cst_7 = arith.constant 0.000000e+00 : f32
    %9 = vector.broadcast %cst_7 : f32 to vector<256x128xf32>
    %10 = arith.maximumf %8, %9 : vector<256x128xf32>
    %11 = arith.truncf %10 : vector<256x128xf32> to vector<256x128xbf16>
    %c0_8 = arith.constant 0 : index
    %c0_9 = arith.constant 0 : index
    %12 = vector.load %arg6[%c0_8, %c0_9] : memref<256x128xbf16, #tpu.memory_space<vmem>>, vector<256x128xbf16>
    tpu.vector_store %arg6[%c0_8, %c0_9], %11 {strides = array<i32>} : memref<256x128xbf16, #tpu.memory_space<vmem>>, vector<256x128xbf16>,
    return
  }
  func.func @transform_0(%arg0: i32, %arg1: i32) -> (i32, i32) {
    %c0_i32 = arith.constant 0 : i32
    %c0_i32_0 = arith.constant 0 : i32
    return %arg0, %c0_i32 : i32, i32
  }
  func.func @transform_1(%arg0: i32, %arg1: i32) -> (i32, i32) {
    %c0_i32 = arith.constant 0 : i32
    %c0_i32_0 = arith.constant 0 : i32
    return %c0_i32, %arg1 : i32, i32
  }
  func.func @transform_2(%arg0: i32, %arg1: i32) -> (i32, i32) {
    %c0_i32 = arith.constant 0 : i32
    %c0_i32_0 = arith.constant 0 : i32
    return %c0_i32, %arg1 : i32, i32
  }
  func.func @transform_3(%arg0: i32, %arg1: i32) -> (i32, i32) {
    %c0_i32 = arith.constant 0 : i32
    %c0_i32_0 = arith.constant 0 : i32
    return %c0_i32, %arg1 : i32, i32
  }
  func.func @transform_4(%arg0: i32, %arg1: i32) -> (i32, i32) {
    %c0_i32 = arith.constant 0 : i32
    return %arg0, %arg1 : i32, i32
  }
}

module attributes {stable_mosaic.version = 11 : i64} {
  func.func @_conv_bn_ds_add_relu_kernel(%arg0: i32, %arg1: i32, %arg2: memref<256x1152xbf16, #tpu.memory_space<vmem>>, %arg3: memref<1152x128xbf16, #tpu.memory_space<vmem>>, %arg4: memref<1x128xf32, #tpu.memory_space<vmem>>, %arg5: memref<1x128xf32, #tpu.memory_space<vmem>>, %arg6: memref<256x128xbf16, #tpu.memory_space<vmem>>, %arg7: memref<128x128xbf16, #tpu.memory_space<vmem>>, %arg8: memref<1x128xf32, #tpu.memory_space<vmem>>, %arg9: memref<1x128xf32, #tpu.memory_space<vmem>>, %arg10: memref<256x128xf32, #tpu.memory_space<vmem>>) attributes {dimension_semantics = [#tpu.dimension_semantics<parallel>, #tpu.dimension_semantics<parallel>], iteration_bounds = array<i64: 2, 1>, scalar_prefetch = 0 : i64, scratch_operands = 0 : i64, tpu.core_type = #tpu.core_type<tc>, window_params = [{transform_indices = @transform_0, window_bounds = array<i64: 256, 1152>}, {transform_indices = @transform_1, window_bounds = array<i64: 1152, 128>}, {transform_indices = @transform_2, window_bounds = array<i64: 1, 128>}, {transform_indices = @transform_3, window_bounds = array<i64: 1, 128>}, {transform_indices = @transform_4, window_bounds = array<i64: 256, 128>}, {transform_indices = @transform_5, window_bounds = array<i64: 128, 128>}, {transform_indices = @transform_6, window_bounds = array<i64: 1, 128>}, {transform_indices = @transform_7, window_bounds = array<i64: 1, 128>}, {transform_indices = @transform_8, window_bounds = array<i64: 256, 128>}]} {
    %c0 = arith.constant 0 : index
    %c0_0 = arith.constant 0 : index
    %0 = vector.load %arg2[%c0, %c0_0] : memref<256x1152xbf16, #tpu.memory_space<vmem>>, vector<256x1152xbf16>
    %c0_1 = arith.constant 0 : index
    %c0_2 = arith.constant 0 : index
    %1 = vector.load %arg3[%c0_1, %c0_2] : memref<1152x128xbf16, #tpu.memory_space<vmem>>, vector<1152x128xbf16>
    %cst = arith.constant dense<0.000000e+00> : vector<256x128xf32>
    %2 = tpu.matmul %0, %1, %cst {dimension_numbers = #tpu.dot_dimension_numbers<[1], [0], [0], [1], [0, 0, 1, 1], [], []>} : vector<256x1152xbf16>, vector<1152x128xbf16>, vector<256x128xf32> -> vector<256x128xf32>
    %c0_3 = arith.constant 0 : index
    %c0_4 = arith.constant 0 : index
    %3 = vector.load %arg4[%c0_3, %c0_4] : memref<1x128xf32, #tpu.memory_space<vmem>>, vector<1x128xf32>
    %4 = vector.broadcast %3 : vector<1x128xf32> to vector<256x128xf32>
    %5 = arith.mulf %2, %4 : vector<256x128xf32>
    %c0_5 = arith.constant 0 : index
    %c0_6 = arith.constant 0 : index
    %6 = vector.load %arg5[%c0_5, %c0_6] : memref<1x128xf32, #tpu.memory_space<vmem>>, vector<1x128xf32>
    %7 = vector.broadcast %6 : vector<1x128xf32> to vector<256x128xf32>
    %8 = arith.addf %5, %7 : vector<256x128xf32>
    %c0_7 = arith.constant 0 : index
    %c0_8 = arith.constant 0 : index
    %9 = vector.load %arg6[%c0_7, %c0_8] : memref<256x128xbf16, #tpu.memory_space<vmem>>, vector<256x128xbf16>
    %c0_9 = arith.constant 0 : index
    %c0_10 = arith.constant 0 : index
    %10 = vector.load %arg7[%c0_9, %c0_10] : memref<128x128xbf16, #tpu.memory_space<vmem>>, vector<128x128xbf16>
    %cst_11 = arith.constant dense<0.000000e+00> : vector<256x128xf32>
    %11 = tpu.matmul %9, %10, %cst_11 {dimension_numbers = #tpu.dot_dimension_numbers<[1], [0], [0], [1], [0, 0, 1, 1], [], []>} : vector<256x128xbf16>, vector<128x128xbf16>, vector<256x128xf32> -> vector<256x128xf32>
    %c0_12 = arith.constant 0 : index
    %c0_13 = arith.constant 0 : index
    %12 = vector.load %arg8[%c0_12, %c0_13] : memref<1x128xf32, #tpu.memory_space<vmem>>, vector<1x128xf32>
    %13 = vector.broadcast %12 : vector<1x128xf32> to vector<256x128xf32>
    %14 = arith.mulf %11, %13 : vector<256x128xf32>
    %c0_14 = arith.constant 0 : index
    %c0_15 = arith.constant 0 : index
    %15 = vector.load %arg9[%c0_14, %c0_15] : memref<1x128xf32, #tpu.memory_space<vmem>>, vector<1x128xf32>
    %16 = vector.broadcast %15 : vector<1x128xf32> to vector<256x128xf32>
    %17 = arith.addf %14, %16 : vector<256x128xf32>
    %18 = arith.addf %8, %17 : vector<256x128xf32>
    %cst_16 = arith.constant 0.000000e+00 : f32
    %19 = vector.broadcast %cst_16 : f32 to vector<256x128xf32>
    %20 = arith.maximumf %18, %19 : vector<256x128xf32>
    %c0_17 = arith.constant 0 : index
    %c0_18 = arith.constant 0 : index
    %21 = vector.load %arg10[%c0_17, %c0_18] : memref<256x128xf32, #tpu.memory_space<vmem>>, vector<256x128xf32>
    tpu.vector_store %arg10[%c0_17, %c0_18], %20 {strides = array<i32>} : memref<256x128xf32, #tpu.memory_space<vmem>>, vector<256x128xf32>,
    return
  }
  func.func @transform_0(%arg0: i32, %arg1: i32) -> (i32, i32) {
    %c0_i32 = arith.constant 0 : i32
    %c0_i32_0 = arith.constant 0 : i32
    return %arg0, %c0_i32 : i32, i32
  }
  func.func @transform_1(%arg0: i32, %arg1: i32) -> (i32, i32) {
    %c0_i32 = arith.constant 0 : i32
    %c0_i32_0 = arith.constant 0 : i32
    return %c0_i32, %arg1 : i32, i32
  }
  func.func @transform_2(%arg0: i32, %arg1: i32) -> (i32, i32) {
    %c0_i32 = arith.constant 0 : i32
    %c0_i32_0 = arith.constant 0 : i32
    return %c0_i32, %arg1 : i32, i32
  }
  func.func @transform_3(%arg0: i32, %arg1: i32) -> (i32, i32) {
    %c0_i32 = arith.constant 0 : i32
    %c0_i32_0 = arith.constant 0 : i32
    return %c0_i32, %arg1 : i32, i32
  }
  func.func @transform_4(%arg0: i32, %arg1: i32) -> (i32, i32) {
    %c0_i32 = arith.constant 0 : i32
    %c0_i32_0 = arith.constant 0 : i32
    return %arg0, %c0_i32 : i32, i32
  }
  func.func @transform_5(%arg0: i32, %arg1: i32) -> (i32, i32) {
    %c0_i32 = arith.constant 0 : i32
    %c0_i32_0 = arith.constant 0 : i32
    return %c0_i32, %arg1 : i32, i32
  }
  func.func @transform_6(%arg0: i32, %arg1: i32) -> (i32, i32) {
    %c0_i32 = arith.constant 0 : i32
    %c0_i32_0 = arith.constant 0 : i32
    return %c0_i32, %arg1 : i32, i32
  }
  func.func @transform_7(%arg0: i32, %arg1: i32) -> (i32, i32) {
    %c0_i32 = arith.constant 0 : i32
    %c0_i32_0 = arith.constant 0 : i32
    return %c0_i32, %arg1 : i32, i32
  }
  func.func @transform_8(%arg0: i32, %arg1: i32) -> (i32, i32) {
    %c0_i32 = arith.constant 0 : i32
    return %arg0, %arg1 : i32, i32
  }
}

</mosaic_0001>

<llo_original>
// kernel: block_forward_pallas.2
$region0: #{block_forward_pallas.2}
  #allocation0 [shape = 'u32[]', space=smem, size = 0x4, offset = 0x4, fixed_abs, tag = 'smem constant byte address 0x4 - core index']
  #allocation1 [shape = 'u32[144,128]{1,0:T(1,128)}', space=vmem, size = 0x12000, scoped, tag = 'internal scratch']
  %s0 = inlined_call_operand.vmem [shape: bf16[512,128], index: 0, kind: input, shape index: {}]
  %s1 = inlined_call_operand.vmem [shape: bf16[128,128], index: 1, kind: input, shape index: {}]
  %s2 = inlined_call_operand.vmem [shape: f32[1,128], index: 2, kind: input, shape index: {}]
  %s3 = inlined_call_operand.vmem [shape: f32[1,128], index: 3, kind: input, shape index: {}]
  %s4 = inlined_call_operand.vmem [shape: bf16[512,128], index: 4, kind: output, shape index: {}]
  %s5 = sld [smem:[#allocation0]]
  $region49: #{block_forward_pallas.2} parent=0
    _
  %s7 = ssub.s32 1, %s5
  %s8 = scalar_select 0, %s7, %s5
  loop: start=0, step=1, limit=4
  $region2: #{block_forward_pallas.2} parent=0 // loop_pre_header
    _
  $region3: #{block_forward_pallas.2} parent=0 // loop_header
    %s10 = sphi 0, %s14
    %p11 = scmp.ge.s32.totalorder %s10, 4
    %s17 = sphi 0, %s29
    %s18 = sphi 0, %s25
    %s19 = sphi 0, %s17
    %s20 = sphi 0, %s18
    %s21 = sphi 0, %s19
    %s22 = sphi 0, %s20
    %s32 = sphi 0, %s34
    %s35 = sphi 0, %s32
    %s36 = sphi 0, %s35
    %s52 = sphi 0, %s36
    %s58 = sphi 0, %s60
    %s61 = sphi 0, %s58
    %s62 = sphi 0, %s61
    %s78 = sphi 0, %s62
    %s84 = sphi 0, %s86
    %s87 = sphi 0, %s84
    %s88 = sphi 0, %s87
    %s104 = sphi 0, %s88
    %s110 = sphi 0, %s112
    %s113 = sphi 0, %s110
    %s114 = sphi 0, %s113
    %s130 = sphi 0, %s114
    %s138 = sphi 0, %s140
    %s141 = sphi 0, %s138
    %s142 = sphi 0, %s141
    %s158 = sphi 0, %s142
  $region4: #{block_forward_pallas.2} parent=0 // loop_header_branch
    %13 = sbr.rel (%p11) target = $region8
  $region5: #{block_forward_pallas.2} parent=0 // loop_body
    %s15 = ssub.s32 %s10, 1
    %s16 = ssub.s32 %s10, 2
    %s23 = sadd.s32 1, %s18
    %p24 = scmp.ge.s32.totalorder %s23, 1
    %s25 = scalar_select %p24, 0, %s23
    %s26 = sadd.s32 1, %s17
    %s27 = scalar_select %p24, %s26, %s17
    %p28 = scmp.ge.s32.totalorder %s27, 2
    %s29 = scalar_select %p28, 0, %s27
    %s30 = ssub.s32 %s17, %s29
    %p31 = scmp.eq.s32.totalorder %s30, 0
    %s33 = sadd.s32 %s32, 1
    %s34 = scalar_select %p31, %s32, %s33
    %p37 = pneg %p31
    %p38 = scmp.eq.s32.totalorder %s10, 1
    %p39 = por %p37, %p38
    %p40 = scmp.ne.s32.totalorder %s32, %s35
    %p41 = scmp.eq.s32.totalorder %s10, 0
    %p42 = por %p40, %p41
    %p43 = scmp.ne.s32.totalorder %s32, %s35
    %p44 = scmp.eq.s32.totalorder %s15, 1
    %p45 = por %p43, %p44
    %p46 = scmp.ne.s32.totalorder %s35, %s36
    %p47 = scmp.eq.s32.totalorder %s15, 0
    %p48 = por %p46, %p47
    %p49 = scmp.ne.s32.totalorder %s35, %s36
    %p50 = scmp.eq.s32.totalorder %s16, 1
    %p51 = por %p49, %p50
    %p53 = scmp.ne.s32.totalorder %s36, %s52
    %p54 = scmp.eq.s32.totalorder %s16, 0
    %p55 = por %p53, %p54
    %s56 = ssub.s32 %s18, %s25
    %p57 = scmp.eq.s32.totalorder %s56, 0
    %s59 = sadd.s32 %s58, 1
    %s60 = scalar_select %p57, %s58, %s59
    %p63 = pneg %p57
    %p64 = scmp.eq.s32.totalorder %s10, 1
    %p65 = por %p63, %p64
    %p66 = scmp.ne.s32.totalorder %s58, %s61
    %p67 = scmp.eq.s32.totalorder %s10, 0
    %p68 = por %p66, %p67
    %p69 = scmp.ne.s32.totalorder %s58, %s61
    %p70 = scmp.eq.s32.totalorder %s15, 1
    %p71 = por %p69, %p70
    %p72 = scmp.ne.s32.totalorder %s61, %s62
    %p73 = scmp.eq.s32.totalorder %s15, 0
    %p74 = por %p72, %p73
    %p75 = scmp.ne.s32.totalorder %s61, %s62
    %p76 = scmp.eq.s32.totalorder %s16, 1
    %p77 = por %p75, %p76
    %p79 = scmp.ne.s32.totalorder %s62, %s78
    %p80 = scmp.eq.s32.totalorder %s16, 0
    %p81 = por %p79, %p80
    %s82 = ssub.s32 %s18, %s25
    %p83 = scmp.eq.s32.totalorder %s82, 0
    %s85 = sadd.s32 %s84, 1
    %s86 = scalar_select %p83, %s84, %s85
    %p89 = pneg %p83
    %p90 = scmp.eq.s32.totalorder %s10, 1
    %p91 = por %p89, %p90
    %p92 = scmp.ne.s32.totalorder %s84, %s87
    %p93 = scmp.eq.s32.totalorder %s10, 0
    %p94 = por %p92, %p93
    %p95 = scmp.ne.s32.totalorder %s84, %s87
    %p96 = scmp.eq.s32.totalorder %s15, 1
    %p97 = por %p95, %p96
    %p98 = scmp.ne.s32.totalorder %s87, %s88
    %p99 = scmp.eq.s32.totalorder %s15, 0
    %p100 = por %p98, %p99
    %p101 = scmp.ne.s32.totalorder %s87, %s88
    %p102 = scmp.eq.s32.totalorder %s16, 1
    %p103 = por %p101, %p102
    %p105 = scmp.ne.s32.totalorder %s88, %s104
    %p106 = scmp.eq.s32.totalorder %s16, 0
    %p107 = por %p105, %p106
    %s108 = ssub.s32 %s18, %s25
    %p109 = scmp.eq.s32.totalorder %s108, 0
    %s111 = sadd.s32 %s110, 1
    %s112 = scalar_select %p109, %s110, %s111
    %p115 = pneg %p109
    %p116 = scmp.eq.s32.totalorder %s10, 1
    %p117 = por %p115, %p116
    %p118 = scmp.ne.s32.totalorder %s110, %s113
    %p119 = scmp.eq.s32.totalorder %s10, 0
    %p120 = por %p118, %p119
    %p121 = scmp.ne.s32.totalorder %s110, %s113
    %p122 = scmp.eq.s32.totalorder %s15, 1
    %p123 = por %p121, %p122
    %p124 = scmp.ne.s32.totalorder %s113, %s114
    %p125 = scmp.eq.s32.totalorder %s15, 0
    %p126 = por %p124, %p125
    %p127 = scmp.ne.s32.totalorder %s113, %s114
    %p128 = scmp.eq.s32.totalorder %s16, 1
    %p129 = por %p127, %p128
    %p131 = scmp.ne.s32.totalorder %s114, %s130
    %p132 = scmp.eq.s32.totalorder %s16, 0
    %p133 = por %p131, %p132
    %s134 = ssub.s32 %s17, %s29
    %s135 = ssub.s32 %s18, %s25
    %s136 = sor.u32 %s134, %s135
    %p137 = scmp.eq.s32.totalorder %s136, 0
    %s139 = sadd.s32 %s138, 1
    %s140 = scalar_select %p137, %s138, %s139
    %p143 = pneg %p137
    %p144 = scmp.eq.s32.totalorder %s10, 1
    %p145 = por %p143, %p144
    %p146 = scmp.ne.s32.totalorder %s138, %s141
    %p147 = scmp.eq.s32.totalorder %s10, 0
    %p148 = por %p146, %p147
    %p149 = scmp.ne.s32.totalorder %s138, %s141
    %p150 = scmp.eq.s32.totalorder %s15, 1
    %p151 = por %p149, %p150
    %p152 = scmp.ne.s32.totalorder %s141, %s142
    %p153 = scmp.eq.s32.totalorder %s15, 0
    %p154 = por %p152, %p153
    %p155 = scmp.ne.s32.totalorder %s141, %s142
    %p156 = scmp.eq.s32.totalorder %s16, 1
    %p157 = por %p155, %p156
    %p159 = scmp.ne.s32.totalorder %s142, %s158
    %p160 = scmp.eq.s32.totalorder %s16, 0
    %p161 = por %p159, %p160
    %p162 = scmp.le.s32.totalorder 1, %s10
    %p163 = scmp.lt.s32.totalorder %s10, 3
    %p164 = pnand %p162, %p163
    %p165 = pneg %p164
    // Predicated region
    $region9: #{block_forward_pallas.2} parent=5 // pred_check
      _
    $region10: #{block_forward_pallas.2} parent=5 // pred_check_branch
      %167 = sbr.rel (%p164) target = $region12
    $region11: #{block_forward_pallas.2} parent=5 // pred_region
      %s168 = ssub.s32 %s10, 1
      // Predicated region
      $region13: #{block_forward_pallas.2} parent=11 // pred_check
        %p169 = pneg %p74
      $region14: #{block_forward_pallas.2} parent=11 // pred_check_branch
        %171 = sbr.rel (%p169) target = $region16
      $region15: #{block_forward_pallas.2} parent=11 // pred_region
        %p172 = scmp.lt.s32.totalorder %s20, 0
        %s173 = scalar_select %p172, %s20, 0
        %s174 = smul.addr %s173, 4
        %s175 = scalar_lea.vmem %s1, %s174
      $region16: #{block_forward_pallas.2} parent=11 // pred_fallthru
        _
      // Predicated region
      $region17: #{block_forward_pallas.2} parent=11 // pred_check
        %p176 = pneg %p100
      $region18: #{block_forward_pallas.2} parent=11 // pred_check_branch
        %178 = sbr.rel (%p176) target = $region20
      $region19: #{block_forward_pallas.2} parent=11 // pred_region
        %p179 = scmp.lt.s32.totalorder %s20, 0
        %s180 = scalar_select %p179, %s20, 0
        %s181 = scalar_lea.vmem %s2, %s180
      $region20: #{block_forward_pallas.2} parent=11 // pred_fallthru
        _
      // Predicated region
      $region21: #{block_forward_pallas.2} parent=11 // pred_check
        %p182 = pneg %p126
      $region22: #{block_forward_pallas.2} parent=11 // pred_check_branch
        %184 = sbr.rel (%p182) target = $region24
      $region23: #{block_forward_pallas.2} parent=11 // pred_region
        %p185 = scmp.lt.s32.totalorder %s20, 0
        %s186 = scalar_select %p185, %s20, 0
        %s187 = scalar_lea.vmem %s3, %s186
      $region24: #{block_forward_pallas.2} parent=11 // pred_fallthru
        _
    $region12: #{block_forward_pallas.2} parent=5 // pred_fallthru
      _
    %p188 = scmp.lt.s32.totalorder %s10, 2
    // Predicated region
    $region25: #{block_forward_pallas.2} parent=5 // pred_check
      %p189 = pneg %p188
    $region26: #{block_forward_pallas.2} parent=5 // pred_check_branch
      %191 = sbr.rel (%p189) target = $region28
    $region27: #{block_forward_pallas.2} parent=5 // pred_region
      // Predicated region
      $region29: #{block_forward_pallas.2} parent=27 // pred_check
        %p192 = pneg %p42
      $region30: #{block_forward_pallas.2} parent=27 // pred_check_branch
        %194 = sbr.rel (%p192) target = $region32
      $region31: #{block_forward_pallas.2} parent=27 // pred_region
        %s195 = smul.u32 32, %s17
        %p196 = scmp.lt.s32.totalorder %s195, 63
        %s197 = scalar_select %p196, %s195, 63
        %s198 = smul.addr %s197, 4
        %s199 = scalar_lea.vmem %s0, %s198
        %s200 = smul.u32 32, %s17
      $region32: #{block_forward_pallas.2} parent=27 // pred_fallthru
        _
    $region28: #{block_forward_pallas.2} parent=5 // pred_fallthru
      _
    %p201 = scmp.le.s32.totalorder 1, %s10
    %p202 = scmp.lt.s32.totalorder %s10, 3
    %p203 = pnand %p201, %p202
    %p204 = pneg %p203
    // Predicated region
    $region33: #{block_forward_pallas.2} parent=5 // pred_check
      _
    $region34: #{block_forward_pallas.2} parent=5 // pred_check_branch
      %206 = sbr.rel (%p203) target = $region36
    $region35: #{block_forward_pallas.2} parent=5 // pred_region
      %s207 = ssub.s32 %s10, 1
      %s208 = smul.u32 32, %s19
      %p209 = scmp.lt.s32.totalorder %s208, 63
      %s210 = scalar_select %p209, %s208, 63
      %s211 = smul.addr %s210, 4
      %s212 = scalar_lea.vmem %s0, %s211
      %p213 = pneg %p48
      %p214 = pneg %p45
      %p215 = scmp.lt.s32.totalorder %s20, 0
      %s216 = scalar_select %p215, %s20, 0
      %s217 = smul.addr %s216, 4
      %s218 = scalar_lea.vmem %s1, %s217
      %p219 = pneg %p74
      %p220 = pneg %p71
      %p221 = scmp.lt.s32.totalorder %s20, 0
      %s222 = scalar_select %p221, %s20, 0
      %s223 = scalar_lea.vmem %s2, %s222
      %p224 = pneg %p100
      %p225 = pneg %p97
      %p226 = scmp.lt.s32.totalorder %s20, 0
      %s227 = scalar_select %p226, %s20, 0
      %s228 = scalar_lea.vmem %s3, %s227
      %p229 = pneg %p126
      %p230 = pneg %p123
      %p231 = pneg %p154
      %p232 = pneg %p151
      %s233 = smul.u32 32, %s19
      %p234 = scmp.lt.s32.totalorder %s233, 63
      %s235 = scalar_select %p234, %s233, 63
      %p236 = scmp.lt.s32.totalorder %s20, 0
      %s237 = scalar_select %p236, %s20, 0
      %s238 = sadd.s32 %s237, %s235
      %s239 = smul.addr %s238, 4
      %s240 = scalar_lea.vmem %s4, %s239
      %s241 = smul.u32 32, %s19
      %p242 = scmp.lt.s32.totalorder %s241, 63
      %s243 = scalar_select %p242, %s241, 63
      %s244 = smul.addr %s243, 4
      %s245 = scalar_lea.vmem %s0, %s244
      %s246 = smul.u32 32, %s19
      %p247 = scmp.lt.s32.totalorder %s20, 0
      %s248 = scalar_select %p247, %s20, 0
      %s249 = smul.addr %s248, 4
      %s250 = scalar_lea.vmem %s1, %s249
      %p251 = scmp.lt.s32.totalorder %s20, 0
      %s252 = scalar_select %p251, %s20, 0
      %s253 = scalar_lea.vmem %s2, %s252
      %p254 = scmp.lt.s32.totalorder %s20, 0
      %s255 = scalar_select %p254, %s20, 0
      %s256 = scalar_lea.vmem %s3, %s255
      %s257 = smul.u32 32, %s19
      %p258 = scmp.lt.s32.totalorder %s257, 63
      %s259 = scalar_select %p258, %s257, 63
      %p260 = scmp.lt.s32.totalorder %s20, 0
      %s261 = scalar_select %p260, %s20, 0
      %s262 = sadd.s32 %s261, %s259
      %s263 = smul.addr %s262, 4
      %s264 = scalar_lea.vmem %s4, %s263
      %s265 = smul.u32 32, %s19
      %v267 = vld [vmem:[%s245] sm:$0xf]
      %v268 = vld [vmem:[%s245 + $0x4] sm:$0xf]
      %v269 = vld [vmem:[%s245 + $0x8] sm:$0xf]
      %v270 = vld [vmem:[%s245 + $0xc] sm:$0xf]
      %v271 = vld [vmem:[%s245 + $0x10] sm:$0xf]
      %v272 = vld [vmem:[%s245 + $0x14] sm:$0xf]
      %v273 = vld [vmem:[%s245 + $0x18] sm:$0xf]
      %v274 = vld [vmem:[%s245 + $0x1c] sm:$0xf]
      %v275 = vld [vmem:[%s245 + $0x20] sm:$0xf]
      %v276 = vld [vmem:[%s245 + $0x24] sm:$0xf]
      %v277 = vld [vmem:[%s245 + $0x28] sm:$0xf]
      %v278 = vld [vmem:[%s245 + $0x2c] sm:$0xf]
      %v279 = vld [vmem:[%s245 + $0x30] sm:$0xf]
      %v280 = vld [vmem:[%s245 + $0x34] sm:$0xf]
      %v281 = vld [vmem:[%s245 + $0x38] sm:$0xf]
      %v282 = vld [vmem:[%s245 + $0x3c] sm:$0xf]
      %v283 = vld [vmem:[%s245 + $0x40] sm:$0xf]
      %v284 = vld [vmem:[%s245 + $0x44] sm:$0xf]
      %v285 = vld [vmem:[%s245 + $0x48] sm:$0xf]
      %v286 = vld [vmem:[%s245 + $0x4c] sm:$0xf]
      %v287 = vld [vmem:[%s245 + $0x50] sm:$0xf]
      %v288 = vld [vmem:[%s245 + $0x54] sm:$0xf]
      %v289 = vld [vmem:[%s245 + $0x58] sm:$0xf]
      %v290 = vld [vmem:[%s245 + $0x5c] sm:$0xf]
      %v291 = vld [vmem:[%s245 + $0x60] sm:$0xf]
      %v292 = vld [vmem:[%s245 + $0x64] sm:$0xf]
      %v293 = vld [vmem:[%s245 + $0x68] sm:$0xf]
      %v294 = vld [vmem:[%s245 + $0x6c] sm:$0xf]
      %v295 = vld [vmem:[%s245 + $0x70] sm:$0xf]
      %v296 = vld [vmem:[%s245 + $0x74] sm:$0xf]
      %v297 = vld [vmem:[%s245 + $0x78] sm:$0xf]
      %v298 = vld [vmem:[%s245 + $0x7c] sm:$0xf]
      %v299 = vld [vmem:[%s250] sm:$0xf]
      %v300 = vld [vmem:[%s250 + $0x4] sm:$0xf]
      %v301 = vld [vmem:[%s250 + $0x8] sm:$0xf]
      %v302 = vld [vmem:[%s250 + $0xc] sm:$0xf]
      %v303 = vld [vmem:[%s250 + $0x10] sm:$0xf]
      %v304 = vld [vmem:[%s250 + $0x14] sm:$0xf]
      %v305 = vld [vmem:[%s250 + $0x18] sm:$0xf]
      %v306 = vld [vmem:[%s250 + $0x1c] sm:$0xf]
      %v307 = vld [vmem:[%s250 + $0x20] sm:$0xf]
      %v308 = vld [vmem:[%s250 + $0x24] sm:$0xf]
      %v309 = vld [vmem:[%s250 + $0x28] sm:$0xf]
      %v310 = vld [vmem:[%s250 + $0x2c] sm:$0xf]
      %v311 = vld [vmem:[%s250 + $0x30] sm:$0xf]
      %v312 = vld [vmem:[%s250 + $0x34] sm:$0xf]
      %v313 = vld [vmem:[%s250 + $0x38] sm:$0xf]
      %v314 = vld [vmem:[%s250 + $0x3c] sm:$0xf]
      %v347 = vunpack.c.l.b16 %v267
      %v348 = vunpack.c.l.b16 %v268
      %v349 = vunpack.c.l.b16 %v269
      %v350 = vunpack.c.l.b16 %v270
      %v351 = vunpack.c.l.b16 %v271
      %v352 = vunpack.c.l.b16 %v272
      %v353 = vunpack.c.l.b16 %v273
      %v354 = vunpack.c.l.b16 %v274
      %v355 = vunpack.c.l.b16 %v275
      %v356 = vunpack.c.l.b16 %v276
      %v357 = vunpack.c.l.b16 %v277
      %v358 = vunpack.c.l.b16 %v278
      %v359 = vunpack.c.l.b16 %v279
      %v360 = vunpack.c.l.b16 %v280
      %v361 = vunpack.c.l.b16 %v281
      %v362 = vunpack.c.l.b16 %v282
      %v363 = vunpack.c.l.b16 %v283
      %v364 = vunpack.c.l.b16 %v284
      %v365 = vunpack.c.l.b16 %v285
      %v366 = vunpack.c.l.b16 %v286
      %v367 = vunpack.c.l.b16 %v287
      %v368 = vunpack.c.l.b16 %v288
      %v369 = vunpack.c.l.b16 %v289
      %v370 = vunpack.c.l.b16 %v290
      %v371 = vunpack.c.l.b16 %v291
      %v372 = vunpack.c.l.b16 %v292
      %v373 = vunpack.c.l.b16 %v293
      %v374 = vunpack.c.l.b16 %v294
      %v375 = vunpack.c.l.b16 %v295
      %v376 = vunpack.c.l.b16 %v296
      %v377 = vunpack.c.l.b16 %v297
      %v378 = vunpack.c.l.b16 %v298
      %v379 = vpack.c.b16 %v348, %v347
      %v380 = vpack.c.b16 %v350, %v349
      %v381 = vpack.c.b16 %v352, %v351
      %v382 = vpack.c.b16 %v354, %v353
      %v383 = vpack.c.b16 %v356, %v355
      %v384 = vpack.c.b16 %v358, %v357
      %v385 = vpack.c.b16 %v360, %v359
      %v386 = vpack.c.b16 %v362, %v361
      %v387 = vpack.c.b16 %v364, %v363
      %v388 = vpack.c.b16 %v366, %v365
      %v389 = vpack.c.b16 %v368, %v367
      %v390 = vpack.c.b16 %v370, %v369
      %v391 = vpack.c.b16 %v372, %v371
      %v392 = vpack.c.b16 %v374, %v373
      %v393 = vpack.c.b16 %v376, %v375
      %v394 = vpack.c.b16 %v378, %v377
      %v427 = vunpack.c.l.b16 %v299
      %v428 = vunpack.c.l.b16 %v300
      %v429 = vunpack.c.l.b16 %v301
      %v430 = vunpack.c.l.b16 %v302
      %v431 = vunpack.c.l.b16 %v303
      %v432 = vunpack.c.l.b16 %v304
      %v433 = vunpack.c.l.b16 %v305
      %v434 = vunpack.c.l.b16 %v306
      %v435 = vunpack.c.l.b16 %v307
      %v436 = vunpack.c.l.b16 %v308
      %v437 = vunpack.c.l.b16 %v309
      %v438 = vunpack.c.l.b16 %v310
      %v439 = vunpack.c.l.b16 %v311
      %v440 = vunpack.c.l.b16 %v312
      %v441 = vunpack.c.l.b16 %v313
      %v442 = vunpack.c.l.b16 %v314
      %v443 = vpack.c.b16 %v428, %v427
      %v444 = vpack.c.b16 %v430, %v429
      %v445 = vpack.c.b16 %v432, %v431
      %v446 = vpack.c.b16 %v434, %v433
      %v447 = vpack.c.b16 %v436, %v435
      %v448 = vpack.c.b16 %v438, %v437
      %v449 = vpack.c.b16 %v440, %v439
      %v450 = vpack.c.b16 %v442, %v441
      %459 = vmatprep.subr.bf16.mxu0 0
      %460 = vmatpush1.bf16.msra.mxu0 %v450
      %461 = vmatprep.subr.bf16.mxu0 0
      %462 = vmatpush1.bf16.msra.mxu0 %v449
      %463 = vmatprep.subr.bf16.mxu0 0
      %464 = vmatpush1.bf16.msra.mxu0 %v448
      %465 = vmatprep.subr.bf16.mxu0 0
      %466 = vmatpush1.bf16.msra.mxu0 %v447
      %467 = vmatprep.subr.bf16.mxu0 0
      %468 = vmatpush1.bf16.msra.mxu0 %v446
      %469 = vmatprep.subr.bf16.mxu0 0
      %470 = vmatpush1.bf16.msra.mxu0 %v445
      %471 = vmatprep.subr.bf16.mxu0 0
      %472 = vmatpush1.bf16.msra.mxu0 %v444
      %473 = vmatprep.subr.bf16.mxu0 0
      %474 = vmatpush1.bf16.msra.mxu0 %v443
      %475 = vmatprep.subr.bf16.mxu0 0
      %476 = vmatpush2.bf16.msra.mxu0 0
      %477 = vmatprep.subr.bf16.mxu0 0
      %478 = vmatpush2.bf16.msra.mxu0 0
      %479 = vmatprep.subr.bf16.mxu0 0
      %480 = vmatpush2.bf16.msra.mxu0 0
      %481 = vmatprep.subr.bf16.mxu0 0
      %482 = vmatpush2.bf16.msra.mxu0 0
      %483 = vmatprep.subr.bf16.mxu0 0
      %484 = vmatpush2.bf16.msra.mxu0 0
      %485 = vmatprep.subr.bf16.mxu0 0
      %486 = vmatpush2.bf16.msra.mxu0 0
      %487 = vmatprep.subr.bf16.mxu0 0
      %488 = vmatpush2.bf16.msra.mxu0 0
      %489 = vmatprep.subr.bf16.mxu0 0
      %490 = vmatpush2.bf16.msra.mxu0 0
      %491 = vmatprep.mubr.bf16.mxu0 0
      %492 = vmatmul.mubr.bf16.gmra.mxu0 %v379
      %v493 = vpop.f32.mrf.mxu0
      %v494 = vadd.f32 0.0, %v493
      %v495 = vpop.f32.mrf.mxu0
      %v496 = vpop.f32.mrf.mxu0
      %v497 = vadd.f32 0.0, %v496
      %v498 = vpop.f32.mrf.mxu0
      %499 = vmatprep.mubr.bf16.mxu0 0
      %500 = vmatmul.mubr.bf16.gmra.mxu0 %v380
      %v501 = vpop.f32.mrf.mxu0
      %v502 = vadd.f32 0.0, %v501
      %v503 = vpop.f32.mrf.mxu0
      %v504 = vpop.f32.mrf.mxu0
      %v505 = vadd.f32 0.0, %v504
      %v506 = vpop.f32.mrf.mxu0
      %507 = vmatprep.mubr.bf16.mxu0 0
      %508 = vmatmul.mubr.bf16.gmra.mxu0 %v381
      %v509 = vpop.f32.mrf.mxu0
      %v510 = vadd.f32 0.0, %v509
      %v511 = vpop.f32.mrf.mxu0
      %v512 = vpop.f32.mrf.mxu0
      %v513 = vadd.f32 0.0, %v512
      %v514 = vpop.f32.mrf.mxu0
      %515 = vmatprep.mubr.bf16.mxu0 0
      %516 = vmatmul.mubr.bf16.gmra.mxu0 %v382
      %v517 = vpop.f32.mrf.mxu0
      %v518 = vadd.f32 0.0, %v517
      %v519 = vpop.f32.mrf.mxu0
      %v520 = vpop.f32.mrf.mxu0
      %v521 = vadd.f32 0.0, %v520
      %v522 = vpop.f32.mrf.mxu0
      %523 = vmatprep.mubr.bf16.mxu0 0
      %524 = vmatmul.mubr.bf16.gmra.mxu0 %v383
      %v525 = vpop.f32.mrf.mxu0
      %v526 = vadd.f32 0.0, %v525
      %v527 = vpop.f32.mrf.mxu0
      %v528 = vpop.f32.mrf.mxu0
      %v529 = vadd.f32 0.0, %v528
      %v530 = vpop.f32.mrf.mxu0
      %531 = vmatprep.mubr.bf16.mxu0 0
      %532 = vmatmul.mubr.bf16.gmra.mxu0 %v384
      %v533 = vpop.f32.mrf.mxu0
      %v534 = vadd.f32 0.0, %v533
      %v535 = vpop.f32.mrf.mxu0
      %v536 = vpop.f32.mrf.mxu0
      %v537 = vadd.f32 0.0, %v536
      %v538 = vpop.f32.mrf.mxu0
      %539 = vmatprep.mubr.bf16.mxu0 0
      %540 = vmatmul.mubr.bf16.gmra.mxu0 %v385
      %v541 = vpop.f32.mrf.mxu0
      %v542 = vadd.f32 0.0, %v541
      %v543 = vpop.f32.mrf.mxu0
      %v544 = vpop.f32.mrf.mxu0
      %v545 = vadd.f32 0.0, %v544
      %v546 = vpop.f32.mrf.mxu0
      %547 = vmatprep.mubr.bf16.mxu0 0
      %548 = vmatmul.mubr.bf16.gmra.mxu0 %v386
      %v549 = vpop.f32.mrf.mxu0
      %v550 = vadd.f32 0.0, %v549
      %v551 = vpop.f32.mrf.mxu0
      %v552 = vpop.f32.mrf.mxu0
      %v553 = vadd.f32 0.0, %v552
      %v554 = vpop.f32.mrf.mxu0
      %555 = vmatprep.mubr.bf16.mxu0 0
      %556 = vmatmul.mubr.bf16.gmra.mxu0 %v387
      %v557 = vpop.f32.mrf.mxu0
      %v558 = vadd.f32 0.0, %v557
      %v559 = vpop.f32.mrf.mxu0
      %v560 = vpop.f32.mrf.mxu0
      %v561 = vadd.f32 0.0, %v560
      %v562 = vpop.f32.mrf.mxu0
      %563 = vmatprep.mubr.bf16.mxu0 0
      %564 = vmatmul.mubr.bf16.gmra.mxu0 %v388
      %v565 = vpop.f32.mrf.mxu0
      %v566 = vadd.f32 0.0, %v565
      %v567 = vpop.f32.mrf.mxu0
      %v568 = vpop.f32.mrf.mxu0
      %v569 = vadd.f32 0.0, %v568
      %v570 = vpop.f32.mrf.mxu0
      %571 = vmatprep.mubr.bf16.mxu0 0
      %572 = vmatmul.mubr.bf16.gmra.mxu0 %v389
      %v573 = vpop.f32.mrf.mxu0
      %v574 = vadd.f32 0.0, %v573
      %v575 = vpop.f32.mrf.mxu0
      %v576 = vpop.f32.mrf.mxu0
      %v577 = vadd.f32 0.0, %v576
      %v578 = vpop.f32.mrf.mxu0
      %579 = vmatprep.mubr.bf16.mxu0 0
      %580 = vmatmul.mubr.bf16.gmra.mxu0 %v390
      %v581 = vpop.f32.mrf.mxu0
      %v582 = vadd.f32 0.0, %v581
      %v583 = vpop.f32.mrf.mxu0
      %v584 = vpop.f32.mrf.mxu0
      %v585 = vadd.f32 0.0, %v584
      %v586 = vpop.f32.mrf.mxu0
      %587 = vmatprep.mubr.bf16.mxu0 0
      %588 = vmatmul.mubr.bf16.gmra.mxu0 %v391
      %v589 = vpop.f32.mrf.mxu0
      %v590 = vadd.f32 0.0, %v589
      %v591 = vpop.f32.mrf.mxu0
      %v592 = vpop.f32.mrf.mxu0
      %v593 = vadd.f32 0.0, %v592
      %v594 = vpop.f32.mrf.mxu0
      %595 = vmatprep.mubr.bf16.mxu0 0
      %596 = vmatmul.mubr.bf16.gmra.mxu0 %v392
      %v597 = vpop.f32.mrf.mxu0
      %v598 = vadd.f32 0.0, %v597
      %v599 = vpop.f32.mrf.mxu0
      %v600 = vpop.f32.mrf.mxu0
      %v601 = vadd.f32 0.0, %v600
      %v602 = vpop.f32.mrf.mxu0
      %603 = vmatprep.mubr.bf16.mxu0 0
      %604 = vmatmul.mubr.bf16.gmra.mxu0 %v393
      %v605 = vpop.f32.mrf.mxu0
      %v606 = vadd.f32 0.0, %v605
      %v607 = vpop.f32.mrf.mxu0
      %v608 = vpop.f32.mrf.mxu0
      %v609 = vadd.f32 0.0, %v608
      %v610 = vpop.f32.mrf.mxu0
      %611 = vmatprep.mubr.bf16.mxu0 0
      %612 = vmatmul.mubr.bf16.gmra.mxu0 %v394
      %v613 = vpop.f32.mrf.mxu0
      %v614 = vadd.f32 0.0, %v613
      %v615 = vpop.f32.mrf.mxu0
      %v616 = vpop.f32.mrf.mxu0
      %v617 = vadd.f32 0.0, %v616
      %v618 = vpop.f32.mrf.mxu0
      %619 = vdwg.mxu0
      %v620 = vld [vmem:[%s253] sm:$0x1]
      %v622 = vlaneseq
      %v623 = vshrl.u32 %v622, 7
      %v624 = vsub.s32 0, %v623
      %v625 = vrot.slane %v620, %v624
      %v627 = vmul.f32 %v494, %v625
      %v628 = vmul.f32 %v497, %v625
      %v629 = vmul.f32 %v502, %v625
      %v630 = vmul.f32 %v505, %v625
      %v631 = vmul.f32 %v510, %v625
      %v632 = vmul.f32 %v513, %v625
      %v633 = vmul.f32 %v518, %v625
      %v634 = vmul.f32 %v521, %v625
      %v635 = vmul.f32 %v526, %v625
      %v636 = vmul.f32 %v529, %v625
      %v637 = vmul.f32 %v534, %v625
      %v638 = vmul.f32 %v537, %v625
      %v639 = vmul.f32 %v542, %v625
      %v640 = vmul.f32 %v545, %v625
      %v641 = vmul.f32 %v550, %v625
      %v642 = vmul.f32 %v553, %v625
      %v643 = vmul.f32 %v558, %v625
      %v644 = vmul.f32 %v561, %v625
      %v645 = vmul.f32 %v566, %v625
      %v646 = vmul.f32 %v569, %v625
      %v647 = vmul.f32 %v574, %v625
      %v648 = vmul.f32 %v577, %v625
      %v649 = vmul.f32 %v582, %v625
      %v650 = vmul.f32 %v585, %v625
      %v651 = vmul.f32 %v590, %v625
      %v652 = vmul.f32 %v593, %v625
      %v653 = vmul.f32 %v598, %v625
      %v654 = vmul.f32 %v601, %v625
      %v655 = vmul.f32 %v606, %v625
      %v656 = vmul.f32 %v609, %v625
      %v657 = vmul.f32 %v614, %v625
      %v658 = vmul.f32 %v617, %v625
      %v659 = vld [vmem:[%s256] sm:$0x1]
      %v661 = vlaneseq
      %v662 = vshrl.u32 %v661, 7
      %v663 = vsub.s32 0, %v662
      %v664 = vrot.slane %v659, %v663
      %v666 = vadd.f32 %v627, %v664
      %v667 = vadd.f32 %v628, %v664
      %v668 = vadd.f32 %v629, %v664
      %v669 = vadd.f32 %v630, %v664
      %v670 = vadd.f32 %v631, %v664
      %v671 = vadd.f32 %v632, %v664
      %v672 = vadd.f32 %v633, %v664
      %v673 = vadd.f32 %v634, %v664
      %v674 = vadd.f32 %v635, %v664
      %v675 = vadd.f32 %v636, %v664
      %v676 = vadd.f32 %v637, %v664
      %v677 = vadd.f32 %v638, %v664
      %v678 = vadd.f32 %v639, %v664
      %v679 = vadd.f32 %v640, %v664
      %v680 = vadd.f32 %v641, %v664
      %v681 = vadd.f32 %v642, %v664
      %v682 = vadd.f32 %v643, %v664
      %v683 = vadd.f32 %v644, %v664
      %v684 = vadd.f32 %v645, %v664
      %v685 = vadd.f32 %v646, %v664
      %v686 = vadd.f32 %v647, %v664
      %v687 = vadd.f32 %v648, %v664
      %v688 = vadd.f32 %v649, %v664
      %v689 = vadd.f32 %v650, %v664
      %v690 = vadd.f32 %v651, %v664
      %v691 = vadd.f32 %v652, %v664
      %v692 = vadd.f32 %v653, %v664
      %v693 = vadd.f32 %v654, %v664
      %v694 = vadd.f32 %v655, %v664
      %v695 = vadd.f32 %v656, %v664
      %v696 = vadd.f32 %v657, %v664
      %v697 = vadd.f32 %v658, %v664
      %v698 = vmax.f32 %v666, 0.0
      %v699 = vmax.f32 %v667, 0.0
      %v700 = vmax.f32 %v668, 0.0
      %v701 = vmax.f32 %v669, 0.0
      %v702 = vmax.f32 %v670, 0.0
      %v703 = vmax.f32 %v671, 0.0
      %v704 = vmax.f32 %v672, 0.0
      %v705 = vmax.f32 %v673, 0.0
      %v706 = vmax.f32 %v674, 0.0
      %v707 = vmax.f32 %v675, 0.0
      %v708 = vmax.f32 %v676, 0.0
      %v709 = vmax.f32 %v677, 0.0
      %v710 = vmax.f32 %v678, 0.0
      %v711 = vmax.f32 %v679, 0.0
      %v712 = vmax.f32 %v680, 0.0
      %v713 = vmax.f32 %v681, 0.0
      %v714 = vmax.f32 %v682, 0.0
      %v715 = vmax.f32 %v683, 0.0
      %v716 = vmax.f32 %v684, 0.0
      %v717 = vmax.f32 %v685, 0.0
      %v718 = vmax.f32 %v686, 0.0
      %v719 = vmax.f32 %v687, 0.0
      %v720 = vmax.f32 %v688, 0.0
      %v721 = vmax.f32 %v689, 0.0
      %v722 = vmax.f32 %v690, 0.0
      %v723 = vmax.f32 %v691, 0.0
      %v724 = vmax.f32 %v692, 0.0
      %v725 = vmax.f32 %v693, 0.0
      %v726 = vmax.f32 %v694, 0.0
      %v727 = vmax.f32 %v695, 0.0
      %v728 = vmax.f32 %v696, 0.0
      %v729 = vmax.f32 %v697, 0.0
      %v730 = vpack.c.bf16 %v699, %v698
      %v731 = vpack.c.bf16 %v701, %v700
      %v732 = vpack.c.bf16 %v703, %v702
      %v733 = vpack.c.bf16 %v705, %v704
      %v734 = vpack.c.bf16 %v707, %v706
      %v735 = vpack.c.bf16 %v709, %v708
      %v736 = vpack.c.bf16 %v711, %v710
      %v737 = vpack.c.bf16 %v713, %v712
      %v738 = vpack.c.bf16 %v715, %v714
      %v739 = vpack.c.bf16 %v717, %v716
      %v740 = vpack.c.bf16 %v719, %v718
      %v741 = vpack.c.bf16 %v721, %v720
      %v742 = vpack.c.bf16 %v723, %v722
      %v743 = vpack.c.bf16 %v725, %v724
      %v744 = vpack.c.bf16 %v727, %v726
      %v745 = vpack.c.bf16 %v729, %v728
      %v762 = vunpack.c.l.b16 %v730
      %v763 = vunpack.c.h.b16 %v730
      %v764 = vunpack.c.l.b16 %v731
      %v765 = vunpack.c.h.b16 %v731
      %v766 = vunpack.c.l.b16 %v732
      %v767 = vunpack.c.h.b16 %v732
      %v768 = vunpack.c.l.b16 %v733
      %v769 = vunpack.c.h.b16 %v733
      %v770 = vunpack.c.l.b16 %v734
      %v771 = vunpack.c.h.b16 %v734
      %v772 = vunpack.c.l.b16 %v735
      %v773 = vunpack.c.h.b16 %v735
      %v774 = vunpack.c.l.b16 %v736
      %v775 = vunpack.c.h.b16 %v736
      %v776 = vunpack.c.l.b16 %v737
      %v777 = vunpack.c.h.b16 %v737
      %v778 = vunpack.c.l.b16 %v738
      %v779 = vunpack.c.h.b16 %v738
      %v780 = vunpack.c.l.b16 %v739
      %v781 = vunpack.c.h.b16 %v739
      %v782 = vunpack.c.l.b16 %v740
      %v783 = vunpack.c.h.b16 %v740
      %v784 = vunpack.c.l.b16 %v741
      %v785 = vunpack.c.h.b16 %v741
      %v786 = vunpack.c.l.b16 %v742
      %v787 = vunpack.c.h.b16 %v742
      %v788 = vunpack.c.l.b16 %v743
      %v789 = vunpack.c.h.b16 %v743
      %v790 = vunpack.c.l.b16 %v744
      %v791 = vunpack.c.h.b16 %v744
      %v792 = vunpack.c.l.b16 %v745
      %v793 = vunpack.c.h.b16 %v745
      %v794 = vpack.c.b16 %v762, %v762
      %v795 = vpack.c.b16 %v763, %v763
      %v796 = vpack.c.b16 %v764, %v764
      %v797 = vpack.c.b16 %v765, %v765
      %v798 = vpack.c.b16 %v766, %v766
      %v799 = vpack.c.b16 %v767, %v767
      %v800 = vpack.c.b16 %v768, %v768
      %v801 = vpack.c.b16 %v769, %v769
      %v802 = vpack.c.b16 %v770, %v770
      %v803 = vpack.c.b16 %v771, %v771
      %v804 = vpack.c.b16 %v772, %v772
      %v805 = vpack.c.b16 %v773, %v773
      %v806 = vpack.c.b16 %v774, %v774
      %v807 = vpack.c.b16 %v775, %v775
      %v808 = vpack.c.b16 %v776, %v776
      %v809 = vpack.c.b16 %v777, %v777
      %v810 = vpack.c.b16 %v778, %v778
      %v811 = vpack.c.b16 %v779, %v779
      %v812 = vpack.c.b16 %v780, %v780
      %v813 = vpack.c.b16 %v781, %v781
      %v814 = vpack.c.b16 %v782, %v782
      %v815 = vpack.c.b16 %v783, %v783
      %v816 = vpack.c.b16 %v784, %v784
      %v817 = vpack.c.b16 %v785, %v785
      %v818 = vpack.c.b16 %v786, %v786
      %v819 = vpack.c.b16 %v787, %v787
      %v820 = vpack.c.b16 %v788, %v788
      %v821 = vpack.c.b16 %v789, %v789
      %v822 = vpack.c.b16 %v790, %v790
      %v823 = vpack.c.b16 %v791, %v791
      %v824 = vpack.c.b16 %v792, %v792
      %v825 = vpack.c.b16 %v793, %v793
      %858 = vst [vmem:[%s264] sm:$0xf] %v794
      %859 = vst [vmem:[%s264 + $0x4] sm:$0xf] %v795
      %860 = vst [vmem:[%s264 + $0x8] sm:$0xf] %v796
      %861 = vst [vmem:[%s264 + $0xc] sm:$0xf] %v797
      %862 = vst [vmem:[%s264 + $0x10] sm:$0xf] %v798
      %863 = vst [vmem:[%s264 + $0x14] sm:$0xf] %v799
      %864 = vst [vmem:[%s264 + $0x18] sm:$0xf] %v800
      %865 = vst [vmem:[%s264 + $0x1c] sm:$0xf] %v801
      %866 = vst [vmem:[%s264 + $0x20] sm:$0xf] %v802
      %867 = vst [vmem:[%s264 + $0x24] sm:$0xf] %v803
      %868 = vst [vmem:[%s264 + $0x28] sm:$0xf] %v804
      %869 = vst [vmem:[%s264 + $0x2c] sm:$0xf] %v805
      %870 = vst [vmem:[%s264 + $0x30] sm:$0xf] %v806
      %871 = vst [vmem:[%s264 + $0x34] sm:$0xf] %v807
      %872 = vst [vmem:[%s264 + $0x38] sm:$0xf] %v808
      %873 = vst [vmem:[%s264 + $0x3c] sm:$0xf] %v809
      %874 = vst [vmem:[%s264 + $0x40] sm:$0xf] %v810
      %875 = vst [vmem:[%s264 + $0x44] sm:$0xf] %v811
      %876 = vst [vmem:[%s264 + $0x48] sm:$0xf] %v812
      %877 = vst [vmem:[%s264 + $0x4c] sm:$0xf] %v813
      %878 = vst [vmem:[%s264 + $0x50] sm:$0xf] %v814
      %879 = vst [vmem:[%s264 + $0x54] sm:$0xf] %v815
      %880 = vst [vmem:[%s264 + $0x58] sm:$0xf] %v816
      %881 = vst [vmem:[%s264 + $0x5c] sm:$0xf] %v817
      %882 = vst [vmem:[%s264 + $0x60] sm:$0xf] %v818
      %883 = vst [vmem:[%s264 + $0x64] sm:$0xf] %v819
      %884 = vst [vmem:[%s264 + $0x68] sm:$0xf] %v820
      %885 = vst [vmem:[%s264 + $0x6c] sm:$0xf] %v821
      %886 = vst [vmem:[%s264 + $0x70] sm:$0xf] %v822
      %887 = vst [vmem:[%s264 + $0x74] sm:$0xf] %v823
      %888 = vst [vmem:[%s264 + $0x78] sm:$0xf] %v824
      %889 = vst [vmem:[%s264 + $0x7c] sm:$0xf] %v825
      %s890 = smul.u32 32, %s19
      %p891 = scmp.lt.s32.totalorder %s890, 63
      %s892 = scalar_select %p891, %s890, 63
      %p893 = scmp.lt.s32.totalorder %s20, 0
      %s894 = scalar_select %p893, %s20, 0
      %s895 = sadd.s32 %s894, %s892
      %s896 = smul.addr %s895, 4
      %s897 = scalar_lea.vmem %s4, %s896
      // Predicated region
      $region37: #{block_forward_pallas.2} parent=35 // pred_check
        %p898 = pneg %p151
      $region38: #{block_forward_pallas.2} parent=35 // pred_check_branch
        %900 = sbr.rel (%p898) target = $region40
      $region39: #{block_forward_pallas.2} parent=35 // pred_region
        %s901 = smul.u32 32, %s19
      $region40: #{block_forward_pallas.2} parent=35 // pred_fallthru
        _
    $region36: #{block_forward_pallas.2} parent=5 // pred_fallthru
      _
    %p902 = scmp.le.s32.totalorder 2, %s10
    // Predicated region
    $region41: #{block_forward_pallas.2} parent=5 // pred_check
      %p903 = pneg %p902
    $region42: #{block_forward_pallas.2} parent=5 // pred_check_branch
      %905 = sbr.rel (%p903) target = $region44
    $region43: #{block_forward_pallas.2} parent=5 // pred_region
      %s906 = ssub.s32 %s10, 2
      // Predicated region
      $region45: #{block_forward_pallas.2} parent=43 // pred_check
        %p907 = pneg %p157
      $region46: #{block_forward_pallas.2} parent=43 // pred_check_branch
        %909 = sbr.rel (%p907) target = $region48
      $region47: #{block_forward_pallas.2} parent=43 // pred_region
        %s910 = smul.u32 32, %s21
        %p911 = scmp.lt.s32.totalorder %s910, 63
        %s912 = scalar_select %p911, %s910, 63
        %p913 = scmp.lt.s32.totalorder %s22, 0
        %s914 = scalar_select %p913, %s22, 0
        %s915 = sadd.s32 %s914, %s912
        %s916 = smul.addr %s915, 4
        %s917 = scalar_lea.vmem %s4, %s916
      $region48: #{block_forward_pallas.2} parent=43 // pred_fallthru
        _
    $region44: #{block_forward_pallas.2} parent=5 // pred_fallthru
      _
  $region6: #{block_forward_pallas.2} parent=0 // loop_footer
    %s14 = sadd.s32 1, %s10
  $region7: #{block_forward_pallas.2} parent=0 // loop_footer_branch
    %9 = sbr.rel target = $region3
  $region8: #{block_forward_pallas.2} parent=0 // loop_exit
    _

// kernel: block_forward_pallas.3
$region0: #{block_forward_pallas.3}
  #allocation0 [shape = 'u32[]', space=smem, size = 0x4, offset = 0x4, fixed_abs, tag = 'smem constant byte address 0x4 - core index']
  #allocation1 [shape = 'u32[144,128]{1,0:T(1,128)}', space=vmem, size = 0x12000, scoped, tag = 'internal scratch']
  %s0 = inlined_call_operand.vmem [shape: bf16[512,1152], index: 0, kind: input, shape index: {}]
  %s1 = inlined_call_operand.vmem [shape: bf16[1152,128], index: 1, kind: input, shape index: {}]
  %s2 = inlined_call_operand.vmem [shape: f32[1,128], index: 2, kind: input, shape index: {}]
  %s3 = inlined_call_operand.vmem [shape: f32[1,128], index: 3, kind: input, shape index: {}]
  %s4 = inlined_call_operand.vmem [shape: bf16[512,128], index: 4, kind: input, shape index: {}]
  %s5 = inlined_call_operand.vmem [shape: bf16[128,128], index: 5, kind: input, shape index: {}]
  %s6 = inlined_call_operand.vmem [shape: f32[1,128], index: 6, kind: input, shape index: {}]
  %s7 = inlined_call_operand.vmem [shape: f32[1,128], index: 7, kind: input, shape index: {}]
  %s8 = inlined_call_operand.vmem [shape: f32[512,128], index: 8, kind: output, shape index: {}]
  %s9 = sld [smem:[#allocation0]]
  $region65: #{block_forward_pallas.3} parent=0
    _
  %s11 = ssub.s32 1, %s9
  %s12 = scalar_select 0, %s11, %s9
  loop: start=0, step=1, limit=4
  $region2: #{block_forward_pallas.3} parent=0 // loop_pre_header
    _
  $region3: #{block_forward_pallas.3} parent=0 // loop_header
    %s14 = sphi 0, %s18
    %p15 = scmp.ge.s32.totalorder %s14, 4
    %s21 = sphi 0, %s33
    %s22 = sphi 0, %s29
    %s23 = sphi 0, %s21
    %s24 = sphi 0, %s22
    %s25 = sphi 0, %s23
    %s26 = sphi 0, %s24
    %s36 = sphi 0, %s38
    %s39 = sphi 0, %s36
    %s40 = sphi 0, %s39
    %s56 = sphi 0, %s40
    %s62 = sphi 0, %s64
    %s65 = sphi 0, %s62
    %s66 = sphi 0, %s65
    %s82 = sphi 0, %s66
    %s88 = sphi 0, %s90
    %s91 = sphi 0, %s88
    %s92 = sphi 0, %s91
    %s108 = sphi 0, %s92
    %s114 = sphi 0, %s116
    %s117 = sphi 0, %s114
    %s118 = sphi 0, %s117
    %s134 = sphi 0, %s118
    %s140 = sphi 0, %s142
    %s143 = sphi 0, %s140
    %s144 = sphi 0, %s143
    %s160 = sphi 0, %s144
    %s166 = sphi 0, %s168
    %s169 = sphi 0, %s166
    %s170 = sphi 0, %s169
    %s186 = sphi 0, %s170
    %s192 = sphi 0, %s194
    %s195 = sphi 0, %s192
    %s196 = sphi 0, %s195
    %s212 = sphi 0, %s196
    %s218 = sphi 0, %s220
    %s221 = sphi 0, %s218
    %s222 = sphi 0, %s221
    %s238 = sphi 0, %s222
    %s246 = sphi 0, %s248
    %s249 = sphi 0, %s246
    %s250 = sphi 0, %s249
    %s266 = sphi 0, %s250
  $region4: #{block_forward_pallas.3} parent=0 // loop_header_branch
    %17 = sbr.rel (%p15) target = $region8
  $region5: #{block_forward_pallas.3} parent=0 // loop_body
    %s19 = ssub.s32 %s14, 1
    %s20 = ssub.s32 %s14, 2
    %s27 = sadd.s32 1, %s22
    %p28 = scmp.ge.s32.totalorder %s27, 1
    %s29 = scalar_select %p28, 0, %s27
    %s30 = sadd.s32 1, %s21
    %s31 = scalar_select %p28, %s30, %s21
    %p32 = scmp.ge.s32.totalorder %s31, 2
    %s33 = scalar_select %p32, 0, %s31
    %s34 = ssub.s32 %s21, %s33
    %p35 = scmp.eq.s32.totalorder %s34, 0
    %s37 = sadd.s32 %s36, 1
    %s38 = scalar_select %p35, %s36, %s37
    %p41 = pneg %p35
    %p42 = scmp.eq.s32.totalorder %s14, 1
    %p43 = por %p41, %p42
    %p44 = scmp.ne.s32.totalorder %s36, %s39
    %p45 = scmp.eq.s32.totalorder %s14, 0
    %p46 = por %p44, %p45
    %p47 = scmp.ne.s32.totalorder %s36, %s39
    %p48 = scmp.eq.s32.totalorder %s19, 1
    %p49 = por %p47, %p48
    %p50 = scmp.ne.s32.totalorder %s39, %s40
    %p51 = scmp.eq.s32.totalorder %s19, 0
    %p52 = por %p50, %p51
    %p53 = scmp.ne.s32.totalorder %s39, %s40
    %p54 = scmp.eq.s32.totalorder %s20, 1
    %p55 = por %p53, %p54
    %p57 = scmp.ne.s32.totalorder %s40, %s56
    %p58 = scmp.eq.s32.totalorder %s20, 0
    %p59 = por %p57, %p58
    %s60 = ssub.s32 %s22, %s29
    %p61 = scmp.eq.s32.totalorder %s60, 0
    %s63 = sadd.s32 %s62, 1
    %s64 = scalar_select %p61, %s62, %s63
    %p67 = pneg %p61
    %p68 = scmp.eq.s32.totalorder %s14, 1
    %p69 = por %p67, %p68
    %p70 = scmp.ne.s32.totalorder %s62, %s65
    %p71 = scmp.eq.s32.totalorder %s14, 0
    %p72 = por %p70, %p71
    %p73 = scmp.ne.s32.totalorder %s62, %s65
    %p74 = scmp.eq.s32.totalorder %s19, 1
    %p75 = por %p73, %p74
    %p76 = scmp.ne.s32.totalorder %s65, %s66
    %p77 = scmp.eq.s32.totalorder %s19, 0
    %p78 = por %p76, %p77
    %p79 = scmp.ne.s32.totalorder %s65, %s66
    %p80 = scmp.eq.s32.totalorder %s20, 1
    %p81 = por %p79, %p80
    %p83 = scmp.ne.s32.totalorder %s66, %s82
    %p84 = scmp.eq.s32.totalorder %s20, 0
    %p85 = por %p83, %p84
    %s86 = ssub.s32 %s22, %s29
    %p87 = scmp.eq.s32.totalorder %s86, 0
    %s89 = sadd.s32 %s88, 1
    %s90 = scalar_select %p87, %s88, %s89
    %p93 = pneg %p87
    %p94 = scmp.eq.s32.totalorder %s14, 1
    %p95 = por %p93, %p94
    %p96 = scmp.ne.s32.totalorder %s88, %s91
    %p97 = scmp.eq.s32.totalorder %s14, 0
    %p98 = por %p96, %p97
    %p99 = scmp.ne.s32.totalorder %s88, %s91
    %p100 = scmp.eq.s32.totalorder %s19, 1
    %p101 = por %p99, %p100
    %p102 = scmp.ne.s32.totalorder %s91, %s92
    %p103 = scmp.eq.s32.totalorder %s19, 0
    %p104 = por %p102, %p103
    %p105 = scmp.ne.s32.totalorder %s91, %s92
    %p106 = scmp.eq.s32.totalorder %s20, 1
    %p107 = por %p105, %p106
    %p109 = scmp.ne.s32.totalorder %s92, %s108
    %p110 = scmp.eq.s32.totalorder %s20, 0
    %p111 = por %p109, %p110
    %s112 = ssub.s32 %s22, %s29
    %p113 = scmp.eq.s32.totalorder %s112, 0
    %s115 = sadd.s32 %s114, 1
    %s116 = scalar_select %p113, %s114, %s115
    %p119 = pneg %p113
    %p120 = scmp.eq.s32.totalorder %s14, 1
    %p121 = por %p119, %p120
    %p122 = scmp.ne.s32.totalorder %s114, %s117
    %p123 = scmp.eq.s32.totalorder %s14, 0
    %p124 = por %p122, %p123
    %p125 = scmp.ne.s32.totalorder %s114, %s117
    %p126 = scmp.eq.s32.totalorder %s19, 1
    %p127 = por %p125, %p126
    %p128 = scmp.ne.s32.totalorder %s117, %s118
    %p129 = scmp.eq.s32.totalorder %s19, 0
    %p130 = por %p128, %p129
    %p131 = scmp.ne.s32.totalorder %s117, %s118
    %p132 = scmp.eq.s32.totalorder %s20, 1
    %p133 = por %p131, %p132
    %p135 = scmp.ne.s32.totalorder %s118, %s134
    %p136 = scmp.eq.s32.totalorder %s20, 0
    %p137 = por %p135, %p136
    %s138 = ssub.s32 %s21, %s33
    %p139 = scmp.eq.s32.totalorder %s138, 0
    %s141 = sadd.s32 %s140, 1
    %s142 = scalar_select %p139, %s140, %s141
    %p145 = pneg %p139
    %p146 = scmp.eq.s32.totalorder %s14, 1
    %p147 = por %p145, %p146
    %p148 = scmp.ne.s32.totalorder %s140, %s143
    %p149 = scmp.eq.s32.totalorder %s14, 0
    %p150 = por %p148, %p149
    %p151 = scmp.ne.s32.totalorder %s140, %s143
    %p152 = scmp.eq.s32.totalorder %s19, 1
    %p153 = por %p151, %p152
    %p154 = scmp.ne.s32.totalorder %s143, %s144
    %p155 = scmp.eq.s32.totalorder %s19, 0
    %p156 = por %p154, %p155
    %p157 = scmp.ne.s32.totalorder %s143, %s144
    %p158 = scmp.eq.s32.totalorder %s20, 1
    %p159 = por %p157, %p158
    %p161 = scmp.ne.s32.totalorder %s144, %s160
    %p162 = scmp.eq.s32.totalorder %s20, 0
    %p163 = por %p161, %p162
    %s164 = ssub.s32 %s22, %s29
    %p165 = scmp.eq.s32.totalorder %s164, 0
    %s167 = sadd.s32 %s166, 1
    %s168 = scalar_select %p165, %s166, %s167
    %p171 = pneg %p165
    %p172 = scmp.eq.s32.totalorder %s14, 1
    %p173 = por %p171, %p172
    %p174 = scmp.ne.s32.totalorder %s166, %s169
    %p175 = scmp.eq.s32.totalorder %s14, 0
    %p176 = por %p174, %p175
    %p177 = scmp.ne.s32.totalorder %s166, %s169
    %p178 = scmp.eq.s32.totalorder %s19, 1
    %p179 = por %p177, %p178
    %p180 = scmp.ne.s32.totalorder %s169, %s170
    %p181 = scmp.eq.s32.totalorder %s19, 0
    %p182 = por %p180, %p181
    %p183 = scmp.ne.s32.totalorder %s169, %s170
    %p184 = scmp.eq.s32.totalorder %s20, 1
    %p185 = por %p183, %p184
    %p187 = scmp.ne.s32.totalorder %s170, %s186
    %p188 = scmp.eq.s32.totalorder %s20, 0
    %p189 = por %p187, %p188
    %s190 = ssub.s32 %s22, %s29
    %p191 = scmp.eq.s32.totalorder %s190, 0
    %s193 = sadd.s32 %s192, 1
    %s194 = scalar_select %p191, %s192, %s193
    %p197 = pneg %p191
    %p198 = scmp.eq.s32.totalorder %s14, 1
    %p199 = por %p197, %p198
    %p200 = scmp.ne.s32.totalorder %s192, %s195
    %p201 = scmp.eq.s32.totalorder %s14, 0
    %p202 = por %p200, %p201
    %p203 = scmp.ne.s32.totalorder %s192, %s195
    %p204 = scmp.eq.s32.totalorder %s19, 1
    %p205 = por %p203, %p204
    %p206 = scmp.ne.s32.totalorder %s195, %s196
    %p207 = scmp.eq.s32.totalorder %s19, 0
    %p208 = por %p206, %p207
    %p209 = scmp.ne.s32.totalorder %s195, %s196
    %p210 = scmp.eq.s32.totalorder %s20, 1
    %p211 = por %p209, %p210
    %p213 = scmp.ne.s32.totalorder %s196, %s212
    %p214 = scmp.eq.s32.totalorder %s20, 0
    %p215 = por %p213, %p214
    %s216 = ssub.s32 %s22, %s29
    %p217 = scmp.eq.s32.totalorder %s216, 0
    %s219 = sadd.s32 %s218, 1
    %s220 = scalar_select %p217, %s218, %s219
    %p223 = pneg %p217
    %p224 = scmp.eq.s32.totalorder %s14, 1
    %p225 = por %p223, %p224
    %p226 = scmp.ne.s32.totalorder %s218, %s221
    %p227 = scmp.eq.s32.totalorder %s14, 0
    %p228 = por %p226, %p227
    %p229 = scmp.ne.s32.totalorder %s218, %s221
    %p230 = scmp.eq.s32.totalorder %s19, 1
    %p231 = por %p229, %p230
    %p232 = scmp.ne.s32.totalorder %s221, %s222
    %p233 = scmp.eq.s32.totalorder %s19, 0
    %p234 = por %p232, %p233
    %p235 = scmp.ne.s32.totalorder %s221, %s222
    %p236 = scmp.eq.s32.totalorder %s20, 1
    %p237 = por %p235, %p236
    %p239 = scmp.ne.s32.totalorder %s222, %s238
    %p240 = scmp.eq.s32.totalorder %s20, 0
    %p241 = por %p239, %p240
    %s242 = ssub.s32 %s21, %s33
    %s243 = ssub.s32 %s22, %s29
    %s244 = sor.u32 %s242, %s243
    %p245 = scmp.eq.s32.totalorder %s244, 0
    %s247 = sadd.s32 %s246, 1
    %s248 = scalar_select %p245, %s246, %s247
    %p251 = pneg %p245
    %p252 = scmp.eq.s32.totalorder %s14, 1
    %p253 = por %p251, %p252
    %p254 = scmp.ne.s32.totalorder %s246, %s249
    %p255 = scmp.eq.s32.totalorder %s14, 0
    %p256 = por %p254, %p255
    %p257 = scmp.ne.s32.totalorder %s246, %s249
    %p258 = scmp.eq.s32.totalorder %s19, 1
    %p259 = por %p257, %p258
    %p260 = scmp.ne.s32.totalorder %s249, %s250
    %p261 = scmp.eq.s32.totalorder %s19, 0
    %p262 = por %p260, %p261
    %p263 = scmp.ne.s32.totalorder %s249, %s250
    %p264 = scmp.eq.s32.totalorder %s20, 1
    %p265 = por %p263, %p264
    %p267 = scmp.ne.s32.totalorder %s250, %s266
    %p268 = scmp.eq.s32.totalorder %s20, 0
    %p269 = por %p267, %p268
    %p270 = scmp.le.s32.totalorder 1, %s14
    %p271 = scmp.lt.s32.totalorder %s14, 3
    %p272 = pnand %p270, %p271
    %p273 = pneg %p272
    // Predicated region
    $region9: #{block_forward_pallas.3} parent=5 // pred_check
      _
    $region10: #{block_forward_pallas.3} parent=5 // pred_check_branch
      %275 = sbr.rel (%p272) target = $region12
    $region11: #{block_forward_pallas.3} parent=5 // pred_region
      %s276 = ssub.s32 %s14, 1
      // Predicated region
      $region13: #{block_forward_pallas.3} parent=11 // pred_check
        %p277 = pneg %p78
      $region14: #{block_forward_pallas.3} parent=11 // pred_check_branch
        %279 = sbr.rel (%p277) target = $region16
      $region15: #{block_forward_pallas.3} parent=11 // pred_region
        %p280 = scmp.lt.s32.totalorder %s24, 0
        %s281 = scalar_select %p280, %s24, 0
        %s282 = smul.addr %s281, 4
        %s283 = scalar_lea.vmem %s1, %s282
      $region16: #{block_forward_pallas.3} parent=11 // pred_fallthru
        _
      // Predicated region
      $region17: #{block_forward_pallas.3} parent=11 // pred_check
        %p284 = pneg %p104
      $region18: #{block_forward_pallas.3} parent=11 // pred_check_branch
        %286 = sbr.rel (%p284) target = $region20
      $region19: #{block_forward_pallas.3} parent=11 // pred_region
        %p287 = scmp.lt.s32.totalorder %s24, 0
        %s288 = scalar_select %p287, %s24, 0
        %s289 = scalar_lea.vmem %s2, %s288
      $region20: #{block_forward_pallas.3} parent=11 // pred_fallthru
        _
      // Predicated region
      $region21: #{block_forward_pallas.3} parent=11 // pred_check
        %p290 = pneg %p130
      $region22: #{block_forward_pallas.3} parent=11 // pred_check_branch
        %292 = sbr.rel (%p290) target = $region24
      $region23: #{block_forward_pallas.3} parent=11 // pred_region
        %p293 = scmp.lt.s32.totalorder %s24, 0
        %s294 = scalar_select %p293, %s24, 0
        %s295 = scalar_lea.vmem %s3, %s294
      $region24: #{block_forward_pallas.3} parent=11 // pred_fallthru
        _
      // Predicated region
      $region25: #{block_forward_pallas.3} parent=11 // pred_check
        %p296 = pneg %p182
      $region26: #{block_forward_pallas.3} parent=11 // pred_check_branch
        %298 = sbr.rel (%p296) target = $region28
      $region27: #{block_forward_pallas.3} parent=11 // pred_region
        %p299 = scmp.lt.s32.totalorder %s24, 0
        %s300 = scalar_select %p299, %s24, 0
        %s301 = smul.addr %s300, 4
        %s302 = scalar_lea.vmem %s5, %s301
      $region28: #{block_forward_pallas.3} parent=11 // pred_fallthru
        _
      // Predicated region
      $region29: #{block_forward_pallas.3} parent=11 // pred_check
        %p303 = pneg %p208
      $region30: #{block_forward_pallas.3} parent=11 // pred_check_branch
        %305 = sbr.rel (%p303) target = $region32
      $region31: #{block_forward_pallas.3} parent=11 // pred_region
        %p306 = scmp.lt.s32.totalorder %s24, 0
        %s307 = scalar_select %p306, %s24, 0
        %s308 = scalar_lea.vmem %s6, %s307
      $region32: #{block_forward_pallas.3} parent=11 // pred_fallthru
        _
      // Predicated region
      $region33: #{block_forward_pallas.3} parent=11 // pred_check
        %p309 = pneg %p234
      $region34: #{block_forward_pallas.3} parent=11 // pred_check_branch
        %311 = sbr.rel (%p309) target = $region36
      $region35: #{block_forward_pallas.3} parent=11 // pred_region
        %p312 = scmp.lt.s32.totalorder %s24, 0
        %s313 = scalar_select %p312, %s24, 0
        %s314 = scalar_lea.vmem %s7, %s313
      $region36: #{block_forward_pallas.3} parent=11 // pred_fallthru
        _
    $region12: #{block_forward_pallas.3} parent=5 // pred_fallthru
      _
    %p315 = scmp.lt.s32.totalorder %s14, 2
    // Predicated region
    $region37: #{block_forward_pallas.3} parent=5 // pred_check
      %p316 = pneg %p315
    $region38: #{block_forward_pallas.3} parent=5 // pred_check_branch
      %318 = sbr.rel (%p316) target = $region40
    $region39: #{block_forward_pallas.3} parent=5 // pred_region
      // Predicated region
      $region41: #{block_forward_pallas.3} parent=39 // pred_check
        %p319 = pneg %p46
      $region42: #{block_forward_pallas.3} parent=39 // pred_check_branch
        %321 = sbr.rel (%p319) target = $region44
      $region43: #{block_forward_pallas.3} parent=39 // pred_region
        %s322 = smul.u32 32, %s21
        %p323 = scmp.lt.s32.totalorder %s322, 63
        %s324 = scalar_select %p323, %s322, 63
        %s325 = smul.addr %s324, 9
        %s326 = smul.addr %s325, 4
        %s327 = scalar_lea.vmem %s0, %s326
        %s328 = smul.u32 32, %s21
      $region44: #{block_forward_pallas.3} parent=39 // pred_fallthru
        _
      // Predicated region
      $region45: #{block_forward_pallas.3} parent=39 // pred_check
        %p329 = pneg %p150
      $region46: #{block_forward_pallas.3} parent=39 // pred_check_branch
        %331 = sbr.rel (%p329) target = $region48
      $region47: #{block_forward_pallas.3} parent=39 // pred_region
        %s332 = smul.u32 32, %s21
        %p333 = scmp.lt.s32.totalorder %s332, 63
        %s334 = scalar_select %p333, %s332, 63
        %s335 = smul.addr %s334, 4
        %s336 = scalar_lea.vmem %s4, %s335
        %s337 = smul.u32 32, %s21
      $region48: #{block_forward_pallas.3} parent=39 // pred_fallthru
        _
    $region40: #{block_forward_pallas.3} parent=5 // pred_fallthru
      _
    %p338 = scmp.le.s32.totalorder 1, %s14
    %p339 = scmp.lt.s32.totalorder %s14, 3
    %p340 = pnand %p338, %p339
    %p341 = pneg %p340
    // Predicated region
    $region49: #{block_forward_pallas.3} parent=5 // pred_check
      _
    $region50: #{block_forward_pallas.3} parent=5 // pred_check_branch
      %343 = sbr.rel (%p340) target = $region52
    $region51: #{block_forward_pallas.3} parent=5 // pred_region
      %s344 = ssub.s32 %s14, 1
      %s345 = smul.u32 32, %s23
      %p346 = scmp.lt.s32.totalorder %s345, 63
      %s347 = scalar_select %p346, %s345, 63
      %s348 = smul.addr %s347, 9
      %s349 = smul.addr %s348, 4
      %s350 = scalar_lea.vmem %s0, %s349
      %p351 = pneg %p52
      %p352 = pneg %p49
      %p353 = scmp.lt.s32.totalorder %s24, 0
      %s354 = scalar_select %p353, %s24, 0
      %s355 = smul.addr %s354, 4
      %s356 = scalar_lea.vmem %s1, %s355
      %p357 = pneg %p78
      %p358 = pneg %p75
      %p359 = scmp.lt.s32.totalorder %s24, 0
      %s360 = scalar_select %p359, %s24, 0
      %s361 = scalar_lea.vmem %s2, %s360
      %p362 = pneg %p104
      %p363 = pneg %p101
      %p364 = scmp.lt.s32.totalorder %s24, 0
      %s365 = scalar_select %p364, %s24, 0
      %s366 = scalar_lea.vmem %s3, %s365
      %p367 = pneg %p130
      %p368 = pneg %p127
      %s369 = smul.u32 32, %s23
      %p370 = scmp.lt.s32.totalorder %s369, 63
      %s371 = scalar_select %p370, %s369, 63
      %s372 = smul.addr %s371, 4
      %s373 = scalar_lea.vmem %s4, %s372
      %p374 = pneg %p156
      %p375 = pneg %p153
      %p376 = scmp.lt.s32.totalorder %s24, 0
      %s377 = scalar_select %p376, %s24, 0
      %s378 = smul.addr %s377, 4
      %s379 = scalar_lea.vmem %s5, %s378
      %p380 = pneg %p182
      %p381 = pneg %p179
      %p382 = scmp.lt.s32.totalorder %s24, 0
      %s383 = scalar_select %p382, %s24, 0
      %s384 = scalar_lea.vmem %s6, %s383
      %p385 = pneg %p208
      %p386 = pneg %p205
      %p387 = scmp.lt.s32.totalorder %s24, 0
      %s388 = scalar_select %p387, %s24, 0
      %s389 = scalar_lea.vmem %s7, %s388
      %p390 = pneg %p234
      %p391 = pneg %p231
      %p392 = pneg %p262
      %p393 = pneg %p259
      %s394 = smul.u32 32, %s23
      %p395 = scmp.lt.s32.totalorder %s394, 63
      %s396 = scalar_select %p395, %s394, 63
      %p397 = scmp.lt.s32.totalorder %s24, 0
      %s398 = scalar_select %p397, %s24, 0
      %s399 = sadd.s32 %s398, %s396
      %s400 = smul.addr %s399, 8
      %s401 = scalar_lea.vmem %s8, %s400
      %s402 = smul.u32 32, %s23
      %p403 = scmp.lt.s32.totalorder %s402, 63
      %s404 = scalar_select %p403, %s402, 63
      %s405 = smul.addr %s404, 9
      %s406 = smul.addr %s405, 4
      %s407 = scalar_lea.vmem %s0, %s406
      %s408 = smul.u32 32, %s23
      %p409 = scmp.lt.s32.totalorder %s24, 0
      %s410 = scalar_select %p409, %s24, 0
      %s411 = smul.addr %s410, 4
      %s412 = scalar_lea.vmem %s1, %s411
      %p413 = scmp.lt.s32.totalorder %s24, 0
      %s414 = scalar_select %p413, %s24, 0
      %s415 = scalar_lea.vmem %s2, %s414
      %p416 = scmp.lt.s32.totalorder %s24, 0
      %s417 = scalar_select %p416, %s24, 0
      %s418 = scalar_lea.vmem %s3, %s417
      %s419 = smul.u32 32, %s23
      %p420 = scmp.lt.s32.totalorder %s419, 63
      %s421 = scalar_select %p420, %s419, 63
      %s422 = smul.addr %s421, 4
      %s423 = scalar_lea.vmem %s4, %s422
      %s424 = smul.u32 32, %s23
      %p425 = scmp.lt.s32.totalorder %s24, 0
      %s426 = scalar_select %p425, %s24, 0
      %s427 = smul.addr %s426, 4
      %s428 = scalar_lea.vmem %s5, %s427
      %p429 = scmp.lt.s32.totalorder %s24, 0
      %s430 = scalar_select %p429, %s24, 0
      %s431 = scalar_lea.vmem %s6, %s430
      %p432 = scmp.lt.s32.totalorder %s24, 0
      %s433 = scalar_select %p432, %s24, 0
      %s434 = scalar_lea.vmem %s7, %s433
      %s435 = smul.u32 32, %s23
      %p436 = scmp.lt.s32.totalorder %s435, 63
      %s437 = scalar_select %p436, %s435, 63
      %p438 = scmp.lt.s32.totalorder %s24, 0
      %s439 = scalar_select %p438, %s24, 0
      %s440 = sadd.s32 %s439, %s437
      %s441 = smul.addr %s440, 8
      %s442 = scalar_lea.vmem %s8, %s441
      %s443 = smul.u32 32, %s23
      %v445 = vld [vmem:[%s407] sm:$0xff]
      %v446 = vld [vmem:[%s407 + $0x8] sm:$0xff]
      %v447 = vld [vmem:[%s407 + $0x10] sm:$0xff]
      %v448 = vld [vmem:[%s407 + $0x18] sm:$0xff]
      %v449 = vld [vmem:[%s407 + $0x20] sm:$0xf]
      %v450 = vld [vmem:[%s407 + $0x24] sm:$0xff]
      %v451 = vld [vmem:[%s407 + $0x2c] sm:$0xff]
      %v452 = vld [vmem:[%s407 + $0x34] sm:$0xff]
      %v453 = vld [vmem:[%s407 + $0x3c] sm:$0xff]
      %v454 = vld [vmem:[%s407 + $0x44] sm:$0xf]
      %v455 = vld [vmem:[%s407 + $0x48] sm:$0xff]
      %v456 = vld [vmem:[%s407 + $0x50] sm:$0xff]
      %v457 = vld [vmem:[%s407 + $0x58] sm:$0xff]
      %v458 = vld [vmem:[%s407 + $0x60] sm:$0xff]
      %v459 = vld [vmem:[%s407 + $0x68] sm:$0xf]
      %v460 = vld [vmem:[%s407 + $0x6c] sm:$0xff]
      %v461 = vld [vmem:[%s407 + $0x74] sm:$0xff]
      %v462 = vld [vmem:[%s407 + $0x7c] sm:$0xff]
      %v463 = vld [vmem:[%s407 + $0x84] sm:$0xff]
      %v464 = vld [vmem:[%s407 + $0x8c] sm:$0xf]
      %v465 = vld [vmem:[%s407 + $0x90] sm:$0xff]
      %v466 = vld [vmem:[%s407 + $0x98] sm:$0xff]
      %v467 = vld [vmem:[%s407 + $0xa0] sm:$0xff]
      %v468 = vld [vmem:[%s407 + $0xa8] sm:$0xff]
      %v469 = vld [vmem:[%s407 + $0xb0] sm:$0xf]
      %v470 = vld [vmem:[%s407 + $0xb4] sm:$0xff]
      %v471 = vld [vmem:[%s407 + $0xbc] sm:$0xff]
      %v472 = vld [vmem:[%s407 + $0xc4] sm:$0xff]
      %v473 = vld [vmem:[%s407 + $0xcc] sm:$0xff]
      %v474 = vld [vmem:[%s407 + $0xd4] sm:$0xf]
      %v475 = vld [vmem:[%s407 + $0xd8] sm:$0xff]
      %v476 = vld [vmem:[%s407 + $0xe0] sm:$0xff]
      %v477 = vld [vmem:[%s407 + $0xe8] sm:$0xff]
      %v478 = vld [vmem:[%s407 + $0xf0] sm:$0xff]
      %v479 = vld [vmem:[%s407 + $0xf8] sm:$0xf]
      %v480 = vld [vmem:[%s407 + $0xfc] sm:$0xff]
      %v481 = vld [vmem:[%s407 + $0x104] sm:$0xff]
      %v482 = vld [vmem:[%s407 + $0x10c] sm:$0xff]
      %v483 = vld [vmem:[%s407 + $0x114] sm:$0xff]
      %v484 = vld [vmem:[%s407 + $0x11c] sm:$0xf]
      %v485 = vld [vmem:[%s407 + $0x120] sm:$0xff]
      %v486 = vld [vmem:[%s407 + $0x128] sm:$0xff]
      %v487 = vld [vmem:[%s407 + $0x130] sm:$0xff]
      %v488 = vld [vmem:[%s407 + $0x138] sm:$0xff]
      %v489 = vld [vmem:[%s407 + $0x140] sm:$0xf]
      %v490 = vld [vmem:[%s407 + $0x144] sm:$0xff]
      %v491 = vld [vmem:[%s407 + $0x14c] sm:$0xff]
      %v492 = vld [vmem:[%s407 + $0x154] sm:$0xff]
      %v493 = vld [vmem:[%s407 + $0x15c] sm:$0xff]
      %v494 = vld [vmem:[%s407 + $0x164] sm:$0xf]
      %v495 = vld [vmem:[%s407 + $0x168] sm:$0xff]
      %v496 = vld [vmem:[%s407 + $0x170] sm:$0xff]
      %v497 = vld [vmem:[%s407 + $0x178] sm:$0xff]
      %v498 = vld [vmem:[%s407 + $0x180] sm:$0xff]
      %v499 = vld [vmem:[%s407 + $0x188] sm:$0xf]
      %v500 = vld [vmem:[%s407 + $0x18c] sm:$0xff]
      %v501 = vld [vmem:[%s407 + $0x194] sm:$0xff]
      %v502 = vld [vmem:[%s407 + $0x19c] sm:$0xff]
      %v503 = vld [vmem:[%s407 + $0x1a4] sm:$0xff]
      %v504 = vld [vmem:[%s407 + $0x1ac] sm:$0xf]
      %v505 = vld [vmem:[%s407 + $0x1b0] sm:$0xff]
      %v506 = vld [vmem:[%s407 + $0x1b8] sm:$0xff]
      %v507 = vld [vmem:[%s407 + $0x1c0] sm:$0xff]
      %v508 = vld [vmem:[%s407 + $0x1c8] sm:$0xff]
      %v509 = vld [vmem:[%s407 + $0x1d0] sm:$0xf]
      %v510 = vld [vmem:[%s407 + $0x1d4] sm:$0xff]
      %v511 = vld [vmem:[%s407 + $0x1dc] sm:$0xff]
      %v512 = vld [vmem:[%s407 + $0x1e4] sm:$0xff]
      %v513 = vld [vmem:[%s407 + $0x1ec] sm:$0xff]
      %v514 = vld [vmem:[%s407 + $0x1f4] sm:$0xf]
      %v515 = vld [vmem:[%s407 + $0x1f8] sm:$0xff]
      %v516 = vld [vmem:[%s407 + $0x200] sm:$0xff]
      %v517 = vld [vmem:[%s407 + $0x208] sm:$0xff]
      %v518 = vld [vmem:[%s407 + $0x210] sm:$0xff]
      %v519 = vld [vmem:[%s407 + $0x218] sm:$0xf]
      %v520 = vld [vmem:[%s407 + $0x21c] sm:$0xff]
      %v521 = vld [vmem:[%s407 + $0x224] sm:$0xff]
      %v522 = vld [vmem:[%s407 + $0x22c] sm:$0xff]
      %v523 = vld [vmem:[%s407 + $0x234] sm:$0xff]
      %v524 = vld [vmem:[%s407 + $0x23c] sm:$0xf]
      %v525 = vld [vmem:[%s407 + $0x240] sm:$0xff]
      %v526 = vld [vmem:[%s407 + $0x248] sm:$0xff]
      %v527 = vld [vmem:[%s407 + $0x250] sm:$0xff]
      %v528 = vld [vmem:[%s407 + $0x258] sm:$0xff]
      %v529 = vld [vmem:[%s407 + $0x260] sm:$0xf]
      %v530 = vld [vmem:[%s407 + $0x264] sm:$0xff]
      %v531 = vld [vmem:[%s407 + $0x26c] sm:$0xff]
      %v532 = vld [vmem:[%s407 + $0x274] sm:$0xff]
      %v533 = vld [vmem:[%s407 + $0x27c] sm:$0xff]
      %v534 = vld [vmem:[%s407 + $0x284] sm:$0xf]
      %v535 = vld [vmem:[%s407 + $0x288] sm:$0xff]
      %v536 = vld [vmem:[%s407 + $0x290] sm:$0xff]
      %v537 = vld [vmem:[%s407 + $0x298] sm:$0xff]
      %v538 = vld [vmem:[%s407 + $0x2a0] sm:$0xff]
      %v539 = vld [vmem:[%s407 + $0x2a8] sm:$0xf]
      %v540 = vld [vmem:[%s407 + $0x2ac] sm:$0xff]
      %v541 = vld [vmem:[%s407 + $0x2b4] sm:$0xff]
      %v542 = vld [vmem:[%s407 + $0x2bc] sm:$0xff]
      %v543 = vld [vmem:[%s407 + $0x2c4] sm:$0xff]
      %v544 = vld [vmem:[%s407 + $0x2cc] sm:$0xf]
      %v545 = vld [vmem:[%s407 + $0x2d0] sm:$0xff]
      %v546 = vld [vmem:[%s407 + $0x2d8] sm:$0xff]
      %v547 = vld [vmem:[%s407 + $0x2e0] sm:$0xff]
      %v548 = vld [vmem:[%s407 + $0x2e8] sm:$0xff]
      %v549 = vld [vmem:[%s407 + $0x2f0] sm:$0xf]
      %v550 = vld [vmem:[%s407 + $0x2f4] sm:$0xff]
      %v551 = vld [vmem:[%s407 + $0x2fc] sm:$0xff]
      %v552 = vld [vmem:[%s407 + $0x304] sm:$0xff]
      %v553 = vld [vmem:[%s407 + $0x30c] sm:$0xff]
      %v554 = vld [vmem:[%s407 + $0x314] sm:$0xf]
      %v555 = vld [vmem:[%s407 + $0x318] sm:$0xff]
      %v556 = vld [vmem:[%s407 + $0x320] sm:$0xff]
      %v557 = vld [vmem:[%s407 + $0x328] sm:$0xff]
      %v558 = vld [vmem:[%s407 + $0x330] sm:$0xff]
      %v559 = vld [vmem:[%s407 + $0x338] sm:$0xf]
      %v560 = vld [vmem:[%s407 + $0x33c] sm:$0xff]
      %v561 = vld [vmem:[%s407 + $0x344] sm:$0xff]
      %v562 = vld [vmem:[%s407 + $0x34c] sm:$0xff]
      %v563 = vld [vmem:[%s407 + $0x354] sm:$0xff]
      %v564 = vld [vmem:[%s407 + $0x35c] sm:$0xf]
      %v565 = vld [vmem:[%s407 + $0x360] sm:$0xff]
      %v566 = vld [vmem:[%s407 + $0x368] sm:$0xff]
      %v567 = vld [vmem:[%s407 + $0x370] sm:$0xff]
      %v568 = vld [vmem:[%s407 + $0x378] sm:$0xff]
      %v569 = vld [vmem:[%s407 + $0x380] sm:$0xf]
      %v570 = vld [vmem:[%s407 + $0x384] sm:$0xff]
      %v571 = vld [vmem:[%s407 + $0x38c] sm:$0xff]
      %v572 = vld [vmem:[%s407 + $0x394] sm:$0xff]
      %v573 = vld [vmem:[%s407 + $0x39c] sm:$0xff]
      %v574 = vld [vmem:[%s407 + $0x3a4] sm:$0xf]
      %v575 = vld [vmem:[%s407 + $0x3a8] sm:$0xff]
      %v576 = vld [vmem:[%s407 + $0x3b0] sm:$0xff]
      %v577 = vld [vmem:[%s407 + $0x3b8] sm:$0xff]
      %v578 = vld [vmem:[%s407 + $0x3c0] sm:$0xff]
      %v579 = vld [vmem:[%s407 + $0x3c8] sm:$0xf]
      %v580 = vld [vmem:[%s407 + $0x3cc] sm:$0xff]
      %v581 = vld [vmem:[%s407 + $0x3d4] sm:$0xff]
      %v582 = vld [vmem:[%s407 + $0x3dc] sm:$0xff]
      %v583 = vld [vmem:[%s407 + $0x3e4] sm:$0xff]
      %v584 = vld [vmem:[%s407 + $0x3ec] sm:$0xf]
      %v585 = vld [vmem:[%s407 + $0x3f0] sm:$0xff]
      %v586 = vld [vmem:[%s407 + $0x3f8] sm:$0xff]
      %v587 = vld [vmem:[%s407 + $0x400] sm:$0xff]
      %v588 = vld [vmem:[%s407 + $0x408] sm:$0xff]
      %v589 = vld [vmem:[%s407 + $0x410] sm:$0xf]
      %v590 = vld [vmem:[%s407 + $0x414] sm:$0xff]
      %v591 = vld [vmem:[%s407 + $0x41c] sm:$0xff]
      %v592 = vld [vmem:[%s407 + $0x424] sm:$0xff]
      %v593 = vld [vmem:[%s407 + $0x42c] sm:$0xff]
      %v594 = vld [vmem:[%s407 + $0x434] sm:$0xf]
      %v595 = vld [vmem:[%s407 + $0x438] sm:$0xff]
      %v596 = vld [vmem:[%s407 + $0x440] sm:$0xff]
      %v597 = vld [vmem:[%s407 + $0x448] sm:$0xff]
      %v598 = vld [vmem:[%s407 + $0x450] sm:$0xff]
      %v599 = vld [vmem:[%s407 + $0x458] sm:$0xf]
      %v600 = vld [vmem:[%s407 + $0x45c] sm:$0xff]
      %v601 = vld [vmem:[%s407 + $0x464] sm:$0xff]
      %v602 = vld [vmem:[%s407 + $0x46c] sm:$0xff]
      %v603 = vld [vmem:[%s407 + $0x474] sm:$0xff]
      %v604 = vld [vmem:[%s407 + $0x47c] sm:$0xf]
      %v605 = vld [vmem:[%s412] sm:$0xf]
      %v606 = vld [vmem:[%s412 + $0x4] sm:$0xf]
      %v607 = vld [vmem:[%s412 + $0x8] sm:$0xf]
      %v608 = vld [vmem:[%s412 + $0xc] sm:$0xf]
      %v609 = vld [vmem:[%s412 + $0x10] sm:$0xf]
      %v610 = vld [vmem:[%s412 + $0x14] sm:$0xf]
      %v611 = vld [vmem:[%s412 + $0x18] sm:$0xf]
      %v612 = vld [vmem:[%s412 + $0x1c] sm:$0xf]
      %v613 = vld [vmem:[%s412 + $0x20] sm:$0xf]
      %v614 = vld [vmem:[%s412 + $0x24] sm:$0xf]
      %v615 = vld [vmem:[%s412 + $0x28] sm:$0xf]
      %v616 = vld [vmem:[%s412 + $0x2c] sm:$0xf]
      %v617 = vld [vmem:[%s412 + $0x30] sm:$0xf]
      %v618 = vld [vmem:[%s412 + $0x34] sm:$0xf]
      %v619 = vld [vmem:[%s412 + $0x38] sm:$0xf]
      %v620 = vld [vmem:[%s412 + $0x3c] sm:$0xf]
      %v621 = vld [vmem:[%s412 + $0x40] sm:$0xf]
      %v622 = vld [vmem:[%s412 + $0x44] sm:$0xf]
      %v623 = vld [vmem:[%s412 + $0x48] sm:$0xf]
      %v624 = vld [vmem:[%s412 + $0x4c] sm:$0xf]
      %v625 = vld [vmem:[%s412 + $0x50] sm:$0xf]
      %v626 = vld [vmem:[%s412 + $0x54] sm:$0xf]
      %v627 = vld [vmem:[%s412 + $0x58] sm:$0xf]
      %v628 = vld [vmem:[%s412 + $0x5c] sm:$0xf]
      %v629 = vld [vmem:[%s412 + $0x60] sm:$0xf]
      %v630 = vld [vmem:[%s412 + $0x64] sm:$0xf]
      %v631 = vld [vmem:[%s412 + $0x68] sm:$0xf]
      %v632 = vld [vmem:[%s412 + $0x6c] sm:$0xf]
      %v633 = vld [vmem:[%s412 + $0x70] sm:$0xf]
      %v634 = vld [vmem:[%s412 + $0x74] sm:$0xf]
      %v635 = vld [vmem:[%s412 + $0x78] sm:$0xf]
      %v636 = vld [vmem:[%s412 + $0x7c] sm:$0xf]
      %v637 = vld [vmem:[%s412 + $0x80] sm:$0xf]
      %v638 = vld [vmem:[%s412 + $0x84] sm:$0xf]
      %v639 = vld [vmem:[%s412 + $0x88] sm:$0xf]
      %v640 = vld [vmem:[%s412 + $0x8c] sm:$0xf]
      %v641 = vld [vmem:[%s412 + $0x90] sm:$0xf]
      %v642 = vld [vmem:[%s412 + $0x94] sm:$0xf]
      %v643 = vld [vmem:[%s412 + $0x98] sm:$0xf]
      %v644 = vld [vmem:[%s412 + $0x9c] sm:$0xf]
      %v645 = vld [vmem:[%s412 + $0xa0] sm:$0xf]
      %v646 = vld [vmem:[%s412 + $0xa4] sm:$0xf]
      %v647 = vld [vmem:[%s412 + $0xa8] sm:$0xf]
      %v648 = vld [vmem:[%s412 + $0xac] sm:$0xf]
      %v649 = vld [vmem:[%s412 + $0xb0] sm:$0xf]
      %v650 = vld [vmem:[%s412 + $0xb4] sm:$0xf]
      %v651 = vld [vmem:[%s412 + $0xb8] sm:$0xf]
      %v652 = vld [vmem:[%s412 + $0xbc] sm:$0xf]
      %v653 = vld [vmem:[%s412 + $0xc0] sm:$0xf]
      %v654 = vld [vmem:[%s412 + $0xc4] sm:$0xf]
      %v655 = vld [vmem:[%s412 + $0xc8] sm:$0xf]
      %v656 = vld [vmem:[%s412 + $0xcc] sm:$0xf]
      %v657 = vld [vmem:[%s412 + $0xd0] sm:$0xf]
      %v658 = vld [vmem:[%s412 + $0xd4] sm:$0xf]
      %v659 = vld [vmem:[%s412 + $0xd8] sm:$0xf]
      %v660 = vld [vmem:[%s412 + $0xdc] sm:$0xf]
      %v661 = vld [vmem:[%s412 + $0xe0] sm:$0xf]
      %v662 = vld [vmem:[%s412 + $0xe4] sm:$0xf]
      %v663 = vld [vmem:[%s412 + $0xe8] sm:$0xf]
      %v664 = vld [vmem:[%s412 + $0xec] sm:$0xf]
      %v665 = vld [vmem:[%s412 + $0xf0] sm:$0xf]
      %v666 = vld [vmem:[%s412 + $0xf4] sm:$0xf]
      %v667 = vld [vmem:[%s412 + $0xf8] sm:$0xf]
      %v668 = vld [vmem:[%s412 + $0xfc] sm:$0xf]
      %v669 = vld [vmem:[%s412 + $0x100] sm:$0xf]
      %v670 = vld [vmem:[%s412 + $0x104] sm:$0xf]
      %v671 = vld [vmem:[%s412 + $0x108] sm:$0xf]
      %v672 = vld [vmem:[%s412 + $0x10c] sm:$0xf]
      %v673 = vld [vmem:[%s412 + $0x110] sm:$0xf]
      %v674 = vld [vmem:[%s412 + $0x114] sm:$0xf]
      %v675 = vld [vmem:[%s412 + $0x118] sm:$0xf]
      %v676 = vld [vmem:[%s412 + $0x11c] sm:$0xf]
      %v677 = vld [vmem:[%s412 + $0x120] sm:$0xf]
      %v678 = vld [vmem:[%s412 + $0x124] sm:$0xf]
      %v679 = vld [vmem:[%s412 + $0x128] sm:$0xf]
      %v680 = vld [vmem:[%s412 + $0x12c] sm:$0xf]
      %v681 = vld [vmem:[%s412 + $0x130] sm:$0xf]
      %v682 = vld [vmem:[%s412 + $0x134] sm:$0xf]
      %v683 = vld [vmem:[%s412 + $0x138] sm:$0xf]
      %v684 = vld [vmem:[%s412 + $0x13c] sm:$0xf]
      %v685 = vld [vmem:[%s412 + $0x140] sm:$0xf]
      %v686 = vld [vmem:[%s412 + $0x144] sm:$0xf]
      %v687 = vld [vmem:[%s412 + $0x148] sm:$0xf]
      %v688 = vld [vmem:[%s412 + $0x14c] sm:$0xf]
      %v689 = vld [vmem:[%s412 + $0x150] sm:$0xf]
      %v690 = vld [vmem:[%s412 + $0x154] sm:$0xf]
      %v691 = vld [vmem:[%s412 + $0x158] sm:$0xf]
      %v692 = vld [vmem:[%s412 + $0x15c] sm:$0xf]
      %v693 = vld [vmem:[%s412 + $0x160] sm:$0xf]
      %v694 = vld [vmem:[%s412 + $0x164] sm:$0xf]
      %v695 = vld [vmem:[%s412 + $0x168] sm:$0xf]
      %v696 = vld [vmem:[%s412 + $0x16c] sm:$0xf]
      %v697 = vld [vmem:[%s412 + $0x170] sm:$0xf]
      %v698 = vld [vmem:[%s412 + $0x174] sm:$0xf]
      %v699 = vld [vmem:[%s412 + $0x178] sm:$0xf]
      %v700 = vld [vmem:[%s412 + $0x17c] sm:$0xf]
      %v701 = vld [vmem:[%s412 + $0x180] sm:$0xf]
      %v702 = vld [vmem:[%s412 + $0x184] sm:$0xf]
      %v703 = vld [vmem:[%s412 + $0x188] sm:$0xf]
      %v704 = vld [vmem:[%s412 + $0x18c] sm:$0xf]
      %v705 = vld [vmem:[%s412 + $0x190] sm:$0xf]
      %v706 = vld [vmem:[%s412 + $0x194] sm:$0xf]
      %v707 = vld [vmem:[%s412 + $0x198] sm:$0xf]
      %v708 = vld [vmem:[%s412 + $0x19c] sm:$0xf]
      %v709 = vld [vmem:[%s412 + $0x1a0] sm:$0xf]
      %v710 = vld [vmem:[%s412 + $0x1a4] sm:$0xf]
      %v711 = vld [vmem:[%s412 + $0x1a8] sm:$0xf]
      %v712 = vld [vmem:[%s412 + $0x1ac] sm:$0xf]
      %v713 = vld [vmem:[%s412 + $0x1b0] sm:$0xf]
      %v714 = vld [vmem:[%s412 + $0x1b4] sm:$0xf]
      %v715 = vld [vmem:[%s412 + $0x1b8] sm:$0xf]
      %v716 = vld [vmem:[%s412 + $0x1bc] sm:$0xf]
      %v717 = vld [vmem:[%s412 + $0x1c0] sm:$0xf]
      %v718 = vld [vmem:[%s412 + $0x1c4] sm:$0xf]
      %v719 = vld [vmem:[%s412 + $0x1c8] sm:$0xf]
      %v720 = vld [vmem:[%s412 + $0x1cc] sm:$0xf]
      %v721 = vld [vmem:[%s412 + $0x1d0] sm:$0xf]
      %v722 = vld [vmem:[%s412 + $0x1d4] sm:$0xf]
      %v723 = vld [vmem:[%s412 + $0x1d8] sm:$0xf]
      %v724 = vld [vmem:[%s412 + $0x1dc] sm:$0xf]
      %v725 = vld [vmem:[%s412 + $0x1e0] sm:$0xf]
      %v726 = vld [vmem:[%s412 + $0x1e4] sm:$0xf]
      %v727 = vld [vmem:[%s412 + $0x1e8] sm:$0xf]
      %v728 = vld [vmem:[%s412 + $0x1ec] sm:$0xf]
      %v729 = vld [vmem:[%s412 + $0x1f0] sm:$0xf]
      %v730 = vld [vmem:[%s412 + $0x1f4] sm:$0xf]
      %v731 = vld [vmem:[%s412 + $0x1f8] sm:$0xf]
      %v732 = vld [vmem:[%s412 + $0x1fc] sm:$0xf]
      %v733 = vld [vmem:[%s412 + $0x200] sm:$0xf]
      %v734 = vld [vmem:[%s412 + $0x204] sm:$0xf]
      %v735 = vld [vmem:[%s412 + $0x208] sm:$0xf]
      %v736 = vld [vmem:[%s412 + $0x20c] sm:$0xf]
      %v737 = vld [vmem:[%s412 + $0x210] sm:$0xf]
      %v738 = vld [vmem:[%s412 + $0x214] sm:$0xf]
      %v739 = vld [vmem:[%s412 + $0x218] sm:$0xf]
      %v740 = vld [vmem:[%s412 + $0x21c] sm:$0xf]
      %v741 = vld [vmem:[%s412 + $0x220] sm:$0xf]
      %v742 = vld [vmem:[%s412 + $0x224] sm:$0xf]
      %v743 = vld [vmem:[%s412 + $0x228] sm:$0xf]
      %v744 = vld [vmem:[%s412 + $0x22c] sm:$0xf]
      %v745 = vld [vmem:[%s412 + $0x230] sm:$0xf]
      %v746 = vld [vmem:[%s412 + $0x234] sm:$0xf]
      %v747 = vld [vmem:[%s412 + $0x238] sm:$0xf]
      %v748 = vld [vmem:[%s412 + $0x23c] sm:$0xf]
      %v909 = vunpack.c.l.b16 %v445
      %v910 = vunpack.c.h.b16 %v445
      %v911 = vunpack.c.l.b16 %v446
      %v912 = vunpack.c.h.b16 %v446
      %v913 = vunpack.c.l.b16 %v447
      %v914 = vunpack.c.h.b16 %v447
      %v915 = vunpack.c.l.b16 %v448
      %v916 = vunpack.c.h.b16 %v448
      %v917 = vunpack.c.l.b16 %v449
      %v918 = vunpack.c.l.b16 %v450
      %v919 = vunpack.c.h.b16 %v450
      %v920 = vunpack.c.l.b16 %v451
      %v921 = vunpack.c.h.b16 %v451
      %v922 = vunpack.c.l.b16 %v452
      %v923 = vunpack.c.h.b16 %v452
      %v924 = vunpack.c.l.b16 %v453
      %v925 = vunpack.c.h.b16 %v453
      %v926 = vunpack.c.l.b16 %v454
      %v927 = vunpack.c.l.b16 %v455
      %v928 = vunpack.c.h.b16 %v455
      %v929 = vunpack.c.l.b16 %v456
      %v930 = vunpack.c.h.b16 %v456
      %v931 = vunpack.c.l.b16 %v457
      %v932 = vunpack.c.h.b16 %v457
      %v933 = vunpack.c.l.b16 %v458
      %v934 = vunpack.c.h.b16 %v458
      %v935 = vunpack.c.l.b16 %v459
      %v936 = vunpack.c.l.b16 %v460
      %v937 = vunpack.c.h.b16 %v460
      %v938 = vunpack.c.l.b16 %v461
      %v939 = vunpack.c.h.b16 %v461
      %v940 = vunpack.c.l.b16 %v462
      %v941 = vunpack.c.h.b16 %v462
      %v942 = vunpack.c.l.b16 %v463
      %v943 = vunpack.c.h.b16 %v463
      %v944 = vunpack.c.l.b16 %v464
      %v945 = vunpack.c.l.b16 %v465
      %v946 = vunpack.c.h.b16 %v465
      %v947 = vunpack.c.l.b16 %v466
      %v948 = vunpack.c.h.b16 %v466
      %v949 = vunpack.c.l.b16 %v467
      %v950 = vunpack.c.h.b16 %v467
      %v951 = vunpack.c.l.b16 %v468
      %v952 = vunpack.c.h.b16 %v468
      %v953 = vunpack.c.l.b16 %v469
      %v954 = vunpack.c.l.b16 %v470
      %v955 = vunpack.c.h.b16 %v470
      %v956 = vunpack.c.l.b16 %v471
      %v957 = vunpack.c.h.b16 %v471
      %v958 = vunpack.c.l.b16 %v472
      %v959 = vunpack.c.h.b16 %v472
      %v960 = vunpack.c.l.b16 %v473
      %v961 = vunpack.c.h.b16 %v473
      %v962 = vunpack.c.l.b16 %v474
      %v963 = vunpack.c.l.b16 %v475
      %v964 = vunpack.c.h.b16 %v475
      %v965 = vunpack.c.l.b16 %v476
      %v966 = vunpack.c.h.b16 %v476
      %v967 = vunpack.c.l.b16 %v477
      %v968 = vunpack.c.h.b16 %v477
      %v969 = vunpack.c.l.b16 %v478
      %v970 = vunpack.c.h.b16 %v478
      %v971 = vunpack.c.l.b16 %v479
      %v972 = vunpack.c.l.b16 %v480
      %v973 = vunpack.c.h.b16 %v480
      %v974 = vunpack.c.l.b16 %v481
      %v975 = vunpack.c.h.b16 %v481
      %v976 = vunpack.c.l.b16 %v482
      %v977 = vunpack.c.h.b16 %v482
      %v978 = vunpack.c.l.b16 %v483
      %v979 = vunpack.c.h.b16 %v483
      %v980 = vunpack.c.l.b16 %v484
      %v981 = vunpack.c.l.b16 %v485
      %v982 = vunpack.c.h.b16 %v485
      %v983 = vunpack.c.l.b16 %v486
      %v984 = vunpack.c.h.b16 %v486
      %v985 = vunpack.c.l.b16 %v487
      %v986 = vunpack.c.h.b16 %v487
      %v987 = vunpack.c.l.b16 %v488
      %v988 = vunpack.c.h.b16 %v488
      %v989 = vunpack.c.l.b16 %v489
      %v990 = vunpack.c.l.b16 %v490
      %v991 = vunpack.c.h.b16 %v490
      %v992 = vunpack.c.l.b16 %v491
      %v993 = vunpack.c.h.b16 %v491
      %v994 = vunpack.c.l.b16 %v492
      %v995 = vunpack.c.h.b16 %v492
      %v996 = vunpack.c.l.b16 %v493
      %v997 = vunpack.c.h.b16 %v493
      %v998 = vunpack.c.l.b16 %v494
      %v999 = vunpack.c.l.b16 %v495
      %v1000 = vunpack.c.h.b16 %v495
      %v1001 = vunpack.c.l.b16 %v496
      %v1002 = vunpack.c.h.b16 %v496
      %v1003 = vunpack.c.l.b16 %v497
      %v1004 = vunpack.c.h.b16 %v497
      %v1005 = vunpack.c.l.b16 %v498
      %v1006 = vunpack.c.h.b16 %v498
      %v1007 = vunpack.c.l.b16 %v499
      %v1008 = vunpack.c.l.b16 %v500
      %v1009 = vunpack.c.h.b16 %v500
      %v1010 = vunpack.c.l.b16 %v501
      %v1011 = vunpack.c.h.b16 %v501
      %v1012 = vunpack.c.l.b16 %v502
      %v1013 = vunpack.c.h.b16 %v502
      %v1014 = vunpack.c.l.b16 %v503
      %v1015 = vunpack.c.h.b16 %v503
      %v1016 = vunpack.c.l.b16 %v504
      %v1017 = vunpack.c.l.b16 %v505
      %v1018 = vunpack.c.h.b16 %v505
      %v1019 = vunpack.c.l.b16 %v506
      %v1020 = vunpack.c.h.b16 %v506
      %v1021 = vunpack.c.l.b16 %v507
      %v1022 = vunpack.c.h.b16 %v507
      %v1023 = vunpack.c.l.b16 %v508
      %v1024 = vunpack.c.h.b16 %v508
      %v1025 = vunpack.c.l.b16 %v509
      %v1026 = vunpack.c.l.b16 %v510
      %v1027 = vunpack.c.h.b16 %v510
      %v1028 = vunpack.c.l.b16 %v511
      %v1029 = vunpack.c.h.b16 %v511
      %v1030 = vunpack.c.l.b16 %v512
      %v1031 = vunpack.c.h.b16 %v512
      %v1032 = vunpack.c.l.b16 %v513
      %v1033 = vunpack.c.h.b16 %v513
      %v1034 = vunpack.c.l.b16 %v514
      %v1035 = vunpack.c.l.b16 %v515
      %v1036 = vunpack.c.h.b16 %v515
      %v1037 = vunpack.c.l.b16 %v516
      %v1038 = vunpack.c.h.b16 %v516
      %v1039 = vunpack.c.l.b16 %v517
      %v1040 = vunpack.c.h.b16 %v517
      %v1041 = vunpack.c.l.b16 %v518
      %v1042 = vunpack.c.h.b16 %v518
      %v1043 = vunpack.c.l.b16 %v519
      %v1044 = vunpack.c.l.b16 %v520
      %v1045 = vunpack.c.h.b16 %v520
      %v1046 = vunpack.c.l.b16 %v521
      %v1047 = vunpack.c.h.b16 %v521
      %v1048 = vunpack.c.l.b16 %v522
      %v1049 = vunpack.c.h.b16 %v522
      %v1050 = vunpack.c.l.b16 %v523
      %v1051 = vunpack.c.h.b16 %v523
      %v1052 = vunpack.c.l.b16 %v524
      %v1053 = vunpack.c.l.b16 %v525
      %v1054 = vunpack.c.h.b16 %v525
      %v1055 = vunpack.c.l.b16 %v526
      %v1056 = vunpack.c.h.b16 %v526
      %v1057 = vunpack.c.l.b16 %v527
      %v1058 = vunpack.c.h.b16 %v527
      %v1059 = vunpack.c.l.b16 %v528
      %v1060 = vunpack.c.h.b16 %v528
      %v1061 = vunpack.c.l.b16 %v529
      %v1062 = vunpack.c.l.b16 %v530
      %v1063 = vunpack.c.h.b16 %v530
      %v1064 = vunpack.c.l.b16 %v531
      %v1065 = vunpack.c.h.b16 %v531
      %v1066 = vunpack.c.l.b16 %v532
      %v1067 = vunpack.c.h.b16 %v532
      %v1068 = vunpack.c.l.b16 %v533
      %v1069 = vunpack.c.h.b16 %v533
      %v1070 = vunpack.c.l.b16 %v534
      %v1071 = vunpack.c.l.b16 %v535
      %v1072 = vunpack.c.h.b16 %v535
      %v1073 = vunpack.c.l.b16 %v536
      %v1074 = vunpack.c.h.b16 %v536
      %v1075 = vunpack.c.l.b16 %v537
      %v1076 = vunpack.c.h.b16 %v537
      %v1077 = vunpack.c.l.b16 %v538
      %v1078 = vunpack.c.h.b16 %v538
      %v1079 = vunpack.c.l.b16 %v539
      %v1080 = vunpack.c.l.b16 %v540
      %v1081 = vunpack.c.h.b16 %v540
      %v1082 = vunpack.c.l.b16 %v541
      %v1083 = vunpack.c.h.b16 %v541
      %v1084 = vunpack.c.l.b16 %v542
      %v1085 = vunpack.c.h.b16 %v542
      %v1086 = vunpack.c.l.b16 %v543
      %v1087 = vunpack.c.h.b16 %v543
      %v1088 = vunpack.c.l.b16 %v544
      %v1089 = vunpack.c.l.b16 %v545
      %v1090 = vunpack.c.h.b16 %v545
      %v1091 = vunpack.c.l.b16 %v546
      %v1092 = vunpack.c.h.b16 %v546
      %v1093 = vunpack.c.l.b16 %v547
      %v1094 = vunpack.c.h.b16 %v547
      %v1095 = vunpack.c.l.b16 %v548
      %v1096 = vunpack.c.h.b16 %v548
      %v1097 = vunpack.c.l.b16 %v549
      %v1098 = vunpack.c.l.b16 %v550
      %v1099 = vunpack.c.h.b16 %v550
      %v1100 = vunpack.c.l.b16 %v551
      %v1101 = vunpack.c.h.b16 %v551
      %v1102 = vunpack.c.l.b16 %v552
      %v1103 = vunpack.c.h.b16 %v552
      %v1104 = vunpack.c.l.b16 %v553
      %v1105 = vunpack.c.h.b16 %v553
      %v1106 = vunpack.c.l.b16 %v554
      %v1107 = vunpack.c.l.b16 %v555
      %v1108 = vunpack.c.h.b16 %v555
      %v1109 = vunpack.c.l.b16 %v556
      %v1110 = vunpack.c.h.b16 %v556
      %v1111 = vunpack.c.l.b16 %v557
      %v1112 = vunpack.c.h.b16 %v557
      %v1113 = vunpack.c.l.b16 %v558
      %v1114 = vunpack.c.h.b16 %v558
      %v1115 = vunpack.c.l.b16 %v559
      %v1116 = vunpack.c.l.b16 %v560
      %v1117 = vunpack.c.h.b16 %v560
      %v1118 = vunpack.c.l.b16 %v561
      %v1119 = vunpack.c.h.b16 %v561
      %v1120 = vunpack.c.l.b16 %v562
      %v1121 = vunpack.c.h.b16 %v562
      %v1122 = vunpack.c.l.b16 %v563
      %v1123 = vunpack.c.h.b16 %v563
      %v1124 = vunpack.c.l.b16 %v564
      %v1125 = vunpack.c.l.b16 %v565
      %v1126 = vunpack.c.h.b16 %v565
      %v1127 = vunpack.c.l.b16 %v566
      %v1128 = vunpack.c.h.b16 %v566
      %v1129 = vunpack.c.l.b16 %v567
      %v1130 = vunpack.c.h.b16 %v567
      %v1131 = vunpack.c.l.b16 %v568
      %v1132 = vunpack.c.h.b16 %v568
      %v1133 = vunpack.c.l.b16 %v569
      %v1134 = vunpack.c.l.b16 %v570
      %v1135 = vunpack.c.h.b16 %v570
      %v1136 = vunpack.c.l.b16 %v571
      %v1137 = vunpack.c.h.b16 %v571
      %v1138 = vunpack.c.l.b16 %v572
      %v1139 = vunpack.c.h.b16 %v572
      %v1140 = vunpack.c.l.b16 %v573
      %v1141 = vunpack.c.h.b16 %v573
      %v1142 = vunpack.c.l.b16 %v574
      %v1143 = vunpack.c.l.b16 %v575
      %v1144 = vunpack.c.h.b16 %v575
      %v1145 = vunpack.c.l.b16 %v576
      %v1146 = vunpack.c.h.b16 %v576
      %v1147 = vunpack.c.l.b16 %v577
      %v1148 = vunpack.c.h.b16 %v577
      %v1149 = vunpack.c.l.b16 %v578
      %v1150 = vunpack.c.h.b16 %v578
      %v1151 = vunpack.c.l.b16 %v579
      %v1152 = vunpack.c.l.b16 %v580
      %v1153 = vunpack.c.h.b16 %v580
      %v1154 = vunpack.c.l.b16 %v581
      %v1155 = vunpack.c.h.b16 %v581
      %v1156 = vunpack.c.l.b16 %v582
      %v1157 = vunpack.c.h.b16 %v582
      %v1158 = vunpack.c.l.b16 %v583
      %v1159 = vunpack.c.h.b16 %v583
      %v1160 = vunpack.c.l.b16 %v584
      %v1161 = vunpack.c.l.b16 %v585
      %v1162 = vunpack.c.h.b16 %v585
      %v1163 = vunpack.c.l.b16 %v586
      %v1164 = vunpack.c.h.b16 %v586
      %v1165 = vunpack.c.l.b16 %v587
      %v1166 = vunpack.c.h.b16 %v587
      %v1167 = vunpack.c.l.b16 %v588
      %v1168 = vunpack.c.h.b16 %v588
      %v1169 = vunpack.c.l.b16 %v589
      %v1170 = vunpack.c.l.b16 %v590
      %v1171 = vunpack.c.h.b16 %v590
      %v1172 = vunpack.c.l.b16 %v591
      %v1173 = vunpack.c.h.b16 %v591
      %v1174 = vunpack.c.l.b16 %v592
      %v1175 = vunpack.c.h.b16 %v592
      %v1176 = vunpack.c.l.b16 %v593
      %v1177 = vunpack.c.h.b16 %v593
      %v1178 = vunpack.c.l.b16 %v594
      %v1179 = vunpack.c.l.b16 %v595
      %v1180 = vunpack.c.h.b16 %v595
      %v1181 = vunpack.c.l.b16 %v596
      %v1182 = vunpack.c.h.b16 %v596
      %v1183 = vunpack.c.l.b16 %v597
      %v1184 = vunpack.c.h.b16 %v597
      %v1185 = vunpack.c.l.b16 %v598
      %v1186 = vunpack.c.h.b16 %v598
      %v1187 = vunpack.c.l.b16 %v599
      %v1188 = vunpack.c.l.b16 %v600
      %v1189 = vunpack.c.h.b16 %v600
      %v1190 = vunpack.c.l.b16 %v601
      %v1191 = vunpack.c.h.b16 %v601
      %v1192 = vunpack.c.l.b16 %v602
      %v1193 = vunpack.c.h.b16 %v602
      %v1194 = vunpack.c.l.b16 %v603
      %v1195 = vunpack.c.h.b16 %v603
      %v1196 = vunpack.c.l.b16 %v604
      %v1197 = vpack.c.b16 %v918, %v909
      %v1198 = vpack.c.b16 %v919, %v910
      %v1199 = vpack.c.b16 %v920, %v911
      %v1200 = vpack.c.b16 %v921, %v912
      %v1201 = vpack.c.b16 %v922, %v913
      %v1202 = vpack.c.b16 %v923, %v914
      %v1203 = vpack.c.b16 %v924, %v915
      %v1204 = vpack.c.b16 %v925, %v916
      %v1205 = vpack.c.b16 %v926, %v917
      %v1206 = vpack.c.b16 %v936, %v927
      %v1207 = vpack.c.b16 %v937, %v928
      %v1208 = vpack.c.b16 %v938, %v929
      %v1209 = vpack.c.b16 %v939, %v930
      %v1210 = vpack.c.b16 %v940, %v931
      %v1211 = vpack.c.b16 %v941, %v932
      %v1212 = vpack.c.b16 %v942, %v933
      %v1213 = vpack.c.b16 %v943, %v934
      %v1214 = vpack.c.b16 %v944, %v935
      %v1215 = vpack.c.b16 %v954, %v945
      %v1216 = vpack.c.b16 %v955, %v946
      %v1217 = vpack.c.b16 %v956, %v947
      %v1218 = vpack.c.b16 %v957, %v948
      %v1219 = vpack.c.b16 %v958, %v949
      %v1220 = vpack.c.b16 %v959, %v950
      %v1221 = vpack.c.b16 %v960, %v951
      %v1222 = vpack.c.b16 %v961, %v952
      %v1223 = vpack.c.b16 %v962, %v953
      %v1224 = vpack.c.b16 %v972, %v963
      %v1225 = vpack.c.b16 %v973, %v964
      %v1226 = vpack.c.b16 %v974, %v965
      %v1227 = vpack.c.b16 %v975, %v966
      %v1228 = vpack.c.b16 %v976, %v967
      %v1229 = vpack.c.b16 %v977, %v968
      %v1230 = vpack.c.b16 %v978, %v969
      %v1231 = vpack.c.b16 %v979, %v970
      %v1232 = vpack.c.b16 %v980, %v971
      %v1233 = vpack.c.b16 %v990, %v981
      %v1234 = vpack.c.b16 %v991, %v982
      %v1235 = vpack.c.b16 %v992, %v983
      %v1236 = vpack.c.b16 %v993, %v984
      %v1237 = vpack.c.b16 %v994, %v985
      %v1238 = vpack.c.b16 %v995, %v986
      %v1239 = vpack.c.b16 %v996, %v987
      %v1240 = vpack.c.b16 %v997, %v988
      %v1241 = vpack.c.b16 %v998, %v989
      %v1242 = vpack.c.b16 %v1008, %v999
      %v1243 = vpack.c.b16 %v1009, %v1000
      %v1244 = vpack.c.b16 %v1010, %v1001
      %v1245 = vpack.c.b16 %v1011, %v1002
      %v1246 = vpack.c.b16 %v1012, %v1003
      %v1247 = vpack.c.b16 %v1013, %v1004
      %v1248 = vpack.c.b16 %v1014, %v1005
      %v1249 = vpack.c.b16 %v1015, %v1006
      %v1250 = vpack.c.b16 %v1016, %v1007
      %v1251 = vpack.c.b16 %v1026, %v1017
      %v1252 = vpack.c.b16 %v1027, %v1018
      %v1253 = vpack.c.b16 %v1028, %v1019
      %v1254 = vpack.c.b16 %v1029, %v1020
      %v1255 = vpack.c.b16 %v1030, %v1021
      %v1256 = vpack.c.b16 %v1031, %v1022
      %v1257 = vpack.c.b16 %v1032, %v1023
      %v1258 = vpack.c.b16 %v1033, %v1024
      %v1259 = vpack.c.b16 %v1034, %v1025
      %v1260 = vpack.c.b16 %v1044, %v1035
      %v1261 = vpack.c.b16 %v1045, %v1036
      %v1262 = vpack.c.b16 %v1046, %v1037
      %v1263 = vpack.c.b16 %v1047, %v1038
      %v1264 = vpack.c.b16 %v1048, %v1039
      %v1265 = vpack.c.b16 %v1049, %v1040
      %v1266 = vpack.c.b16 %v1050, %v1041
      %v1267 = vpack.c.b16 %v1051, %v1042
      %v1268 = vpack.c.b16 %v1052, %v1043
      %v1269 = vpack.c.b16 %v1062, %v1053
      %v1270 = vpack.c.b16 %v1063, %v1054
      %v1271 = vpack.c.b16 %v1064, %v1055
      %v1272 = vpack.c.b16 %v1065, %v1056
      %v1273 = vpack.c.b16 %v1066, %v1057
      %v1274 = vpack.c.b16 %v1067, %v1058
      %v1275 = vpack.c.b16 %v1068, %v1059
      %v1276 = vpack.c.b16 %v1069, %v1060
      %v1277 = vpack.c.b16 %v1070, %v1061
      %v1278 = vpack.c.b16 %v1080, %v1071
      %v1279 = vpack.c.b16 %v1081, %v1072
      %v1280 = vpack.c.b16 %v1082, %v1073
      %v1281 = vpack.c.b16 %v1083, %v1074
      %v1282 = vpack.c.b16 %v1084, %v1075
      %v1283 = vpack.c.b16 %v1085, %v1076
      %v1284 = vpack.c.b16 %v1086, %v1077
      %v1285 = vpack.c.b16 %v1087, %v1078
      %v1286 = vpack.c.b16 %v1088, %v1079
      %v1287 = vpack.c.b16 %v1098, %v1089
      %v1288 = vpack.c.b16 %v1099, %v1090
      %v1289 = vpack.c.b16 %v1100, %v1091
      %v1290 = vpack.c.b16 %v1101, %v1092
      %v1291 = vpack.c.b16 %v1102, %v1093
      %v1292 = vpack.c.b16 %v1103, %v1094
      %v1293 = vpack.c.b16 %v1104, %v1095
      %v1294 = vpack.c.b16 %v1105, %v1096
      %v1295 = vpack.c.b16 %v1106, %v1097
      %v1296 = vpack.c.b16 %v1116, %v1107
      %v1297 = vpack.c.b16 %v1117, %v1108
      %v1298 = vpack.c.b16 %v1118, %v1109
      %v1299 = vpack.c.b16 %v1119, %v1110
      %v1300 = vpack.c.b16 %v1120, %v1111
      %v1301 = vpack.c.b16 %v1121, %v1112
      %v1302 = vpack.c.b16 %v1122, %v1113
      %v1303 = vpack.c.b16 %v1123, %v1114
      %v1304 = vpack.c.b16 %v1124, %v1115
      %v1305 = vpack.c.b16 %v1134, %v1125
      %v1306 = vpack.c.b16 %v1135, %v1126
      %v1307 = vpack.c.b16 %v1136, %v1127
      %v1308 = vpack.c.b16 %v1137, %v1128
      %v1309 = vpack.c.b16 %v1138, %v1129
      %v1310 = vpack.c.b16 %v1139, %v1130
      %v1311 = vpack.c.b16 %v1140, %v1131
      %v1312 = vpack.c.b16 %v1141, %v1132
      %v1313 = vpack.c.b16 %v1142, %v1133
      %v1314 = vpack.c.b16 %v1152, %v1143
      %v1315 = vpack.c.b16 %v1153, %v1144
      %v1316 = vpack.c.b16 %v1154, %v1145
      %v1317 = vpack.c.b16 %v1155, %v1146
      %v1318 = vpack.c.b16 %v1156, %v1147
      %v1319 = vpack.c.b16 %v1157, %v1148
      %v1320 = vpack.c.b16 %v1158, %v1149
      %v1321 = vpack.c.b16 %v1159, %v1150
      %v1322 = vpack.c.b16 %v1160, %v1151
      %v1323 = vpack.c.b16 %v1170, %v1161
      %v1324 = vpack.c.b16 %v1171, %v1162
      %v1325 = vpack.c.b16 %v1172, %v1163
      %v1326 = vpack.c.b16 %v1173, %v1164
      %v1327 = vpack.c.b16 %v1174, %v1165
      %v1328 = vpack.c.b16 %v1175, %v1166
      %v1329 = vpack.c.b16 %v1176, %v1167
      %v1330 = vpack.c.b16 %v1177, %v1168
      %v1331 = vpack.c.b16 %v1178, %v1169
      %v1332 = vpack.c.b16 %v1188, %v1179
      %v1333 = vpack.c.b16 %v1189, %v1180
      %v1334 = vpack.c.b16 %v1190, %v1181
      %v1335 = vpack.c.b16 %v1191, %v1182
      %v1336 = vpack.c.b16 %v1192, %v1183
      %v1337 = vpack.c.b16 %v1193, %v1184
      %v1338 = vpack.c.b16 %v1194, %v1185
      %v1339 = vpack.c.b16 %v1195, %v1186
      %v1340 = vpack.c.b16 %v1196, %v1187
      %v1629 = vunpack.c.l.b16 %v605
      %v1630 = vunpack.c.l.b16 %v606
      %v1631 = vunpack.c.l.b16 %v607
      %v1632 = vunpack.c.l.b16 %v608
      %v1633 = vunpack.c.l.b16 %v609
      %v1634 = vunpack.c.l.b16 %v610
      %v1635 = vunpack.c.l.b16 %v611
      %v1636 = vunpack.c.l.b16 %v612
      %v1637 = vunpack.c.l.b16 %v613
      %v1638 = vunpack.c.l.b16 %v614
      %v1639 = vunpack.c.l.b16 %v615
      %v1640 = vunpack.c.l.b16 %v616
      %v1641 = vunpack.c.l.b16 %v617
      %v1642 = vunpack.c.l.b16 %v618
      %v1643 = vunpack.c.l.b16 %v619
      %v1644 = vunpack.c.l.b16 %v620
      %v1645 = vunpack.c.l.b16 %v621
      %v1646 = vunpack.c.l.b16 %v622
      %v1647 = vunpack.c.l.b16 %v623
      %v1648 = vunpack.c.l.b16 %v624
      %v1649 = vunpack.c.l.b16 %v625
      %v1650 = vunpack.c.l.b16 %v626
      %v1651 = vunpack.c.l.b16 %v627
      %v1652 = vunpack.c.l.b16 %v628
      %v1653 = vunpack.c.l.b16 %v629
      %v1654 = vunpack.c.l.b16 %v630
      %v1655 = vunpack.c.l.b16 %v631
      %v1656 = vunpack.c.l.b16 %v632
      %v1657 = vunpack.c.l.b16 %v633
      %v1658 = vunpack.c.l.b16 %v634
      %v1659 = vunpack.c.l.b16 %v635
      %v1660 = vunpack.c.l.b16 %v636
      %v1661 = vunpack.c.l.b16 %v637
      %v1662 = vunpack.c.l.b16 %v638
      %v1663 = vunpack.c.l.b16 %v639
      %v1664 = vunpack.c.l.b16 %v640
      %v1665 = vunpack.c.l.b16 %v641
      %v1666 = vunpack.c.l.b16 %v642
      %v1667 = vunpack.c.l.b16 %v643
      %v1668 = vunpack.c.l.b16 %v644
      %v1669 = vunpack.c.l.b16 %v645
      %v1670 = vunpack.c.l.b16 %v646
      %v1671 = vunpack.c.l.b16 %v647
      %v1672 = vunpack.c.l.b16 %v648
      %v1673 = vunpack.c.l.b16 %v649
      %v1674 = vunpack.c.l.b16 %v650
      %v1675 = vunpack.c.l.b16 %v651
      %v1676 = vunpack.c.l.b16 %v652
      %v1677 = vunpack.c.l.b16 %v653
      %v1678 = vunpack.c.l.b16 %v654
      %v1679 = vunpack.c.l.b16 %v655
      %v1680 = vunpack.c.l.b16 %v656
      %v1681 = vunpack.c.l.b16 %v657
      %v1682 = vunpack.c.l.b16 %v658
      %v1683 = vunpack.c.l.b16 %v659
      %v1684 = vunpack.c.l.b16 %v660
      %v1685 = vunpack.c.l.b16 %v661
      %v1686 = vunpack.c.l.b16 %v662
      %v1687 = vunpack.c.l.b16 %v663
      %v1688 = vunpack.c.l.b16 %v664
      %v1689 = vunpack.c.l.b16 %v665
      %v1690 = vunpack.c.l.b16 %v666
      %v1691 = vunpack.c.l.b16 %v667
      %v1692 = vunpack.c.l.b16 %v668
      %v1693 = vunpack.c.l.b16 %v669
      %v1694 = vunpack.c.l.b16 %v670
      %v1695 = vunpack.c.l.b16 %v671
      %v1696 = vunpack.c.l.b16 %v672
      %v1697 = vunpack.c.l.b16 %v673
      %v1698 = vunpack.c.l.b16 %v674
      %v1699 = vunpack.c.l.b16 %v675
      %v1700 = vunpack.c.l.b16 %v676
      %v1701 = vunpack.c.l.b16 %v677
      %v1702 = vunpack.c.l.b16 %v678
      %v1703 = vunpack.c.l.b16 %v679
      %v1704 = vunpack.c.l.b16 %v680
      %v1705 = vunpack.c.l.b16 %v681
      %v1706 = vunpack.c.l.b16 %v682
      %v1707 = vunpack.c.l.b16 %v683
      %v1708 = vunpack.c.l.b16 %v684
      %v1709 = vunpack.c.l.b16 %v685
      %v1710 = vunpack.c.l.b16 %v686
      %v1711 = vunpack.c.l.b16 %v687
      %v1712 = vunpack.c.l.b16 %v688
      %v1713 = vunpack.c.l.b16 %v689
      %v1714 = vunpack.c.l.b16 %v690
      %v1715 = vunpack.c.l.b16 %v691
      %v1716 = vunpack.c.l.b16 %v692
      %v1717 = vunpack.c.l.b16 %v693
      %v1718 = vunpack.c.l.b16 %v694
      %v1719 = vunpack.c.l.b16 %v695
      %v1720 = vunpack.c.l.b16 %v696
      %v1721 = vunpack.c.l.b16 %v697
      %v1722 = vunpack.c.l.b16 %v698
      %v1723 = vunpack.c.l.b16 %v699
      %v1724 = vunpack.c.l.b16 %v700
      %v1725 = vunpack.c.l.b16 %v701
      %v1726 = vunpack.c.l.b16 %v702
      %v1727 = vunpack.c.l.b16 %v703
      %v1728 = vunpack.c.l.b16 %v704
      %v1729 = vunpack.c.l.b16 %v705
      %v1730 = vunpack.c.l.b16 %v706
      %v1731 = vunpack.c.l.b16 %v707
      %v1732 = vunpack.c.l.b16 %v708
      %v1733 = vunpack.c.l.b16 %v709
      %v1734 = vunpack.c.l.b16 %v710
      %v1735 = vunpack.c.l.b16 %v711
      %v1736 = vunpack.c.l.b16 %v712
      %v1737 = vunpack.c.l.b16 %v713
      %v1738 = vunpack.c.l.b16 %v714
      %v1739 = vunpack.c.l.b16 %v715
      %v1740 = vunpack.c.l.b16 %v716
      %v1741 = vunpack.c.l.b16 %v717
      %v1742 = vunpack.c.l.b16 %v718
      %v1743 = vunpack.c.l.b16 %v719
      %v1744 = vunpack.c.l.b16 %v720
      %v1745 = vunpack.c.l.b16 %v721
      %v1746 = vunpack.c.l.b16 %v722
      %v1747 = vunpack.c.l.b16 %v723
      %v1748 = vunpack.c.l.b16 %v724
      %v1749 = vunpack.c.l.b16 %v725
      %v1750 = vunpack.c.l.b16 %v726
      %v1751 = vunpack.c.l.b16 %v727
      %v1752 = vunpack.c.l.b16 %v728
      %v1753 = vunpack.c.l.b16 %v729
      %v1754 = vunpack.c.l.b16 %v730
      %v1755 = vunpack.c.l.b16 %v731
      %v1756 = vunpack.c.l.b16 %v732
      %v1757 = vunpack.c.l.b16 %v733
      %v1758 = vunpack.c.l.b16 %v734
      %v1759 = vunpack.c.l.b16 %v735
      %v1760 = vunpack.c.l.b16 %v736
      %v1761 = vunpack.c.l.b16 %v737
      %v1762 = vunpack.c.l.b16 %v738
      %v1763 = vunpack.c.l.b16 %v739
      %v1764 = vunpack.c.l.b16 %v740
      %v1765 = vunpack.c.l.b16 %v741
      %v1766 = vunpack.c.l.b16 %v742
      %v1767 = vunpack.c.l.b16 %v743
      %v1768 = vunpack.c.l.b16 %v744
      %v1769 = vunpack.c.l.b16 %v745
      %v1770 = vunpack.c.l.b16 %v746
      %v1771 = vunpack.c.l.b16 %v747
      %v1772 = vunpack.c.l.b16 %v748
      %v1773 = vpack.c.b16 %v1630, %v1629
      %v1774 = vpack.c.b16 %v1632, %v1631
      %v1775 = vpack.c.b16 %v1634, %v1633
      %v1776 = vpack.c.b16 %v1636, %v1635
      %v1777 = vpack.c.b16 %v1638, %v1637
      %v1778 = vpack.c.b16 %v1640, %v1639
      %v1779 = vpack.c.b16 %v1642, %v1641
      %v1780 = vpack.c.b16 %v1644, %v1643
      %v1781 = vpack.c.b16 %v1646, %v1645
      %v1782 = vpack.c.b16 %v1648, %v1647
      %v1783 = vpack.c.b16 %v1650, %v1649
      %v1784 = vpack.c.b16 %v1652, %v1651
      %v1785 = vpack.c.b16 %v1654, %v1653
      %v1786 = vpack.c.b16 %v1656, %v1655
      %v1787 = vpack.c.b16 %v1658, %v1657
      %v1788 = vpack.c.b16 %v1660, %v1659
      %v1789 = vpack.c.b16 %v1662, %v1661
      %v1790 = vpack.c.b16 %v1664, %v1663
      %v1791 = vpack.c.b16 %v1666, %v1665
      %v1792 = vpack.c.b16 %v1668, %v1667
      %v1793 = vpack.c.b16 %v1670, %v1669
      %v1794 = vpack.c.b16 %v1672, %v1671
      %v1795 = vpack.c.b16 %v1674, %v1673
      %v1796 = vpack.c.b16 %v1676, %v1675
      %v1797 = vpack.c.b16 %v1678, %v1677
      %v1798 = vpack.c.b16 %v1680, %v1679
      %v1799 = vpack.c.b16 %v1682, %v1681
      %v1800 = vpack.c.b16 %v1684, %v1683
      %v1801 = vpack.c.b16 %v1686, %v1685
      %v1802 = vpack.c.b16 %v1688, %v1687
      %v1803 = vpack.c.b16 %v1690, %v1689
      %v1804 = vpack.c.b16 %v1692, %v1691
      %v1805 = vpack.c.b16 %v1694, %v1693
      %v1806 = vpack.c.b16 %v1696, %v1695
      %v1807 = vpack.c.b16 %v1698, %v1697
      %v1808 = vpack.c.b16 %v1700, %v1699
      %v1809 = vpack.c.b16 %v1702, %v1701
      %v1810 = vpack.c.b16 %v1704, %v1703
      %v1811 = vpack.c.b16 %v1706, %v1705
      %v1812 = vpack.c.b16 %v1708, %v1707
      %v1813 = vpack.c.b16 %v1710, %v1709
      %v1814 = vpack.c.b16 %v1712, %v1711
      %v1815 = vpack.c.b16 %v1714, %v1713
      %v1816 = vpack.c.b16 %v1716, %v1715
      %v1817 = vpack.c.b16 %v1718, %v1717
      %v1818 = vpack.c.b16 %v1720, %v1719
      %v1819 = vpack.c.b16 %v1722, %v1721
      %v1820 = vpack.c.b16 %v1724, %v1723
      %v1821 = vpack.c.b16 %v1726, %v1725
      %v1822 = vpack.c.b16 %v1728, %v1727
      %v1823 = vpack.c.b16 %v1730, %v1729
      %v1824 = vpack.c.b16 %v1732, %v1731
      %v1825 = vpack.c.b16 %v1734, %v1733
      %v1826 = vpack.c.b16 %v1736, %v1735
      %v1827 = vpack.c.b16 %v1738, %v1737
      %v1828 = vpack.c.b16 %v1740, %v1739
      %v1829 = vpack.c.b16 %v1742, %v1741
      %v1830 = vpack.c.b16 %v1744, %v1743
      %v1831 = vpack.c.b16 %v1746, %v1745
      %v1832 = vpack.c.b16 %v1748, %v1747
      %v1833 = vpack.c.b16 %v1750, %v1749
      %v1834 = vpack.c.b16 %v1752, %v1751
      %v1835 = vpack.c.b16 %v1754, %v1753
      %v1836 = vpack.c.b16 %v1756, %v1755
      %v1837 = vpack.c.b16 %v1758, %v1757
      %v1838 = vpack.c.b16 %v1760, %v1759
      %v1839 = vpack.c.b16 %v1762, %v1761
      %v1840 = vpack.c.b16 %v1764, %v1763
      %v1841 = vpack.c.b16 %v1766, %v1765
      %v1842 = vpack.c.b16 %v1768, %v1767
      %v1843 = vpack.c.b16 %v1770, %v1769
      %v1844 = vpack.c.b16 %v1772, %v1771
      %1917 = vmatprep.subr.bf16.mxu0 0
      %1918 = vmatpush1.bf16.msra.mxu0 %v1780
      %1919 = vmatprep.subr.bf16.mxu0 0
      %1920 = vmatpush1.bf16.msra.mxu0 %v1779
      %1921 = vmatprep.subr.bf16.mxu0 0
      %1922 = vmatpush1.bf16.msra.mxu0 %v1778
      %1923 = vmatprep.subr.bf16.mxu0 0
      %1924 = vmatpush1.bf16.msra.mxu0 %v1777
      %1925 = vmatprep.subr.bf16.mxu0 0
      %1926 = vmatpush1.bf16.msra.mxu0 %v1776
      %1927 = vmatprep.subr.bf16.mxu0 0
      %1928 = vmatpush1.bf16.msra.mxu0 %v1775
      %1929 = vmatprep.subr.bf16.mxu0 0
      %1930 = vmatpush1.bf16.msra.mxu0 %v1774
      %1931 = vmatprep.subr.bf16.mxu0 0
      %1932 = vmatpush1.bf16.msra.mxu0 %v1773
      %1933 = vmatprep.subr.bf16.mxu0 0
      %1934 = vmatpush2.bf16.msra.mxu0 %v1788
      %1935 = vmatprep.subr.bf16.mxu0 0
      %1936 = vmatpush2.bf16.msra.mxu0 %v1787
      %1937 = vmatprep.subr.bf16.mxu0 0
      %1938 = vmatpush2.bf16.msra.mxu0 %v1786
      %1939 = vmatprep.subr.bf16.mxu0 0
      %1940 = vmatpush2.bf16.msra.mxu0 %v1785
      %1941 = vmatprep.subr.bf16.mxu0 0
      %1942 = vmatpush2.bf16.msra.mxu0 %v1784
      %1943 = vmatprep.subr.bf16.mxu0 0
      %1944 = vmatpush2.bf16.msra.mxu0 %v1783
      %1945 = vmatprep.subr.bf16.mxu0 0
      %1946 = vmatpush2.bf16.msra.mxu0 %v1782
      %1947 = vmatprep.subr.bf16.mxu0 0
      %1948 = vmatpush2.bf16.msra.mxu0 %v1781
      %1949 = vmatprep.mubr.bf16.mxu0 %v1198
      %1950 = vmatmul.mubr.bf16.gmra.mxu0 %v1197
      %v1951 = vpop.f32.mrf.mxu0
      %v1952 = vadd.f32 0.0, %v1951
      %v1953 = vpop.f32.mrf.mxu0
      %v1954 = vpop.f32.mrf.mxu0
      %v1955 = vadd.f32 0.0, %v1954
      %v1956 = vpop.f32.mrf.mxu0
      %1957 = vmatprep.mubr.bf16.mxu0 %v1207
      %1958 = vmatmul.mubr.bf16.gmra.mxu0 %v1206
      %v1959 = vpop.f32.mrf.mxu0
      %v1960 = vadd.f32 0.0, %v1959
      %v1961 = vpop.f32.mrf.mxu0
      %v1962 = vpop.f32.mrf.mxu0
      %v1963 = vadd.f32 0.0, %v1962
      %v1964 = vpop.f32.mrf.mxu0
      %1965 = vmatprep.mubr.bf16.mxu0 %v1216
      %1966 = vmatmul.mubr.bf16.gmra.mxu0 %v1215
      %v1967 = vpop.f32.mrf.mxu0
      %v1968 = vadd.f32 0.0, %v1967
      %v1969 = vpop.f32.mrf.mxu0
      %v1970 = vpop.f32.mrf.mxu0
      %v1971 = vadd.f32 0.0, %v1970
      %v1972 = vpop.f32.mrf.mxu0
      %1973 = vmatprep.mubr.bf16.mxu0 %v1225
      %1974 = vmatmul.mubr.bf16.gmra.mxu0 %v1224
      %v1975 = vpop.f32.mrf.mxu0
      %v1976 = vadd.f32 0.0, %v1975
      %v1977 = vpop.f32.mrf.mxu0
      %v1978 = vpop.f32.mrf.mxu0
      %v1979 = vadd.f32 0.0, %v1978
      %v1980 = vpop.f32.mrf.mxu0
      %1981 = vmatprep.mubr.bf16.mxu0 %v1234
      %1982 = vmatmul.mubr.bf16.gmra.mxu0 %v1233
      %v1983 = vpop.f32.mrf.mxu0
      %v1984 = vadd.f32 0.0, %v1983
      %v1985 = vpop.f32.mrf.mxu0
      %v1986 = vpop.f32.mrf.mxu0
      %v1987 = vadd.f32 0.0, %v1986
      %v1988 = vpop.f32.mrf.mxu0
      %1989 = vmatprep.mubr.bf16.mxu0 %v1243
      %1990 = vmatmul.mubr.bf16.gmra.mxu0 %v1242
      %v1991 = vpop.f32.mrf.mxu0
      %v1992 = vadd.f32 0.0, %v1991
      %v1993 = vpop.f32.mrf.mxu0
      %v1994 = vpop.f32.mrf.mxu0
      %v1995 = vadd.f32 0.0, %v1994
      %v1996 = vpop.f32.mrf.mxu0
      %1997 = vmatprep.mubr.bf16.mxu0 %v1252
      %1998 = vmatmul.mubr.bf16.gmra.mxu0 %v1251
      %v1999 = vpop.f32.mrf.mxu0
      %v2000 = vadd.f32 0.0, %v1999
      %v2001 = vpop.f32.mrf.mxu0
      %v2002 = vpop.f32.mrf.mxu0
      %v2003 = vadd.f32 0.0, %v2002
      %v2004 = vpop.f32.mrf.mxu0
      %2005 = vmatprep.mubr.bf16.mxu0 %v1261
      %2006 = vmatmul.mubr.bf16.gmra.mxu0 %v1260
      %v2007 = vpop.f32.mrf.mxu0
      %v2008 = vadd.f32 0.0, %v2007
      %v2009 = vpop.f32.mrf.mxu0
      %v2010 = vpop.f32.mrf.mxu0
      %v2011 = vadd.f32 0.0, %v2010
      %v2012 = vpop.f32.mrf.mxu0
      %2013 = vmatprep.mubr.bf16.mxu0 %v1270
      %2014 = vmatmul.mubr.bf16.gmra.mxu0 %v1269
      %v2015 = vpop.f32.mrf.mxu0
      %v2016 = vadd.f32 0.0, %v2015
      %v2017 = vpop.f32.mrf.mxu0
      %v2018 = vpop.f32.mrf.mxu0
      %v2019 = vadd.f32 0.0, %v2018
      %v2020 = vpop.f32.mrf.mxu0
      %2021 = vmatprep.mubr.bf16.mxu0 %v1279
      %2022 = vmatmul.mubr.bf16.gmra.mxu0 %v1278
      %v2023 = vpop.f32.mrf.mxu0
      %v2024 = vadd.f32 0.0, %v2023
      %v2025 = vpop.f32.mrf.mxu0
      %v2026 = vpop.f32.mrf.mxu0
      %v2027 = vadd.f32 0.0, %v2026
      %v2028 = vpop.f32.mrf.mxu0
      %2029 = vmatprep.mubr.bf16.mxu0 %v1288
      %2030 = vmatmul.mubr.bf16.gmra.mxu0 %v1287
      %v2031 = vpop.f32.mrf.mxu0
      %v2032 = vadd.f32 0.0, %v2031
      %v2033 = vpop.f32.mrf.mxu0
      %v2034 = vpop.f32.mrf.mxu0
      %v2035 = vadd.f32 0.0, %v2034
      %v2036 = vpop.f32.mrf.mxu0
      %2037 = vmatprep.mubr.bf16.mxu0 %v1297
      %2038 = vmatmul.mubr.bf16.gmra.mxu0 %v1296
      %v2039 = vpop.f32.mrf.mxu0
      %v2040 = vadd.f32 0.0, %v2039
      %v2041 = vpop.f32.mrf.mxu0
      %v2042 = vpop.f32.mrf.mxu0
      %v2043 = vadd.f32 0.0, %v2042
      %v2044 = vpop.f32.mrf.mxu0
      %2045 = vmatprep.mubr.bf16.mxu0 %v1306
      %2046 = vmatmul.mubr.bf16.gmra.mxu0 %v1305
      %v2047 = vpop.f32.mrf.mxu0
      %v2048 = vadd.f32 0.0, %v2047
      %v2049 = vpop.f32.mrf.mxu0
      %v2050 = vpop.f32.mrf.mxu0
      %v2051 = vadd.f32 0.0, %v2050
      %v2052 = vpop.f32.mrf.mxu0
      %2053 = vmatprep.mubr.bf16.mxu0 %v1315
      %2054 = vmatmul.mubr.bf16.gmra.mxu0 %v1314
      %v2055 = vpop.f32.mrf.mxu0
      %v2056 = vadd.f32 0.0, %v2055
      %v2057 = vpop.f32.mrf.mxu0
      %v2058 = vpop.f32.mrf.mxu0
      %v2059 = vadd.f32 0.0, %v2058
      %v2060 = vpop.f32.mrf.mxu0
      %2061 = vmatprep.mubr.bf16.mxu0 %v1324
      %2062 = vmatmul.mubr.bf16.gmra.mxu0 %v1323
      %v2063 = vpop.f32.mrf.mxu0
      %v2064 = vadd.f32 0.0, %v2063
      %v2065 = vpop.f32.mrf.mxu0
      %v2066 = vpop.f32.mrf.mxu0
      %v2067 = vadd.f32 0.0, %v2066
      %v2068 = vpop.f32.mrf.mxu0
      %2069 = vmatprep.mubr.bf16.mxu0 %v1333
      %2070 = vmatmul.mubr.bf16.gmra.mxu0 %v1332
      %v2071 = vpop.f32.mrf.mxu0
      %v2072 = vadd.f32 0.0, %v2071
      %v2073 = vpop.f32.mrf.mxu0
      %v2074 = vpop.f32.mrf.mxu0
      %v2075 = vadd.f32 0.0, %v2074
      %v2076 = vpop.f32.mrf.mxu0
      %2077 = vdwg.mxu0
      %2078 = vmatprep.subr.bf16.mxu0 0
      %2079 = vmatpush1.bf16.msra.mxu0 %v1796
      %2080 = vmatprep.subr.bf16.mxu0 0
      %2081 = vmatpush1.bf16.msra.mxu0 %v1795
      %2082 = vmatprep.subr.bf16.mxu0 0
      %2083 = vmatpush1.bf16.msra.mxu0 %v1794
      %2084 = vmatprep.subr.bf16.mxu0 0
      %2085 = vmatpush1.bf16.msra.mxu0 %v1793
      %2086 = vmatprep.subr.bf16.mxu0 0
      %2087 = vmatpush1.bf16.msra.mxu0 %v1792
      %2088 = vmatprep.subr.bf16.mxu0 0
      %2089 = vmatpush1.bf16.msra.mxu0 %v1791
      %2090 = vmatprep.subr.bf16.mxu0 0
      %2091 = vmatpush1.bf16.msra.mxu0 %v1790
      %2092 = vmatprep.subr.bf16.mxu0 0
      %2093 = vmatpush1.bf16.msra.mxu0 %v1789
      %2094 = vmatprep.subr.bf16.mxu0 0
      %2095 = vmatpush2.bf16.msra.mxu0 %v1804
      %2096 = vmatprep.subr.bf16.mxu0 0
      %2097 = vmatpush2.bf16.msra.mxu0 %v1803
      %2098 = vmatprep.subr.bf16.mxu0 0
      %2099 = vmatpush2.bf16.msra.mxu0 %v1802
      %2100 = vmatprep.subr.bf16.mxu0 0
      %2101 = vmatpush2.bf16.msra.mxu0 %v1801
      %2102 = vmatprep.subr.bf16.mxu0 0
      %2103 = vmatpush2.bf16.msra.mxu0 %v1800
      %2104 = vmatprep.subr.bf16.mxu0 0
      %2105 = vmatpush2.bf16.msra.mxu0 %v1799
      %2106 = vmatprep.subr.bf16.mxu0 0
      %2107 = vmatpush2.bf16.msra.mxu0 %v1798
      %2108 = vmatprep.subr.bf16.mxu0 0
      %2109 = vmatpush2.bf16.msra.mxu0 %v1797
      %2110 = vmatprep.mubr.bf16.mxu0 %v1200
      %2111 = vmatmul.mubr.bf16.gmra.mxu0 %v1199
      %v2112 = vpop.f32.mrf.mxu0
      %v2113 = vadd.f32 %v1952, %v2112
      %v2114 = vpop.f32.mrf.mxu0
      %v2115 = vpop.f32.mrf.mxu0
      %v2116 = vadd.f32 %v1955, %v2115
      %v2117 = vpop.f32.mrf.mxu0
      %2118 = vmatprep.mubr.bf16.mxu0 %v1209
      %2119 = vmatmul.mubr.bf16.gmra.mxu0 %v1208
      %v2120 = vpop.f32.mrf.mxu0
      %v2121 = vadd.f32 %v1960, %v2120
      %v2122 = vpop.f32.mrf.mxu0
      %v2123 = vpop.f32.mrf.mxu0
      %v2124 = vadd.f32 %v1963, %v2123
      %v2125 = vpop.f32.mrf.mxu0
      %2126 = vmatprep.mubr.bf16.mxu0 %v1218
      %2127 = vmatmul.mubr.bf16.gmra.mxu0 %v1217
      %v2128 = vpop.f32.mrf.mxu0
      %v2129 = vadd.f32 %v1968, %v2128
      %v2130 = vpop.f32.mrf.mxu0
      %v2131 = vpop.f32.mrf.mxu0
      %v2132 = vadd.f32 %v1971, %v2131
      %v2133 = vpop.f32.mrf.mxu0
      %2134 = vmatprep.mubr.bf16.mxu0 %v1227
      %2135 = vmatmul.mubr.bf16.gmra.mxu0 %v1226
      %v2136 = vpop.f32.mrf.mxu0
      %v2137 = vadd.f32 %v1976, %v2136
      %v2138 = vpop.f32.mrf.mxu0
      %v2139 = vpop.f32.mrf.mxu0
      %v2140 = vadd.f32 %v1979, %v2139
      %v2141 = vpop.f32.mrf.mxu0
      %2142 = vmatprep.mubr.bf16.mxu0 %v1236
      %2143 = vmatmul.mubr.bf16.gmra.mxu0 %v1235
      %v2144 = vpop.f32.mrf.mxu0
      %v2145 = vadd.f32 %v1984, %v2144
      %v2146 = vpop.f32.mrf.mxu0
      %v2147 = vpop.f32.mrf.mxu0
      %v2148 = vadd.f32 %v1987, %v2147
      %v2149 = vpop.f32.mrf.mxu0
      %2150 = vmatprep.mubr.bf16.mxu0 %v1245
      %2151 = vmatmul.mubr.bf16.gmra.mxu0 %v1244
      %v2152 = vpop.f32.mrf.mxu0
      %v2153 = vadd.f32 %v1992, %v2152
      %v2154 = vpop.f32.mrf.mxu0
      %v2155 = vpop.f32.mrf.mxu0
      %v2156 = vadd.f32 %v1995, %v2155
      %v2157 = vpop.f32.mrf.mxu0
      %2158 = vmatprep.mubr.bf16.mxu0 %v1254
      %2159 = vmatmul.mubr.bf16.gmra.mxu0 %v1253
      %v2160 = vpop.f32.mrf.mxu0
      %v2161 = vadd.f32 %v2000, %v2160
      %v2162 = vpop.f32.mrf.mxu0
      %v2163 = vpop.f32.mrf.mxu0
      %v2164 = vadd.f32 %v2003, %v2163
      %v2165 = vpop.f32.mrf.mxu0
      %2166 = vmatprep.mubr.bf16.mxu0 %v1263
      %2167 = vmatmul.mubr.bf16.gmra.mxu0 %v1262
      %v2168 = vpop.f32.mrf.mxu0
      %v2169 = vadd.f32 %v2008, %v2168
      %v2170 = vpop.f32.mrf.mxu0
      %v2171 = vpop.f32.mrf.mxu0
      %v2172 = vadd.f32 %v2011, %v2171
      %v2173 = vpop.f32.mrf.mxu0
      %2174 = vmatprep.mubr.bf16.mxu0 %v1272
      %2175 = vmatmul.mubr.bf16.gmra.mxu0 %v1271
      %v2176 = vpop.f32.mrf.mxu0
      %v2177 = vadd.f32 %v2016, %v2176
      %v2178 = vpop.f32.mrf.mxu0
      %v2179 = vpop.f32.mrf.mxu0
      %v2180 = vadd.f32 %v2019, %v2179
      %v2181 = vpop.f32.mrf.mxu0
      %2182 = vmatprep.mubr.bf16.mxu0 %v1281
      %2183 = vmatmul.mubr.bf16.gmra.mxu0 %v1280
      %v2184 = vpop.f32.mrf.mxu0
      %v2185 = vadd.f32 %v2024, %v2184
      %v2186 = vpop.f32.mrf.mxu0
      %v2187 = vpop.f32.mrf.mxu0
      %v2188 = vadd.f32 %v2027, %v2187
      %v2189 = vpop.f32.mrf.mxu0
      %2190 = vmatprep.mubr.bf16.mxu0 %v1290
      %2191 = vmatmul.mubr.bf16.gmra.mxu0 %v1289
      %v2192 = vpop.f32.mrf.mxu0
      %v2193 = vadd.f32 %v2032, %v2192
      %v2194 = vpop.f32.mrf.mxu0
      %v2195 = vpop.f32.mrf.mxu0
      %v2196 = vadd.f32 %v2035, %v2195
      %v2197 = vpop.f32.mrf.mxu0
      %2198 = vmatprep.mubr.bf16.mxu0 %v1299
      %2199 = vmatmul.mubr.bf16.gmra.mxu0 %v1298
      %v2200 = vpop.f32.mrf.mxu0
      %v2201 = vadd.f32 %v2040, %v2200
      %v2202 = vpop.f32.mrf.mxu0
      %v2203 = vpop.f32.mrf.mxu0
      %v2204 = vadd.f32 %v2043, %v2203
      %v2205 = vpop.f32.mrf.mxu0
      %2206 = vmatprep.mubr.bf16.mxu0 %v1308
      %2207 = vmatmul.mubr.bf16.gmra.mxu0 %v1307
      %v2208 = vpop.f32.mrf.mxu0
      %v2209 = vadd.f32 %v2048, %v2208
      %v2210 = vpop.f32.mrf.mxu0
      %v2211 = vpop.f32.mrf.mxu0
      %v2212 = vadd.f32 %v2051, %v2211
      %v2213 = vpop.f32.mrf.mxu0
      %2214 = vmatprep.mubr.bf16.mxu0 %v1317
      %2215 = vmatmul.mubr.bf16.gmra.mxu0 %v1316
      %v2216 = vpop.f32.mrf.mxu0
      %v2217 = vadd.f32 %v2056, %v2216
      %v2218 = vpop.f32.mrf.mxu0
      %v2219 = vpop.f32.mrf.mxu0
      %v2220 = vadd.f32 %v2059, %v2219
      %v2221 = vpop.f32.mrf.mxu0
      %2222 = vmatprep.mubr.bf16.mxu0 %v1326
      %2223 = vmatmul.mubr.bf16.gmra.mxu0 %v1325
      %v2224 = vpop.f32.mrf.mxu0
      %v2225 = vadd.f32 %v2064, %v2224
      %v2226 = vpop.f32.mrf.mxu0
      %v2227 = vpop.f32.mrf.mxu0
      %v2228 = vadd.f32 %v2067, %v2227
      %v2229 = vpop.f32.mrf.mxu0
      %2230 = vmatprep.mubr.bf16.mxu0 %v1335
      %2231 = vmatmul.mubr.bf16.gmra.mxu0 %v1334
      %v2232 = vpop.f32.mrf.mxu0
      %v2233 = vadd.f32 %v2072, %v2232
      %v2234 = vpop.f32.mrf.mxu0
      %v2235 = vpop.f32.mrf.mxu0
      %v2236 = vadd.f32 %v2075, %v2235
      %v2237 = vpop.f32.mrf.mxu0
      %2238 = vdwg.mxu0
      %2239 = vmatprep.subr.bf16.mxu0 0
      %2240 = vmatpush1.bf16.msra.mxu0 %v1812
      %2241 = vmatprep.subr.bf16.mxu0 0
      %2242 = vmatpush1.bf16.msra.mxu0 %v1811
      %2243 = vmatprep.subr.bf16.mxu0 0
      %2244 = vmatpush1.bf16.msra.mxu0 %v1810
      %2245 = vmatprep.subr.bf16.mxu0 0
      %2246 = vmatpush1.bf16.msra.mxu0 %v1809
      %2247 = vmatprep.subr.bf16.mxu0 0
      %2248 = vmatpush1.bf16.msra.mxu0 %v1808
      %2249 = vmatprep.subr.bf16.mxu0 0
      %2250 = vmatpush1.bf16.msra.mxu0 %v1807
      %2251 = vmatprep.subr.bf16.mxu0 0
      %2252 = vmatpush1.bf16.msra.mxu0 %v1806
      %2253 = vmatprep.subr.bf16.mxu0 0
      %2254 = vmatpush1.bf16.msra.mxu0 %v1805
      %2255 = vmatprep.subr.bf16.mxu0 0
      %2256 = vmatpush2.bf16.msra.mxu0 %v1820
      %2257 = vmatprep.subr.bf16.mxu0 0
      %2258 = vmatpush2.bf16.msra.mxu0 %v1819
      %2259 = vmatprep.subr.bf16.mxu0 0
      %2260 = vmatpush2.bf16.msra.mxu0 %v1818
      %2261 = vmatprep.subr.bf16.mxu0 0
      %2262 = vmatpush2.bf16.msra.mxu0 %v1817
      %2263 = vmatprep.subr.bf16.mxu0 0
      %2264 = vmatpush2.bf16.msra.mxu0 %v1816
      %2265 = vmatprep.subr.bf16.mxu0 0
      %2266 = vmatpush2.bf16.msra.mxu0 %v1815
      %2267 = vmatprep.subr.bf16.mxu0 0
      %2268 = vmatpush2.bf16.msra.mxu0 %v1814
      %2269 = vmatprep.subr.bf16.mxu0 0
      %2270 = vmatpush2.bf16.msra.mxu0 %v1813
      %2271 = vmatprep.mubr.bf16.mxu0 %v1202
      %2272 = vmatmul.mubr.bf16.gmra.mxu0 %v1201
      %v2273 = vpop.f32.mrf.mxu0
      %v2274 = vadd.f32 %v2113, %v2273
      %v2275 = vpop.f32.mrf.mxu0
      %v2276 = vpop.f32.mrf.mxu0
      %v2277 = vadd.f32 %v2116, %v2276
      %v2278 = vpop.f32.mrf.mxu0
      %2279 = vmatprep.mubr.bf16.mxu0 %v1211
      %2280 = vmatmul.mubr.bf16.gmra.mxu0 %v1210
      %v2281 = vpop.f32.mrf.mxu0
      %v2282 = vadd.f32 %v2121, %v2281
      %v2283 = vpop.f32.mrf.mxu0
      %v2284 = vpop.f32.mrf.mxu0
      %v2285 = vadd.f32 %v2124, %v2284
      %v2286 = vpop.f32.mrf.mxu0
      %2287 = vmatprep.mubr.bf16.mxu0 %v1220
      %2288 = vmatmul.mubr.bf16.gmra.mxu0 %v1219
      %v2289 = vpop.f32.mrf.mxu0
      %v2290 = vadd.f32 %v2129, %v2289
      %v2291 = vpop.f32.mrf.mxu0
      %v2292 = vpop.f32.mrf.mxu0
      %v2293 = vadd.f32 %v2132, %v2292
      %v2294 = vpop.f32.mrf.mxu0
      %2295 = vmatprep.mubr.bf16.mxu0 %v1229
      %2296 = vmatmul.mubr.bf16.gmra.mxu0 %v1228
      %v2297 = vpop.f32.mrf.mxu0
      %v2298 = vadd.f32 %v2137, %v2297
      %v2299 = vpop.f32.mrf.mxu0
      %v2300 = vpop.f32.mrf.mxu0
      %v2301 = vadd.f32 %v2140, %v2300
      %v2302 = vpop.f32.mrf.mxu0
      %2303 = vmatprep.mubr.bf16.mxu0 %v1238
      %2304 = vmatmul.mubr.bf16.gmra.mxu0 %v1237
      %v2305 = vpop.f32.mrf.mxu0
      %v2306 = vadd.f32 %v2145, %v2305
      %v2307 = vpop.f32.mrf.mxu0
      %v2308 = vpop.f32.mrf.mxu0
      %v2309 = vadd.f32 %v2148, %v2308
      %v2310 = vpop.f32.mrf.mxu0
      %2311 = vmatprep.mubr.bf16.mxu0 %v1247
      %2312 = vmatmul.mubr.bf16.gmra.mxu0 %v1246
      %v2313 = vpop.f32.mrf.mxu0
      %v2314 = vadd.f32 %v2153, %v2313
      %v2315 = vpop.f32.mrf.mxu0
      %v2316 = vpop.f32.mrf.mxu0
      %v2317 = vadd.f32 %v2156, %v2316
      %v2318 = vpop.f32.mrf.mxu0
      %2319 = vmatprep.mubr.bf16.mxu0 %v1256
      %2320 = vmatmul.mubr.bf16.gmra.mxu0 %v1255
      %v2321 = vpop.f32.mrf.mxu0
      %v2322 = vadd.f32 %v2161, %v2321
      %v2323 = vpop.f32.mrf.mxu0
      %v2324 = vpop.f32.mrf.mxu0
      %v2325 = vadd.f32 %v2164, %v2324
      %v2326 = vpop.f32.mrf.mxu0
      %2327 = vmatprep.mubr.bf16.mxu0 %v1265
      %2328 = vmatmul.mubr.bf16.gmra.mxu0 %v1264
      %v2329 = vpop.f32.mrf.mxu0
      %v2330 = vadd.f32 %v2169, %v2329
      %v2331 = vpop.f32.mrf.mxu0
      %v2332 = vpop.f32.mrf.mxu0
      %v2333 = vadd.f32 %v2172, %v2332
      %v2334 = vpop.f32.mrf.mxu0
      %2335 = vmatprep.mubr.bf16.mxu0 %v1274
      %2336 = vmatmul.mubr.bf16.gmra.mxu0 %v1273
      %v2337 = vpop.f32.mrf.mxu0
      %v2338 = vadd.f32 %v2177, %v2337
      %v2339 = vpop.f32.mrf.mxu0
      %v2340 = vpop.f32.mrf.mxu0
      %v2341 = vadd.f32 %v2180, %v2340
      %v2342 = vpop.f32.mrf.mxu0
      %2343 = vmatprep.mubr.bf16.mxu0 %v1283
      %2344 = vmatmul.mubr.bf16.gmra.mxu0 %v1282
      %v2345 = vpop.f32.mrf.mxu0
      %v2346 = vadd.f32 %v2185, %v2345
      %v2347 = vpop.f32.mrf.mxu0
      %v2348 = vpop.f32.mrf.mxu0
      %v2349 = vadd.f32 %v2188, %v2348
      %v2350 = vpop.f32.mrf.mxu0
      %2351 = vmatprep.mubr.bf16.mxu0 %v1292
      %2352 = vmatmul.mubr.bf16.gmra.mxu0 %v1291
      %v2353 = vpop.f32.mrf.mxu0
      %v2354 = vadd.f32 %v2193, %v2353
      %v2355 = vpop.f32.mrf.mxu0
      %v2356 = vpop.f32.mrf.mxu0
      %v2357 = vadd.f32 %v2196, %v2356
      %v2358 = vpop.f32.mrf.mxu0
      %2359 = vmatprep.mubr.bf16.mxu0 %v1301
      %2360 = vmatmul.mubr.bf16.gmra.mxu0 %v1300
      %v2361 = vpop.f32.mrf.mxu0
      %v2362 = vadd.f32 %v2201, %v2361
      %v2363 = vpop.f32.mrf.mxu0
      %v2364 = vpop.f32.mrf.mxu0
      %v2365 = vadd.f32 %v2204, %v2364
      %v2366 = vpop.f32.mrf.mxu0
      %2367 = vmatprep.mubr.bf16.mxu0 %v1310
      %2368 = vmatmul.mubr.bf16.gmra.mxu0 %v1309
      %v2369 = vpop.f32.mrf.mxu0
      %v2370 = vadd.f32 %v2209, %v2369
      %v2371 = vpop.f32.mrf.mxu0
      %v2372 = vpop.f32.mrf.mxu0
      %v2373 = vadd.f32 %v2212, %v2372
      %v2374 = vpop.f32.mrf.mxu0
      %2375 = vmatprep.mubr.bf16.mxu0 %v1319
      %2376 = vmatmul.mubr.bf16.gmra.mxu0 %v1318
      %v2377 = vpop.f32.mrf.mxu0
      %v2378 = vadd.f32 %v2217, %v2377
      %v2379 = vpop.f32.mrf.mxu0
      %v2380 = vpop.f32.mrf.mxu0
      %v2381 = vadd.f32 %v2220, %v2380
      %v2382 = vpop.f32.mrf.mxu0
      %2383 = vmatprep.mubr.bf16.mxu0 %v1328
      %2384 = vmatmul.mubr.bf16.gmra.mxu0 %v1327
      %v2385 = vpop.f32.mrf.mxu0
      %v2386 = vadd.f32 %v2225, %v2385
      %v2387 = vpop.f32.mrf.mxu0
      %v2388 = vpop.f32.mrf.mxu0
      %v2389 = vadd.f32 %v2228, %v2388
      %v2390 = vpop.f32.mrf.mxu0
      %2391 = vmatprep.mubr.bf16.mxu0 %v1337
      %2392 = vmatmul.mubr.bf16.gmra.mxu0 %v1336
      %v2393 = vpop.f32.mrf.mxu0
      %v2394 = vadd.f32 %v2233, %v2393
      %v2395 = vpop.f32.mrf.mxu0
      %v2396 = vpop.f32.mrf.mxu0
      %v2397 = vadd.f32 %v2236, %v2396
      %v2398 = vpop.f32.mrf.mxu0
      %2399 = vdwg.mxu0
      %2400 = vmatprep.subr.bf16.mxu0 0
      %2401 = vmatpush1.bf16.msra.mxu0 %v1828
      %2402 = vmatprep.subr.bf16.mxu0 0
      %2403 = vmatpush1.bf16.msra.mxu0 %v1827
      %2404 = vmatprep.subr.bf16.mxu0 0
      %2405 = vmatpush1.bf16.msra.mxu0 %v1826
      %2406 = vmatprep.subr.bf16.mxu0 0
      %2407 = vmatpush1.bf16.msra.mxu0 %v1825
      %2408 = vmatprep.subr.bf16.mxu0 0
      %2409 = vmatpush1.bf16.msra.mxu0 %v1824
      %2410 = vmatprep.subr.bf16.mxu0 0
      %2411 = vmatpush1.bf16.msra.mxu0 %v1823
      %2412 = vmatprep.subr.bf16.mxu0 0
      %2413 = vmatpush1.bf16.msra.mxu0 %v1822
      %2414 = vmatprep.subr.bf16.mxu0 0
      %2415 = vmatpush1.bf16.msra.mxu0 %v1821
      %2416 = vmatprep.subr.bf16.mxu0 0
      %2417 = vmatpush2.bf16.msra.mxu0 %v1836
      %2418 = vmatprep.subr.bf16.mxu0 0
      %2419 = vmatpush2.bf16.msra.mxu0 %v1835
      %2420 = vmatprep.subr.bf16.mxu0 0
      %2421 = vmatpush2.bf16.msra.mxu0 %v1834
      %2422 = vmatprep.subr.bf16.mxu0 0
      %2423 = vmatpush2.bf16.msra.mxu0 %v1833
      %2424 = vmatprep.subr.bf16.mxu0 0
      %2425 = vmatpush2.bf16.msra.mxu0 %v1832
      %2426 = vmatprep.subr.bf16.mxu0 0
      %2427 = vmatpush2.bf16.msra.mxu0 %v1831
      %2428 = vmatprep.subr.bf16.mxu0 0
      %2429 = vmatpush2.bf16.msra.mxu0 %v1830
      %2430 = vmatprep.subr.bf16.mxu0 0
      %2431 = vmatpush2.bf16.msra.mxu0 %v1829
      %2432 = vmatprep.mubr.bf16.mxu0 %v1204
      %2433 = vmatmul.mubr.bf16.gmra.mxu0 %v1203
      %v2434 = vpop.f32.mrf.mxu0
      %v2435 = vadd.f32 %v2274, %v2434
      %v2436 = vpop.f32.mrf.mxu0
      %v2437 = vpop.f32.mrf.mxu0
      %v2438 = vadd.f32 %v2277, %v2437
      %v2439 = vpop.f32.mrf.mxu0
      %2440 = vmatprep.mubr.bf16.mxu0 %v1213
      %2441 = vmatmul.mubr.bf16.gmra.mxu0 %v1212
      %v2442 = vpop.f32.mrf.mxu0
      %v2443 = vadd.f32 %v2282, %v2442
      %v2444 = vpop.f32.mrf.mxu0
      %v2445 = vpop.f32.mrf.mxu0
      %v2446 = vadd.f32 %v2285, %v2445
      %v2447 = vpop.f32.mrf.mxu0
      %2448 = vmatprep.mubr.bf16.mxu0 %v1222
      %2449 = vmatmul.mubr.bf16.gmra.mxu0 %v1221
      %v2450 = vpop.f32.mrf.mxu0
      %v2451 = vadd.f32 %v2290, %v2450
      %v2452 = vpop.f32.mrf.mxu0
      %v2453 = vpop.f32.mrf.mxu0
      %v2454 = vadd.f32 %v2293, %v2453
      %v2455 = vpop.f32.mrf.mxu0
      %2456 = vmatprep.mubr.bf16.mxu0 %v1231
      %2457 = vmatmul.mubr.bf16.gmra.mxu0 %v1230
      %v2458 = vpop.f32.mrf.mxu0
      %v2459 = vadd.f32 %v2298, %v2458
      %v2460 = vpop.f32.mrf.mxu0
      %v2461 = vpop.f32.mrf.mxu0
      %v2462 = vadd.f32 %v2301, %v2461
      %v2463 = vpop.f32.mrf.mxu0
      %2464 = vmatprep.mubr.bf16.mxu0 %v1240
      %2465 = vmatmul.mubr.bf16.gmra.mxu0 %v1239
      %v2466 = vpop.f32.mrf.mxu0
      %v2467 = vadd.f32 %v2306, %v2466
      %v2468 = vpop.f32.mrf.mxu0
      %v2469 = vpop.f32.mrf.mxu0
      %v2470 = vadd.f32 %v2309, %v2469
      %v2471 = vpop.f32.mrf.mxu0
      %2472 = vmatprep.mubr.bf16.mxu0 %v1249
      %2473 = vmatmul.mubr.bf16.gmra.mxu0 %v1248
      %v2474 = vpop.f32.mrf.mxu0
      %v2475 = vadd.f32 %v2314, %v2474
      %v2476 = vpop.f32.mrf.mxu0
      %v2477 = vpop.f32.mrf.mxu0
      %v2478 = vadd.f32 %v2317, %v2477
      %v2479 = vpop.f32.mrf.mxu0
      %2480 = vmatprep.mubr.bf16.mxu0 %v1258
      %2481 = vmatmul.mubr.bf16.gmra.mxu0 %v1257
      %v2482 = vpop.f32.mrf.mxu0
      %v2483 = vadd.f32 %v2322, %v2482
      %v2484 = vpop.f32.mrf.mxu0
      %v2485 = vpop.f32.mrf.mxu0
      %v2486 = vadd.f32 %v2325, %v2485
      %v2487 = vpop.f32.mrf.mxu0
      %2488 = vmatprep.mubr.bf16.mxu0 %v1267
      %2489 = vmatmul.mubr.bf16.gmra.mxu0 %v1266
      %v2490 = vpop.f32.mrf.mxu0
      %v2491 = vadd.f32 %v2330, %v2490
      %v2492 = vpop.f32.mrf.mxu0
      %v2493 = vpop.f32.mrf.mxu0
      %v2494 = vadd.f32 %v2333, %v2493
      %v2495 = vpop.f32.mrf.mxu0
      %2496 = vmatprep.mubr.bf16.mxu0 %v1276
      %2497 = vmatmul.mubr.bf16.gmra.mxu0 %v1275
      %v2498 = vpop.f32.mrf.mxu0
      %v2499 = vadd.f32 %v2338, %v2498
      %v2500 = vpop.f32.mrf.mxu0
      %v2501 = vpop.f32.mrf.mxu0
      %v2502 = vadd.f32 %v2341, %v2501
      %v2503 = vpop.f32.mrf.mxu0
      %2504 = vmatprep.mubr.bf16.mxu0 %v1285
      %2505 = vmatmul.mubr.bf16.gmra.mxu0 %v1284
      %v2506 = vpop.f32.mrf.mxu0
      %v2507 = vadd.f32 %v2346, %v2506
      %v2508 = vpop.f32.mrf.mxu0
      %v2509 = vpop.f32.mrf.mxu0
      %v2510 = vadd.f32 %v2349, %v2509
      %v2511 = vpop.f32.mrf.mxu0
      %2512 = vmatprep.mubr.bf16.mxu0 %v1294
      %2513 = vmatmul.mubr.bf16.gmra.mxu0 %v1293
      %v2514 = vpop.f32.mrf.mxu0
      %v2515 = vadd.f32 %v2354, %v2514
      %v2516 = vpop.f32.mrf.mxu0
      %v2517 = vpop.f32.mrf.mxu0
      %v2518 = vadd.f32 %v2357, %v2517
      %v2519 = vpop.f32.mrf.mxu0
      %2520 = vmatprep.mubr.bf16.mxu0 %v1303
      %2521 = vmatmul.mubr.bf16.gmra.mxu0 %v1302
      %v2522 = vpop.f32.mrf.mxu0
      %v2523 = vadd.f32 %v2362, %v2522
      %v2524 = vpop.f32.mrf.mxu0
      %v2525 = vpop.f32.mrf.mxu0
      %v2526 = vadd.f32 %v2365, %v2525
      %v2527 = vpop.f32.mrf.mxu0
      %2528 = vmatprep.mubr.bf16.mxu0 %v1312
      %2529 = vmatmul.mubr.bf16.gmra.mxu0 %v1311
      %v2530 = vpop.f32.mrf.mxu0
      %v2531 = vadd.f32 %v2370, %v2530
      %v2532 = vpop.f32.mrf.mxu0
      %v2533 = vpop.f32.mrf.mxu0
      %v2534 = vadd.f32 %v2373, %v2533
      %v2535 = vpop.f32.mrf.mxu0
      %2536 = vmatprep.mubr.bf16.mxu0 %v1321
      %2537 = vmatmul.mubr.bf16.gmra.mxu0 %v1320
      %v2538 = vpop.f32.mrf.mxu0
      %v2539 = vadd.f32 %v2378, %v2538
      %v2540 = vpop.f32.mrf.mxu0
      %v2541 = vpop.f32.mrf.mxu0
      %v2542 = vadd.f32 %v2381, %v2541
      %v2543 = vpop.f32.mrf.mxu0
      %2544 = vmatprep.mubr.bf16.mxu0 %v1330
      %2545 = vmatmul.mubr.bf16.gmra.mxu0 %v1329
      %v2546 = vpop.f32.mrf.mxu0
      %v2547 = vadd.f32 %v2386, %v2546
      %v2548 = vpop.f32.mrf.mxu0
      %v2549 = vpop.f32.mrf.mxu0
      %v2550 = vadd.f32 %v2389, %v2549
      %v2551 = vpop.f32.mrf.mxu0
      %2552 = vmatprep.mubr.bf16.mxu0 %v1339
      %2553 = vmatmul.mubr.bf16.gmra.mxu0 %v1338
      %v2554 = vpop.f32.mrf.mxu0
      %v2555 = vadd.f32 %v2394, %v2554
      %v2556 = vpop.f32.mrf.mxu0
      %v2557 = vpop.f32.mrf.mxu0
      %v2558 = vadd.f32 %v2397, %v2557
      %v2559 = vpop.f32.mrf.mxu0
      %2560 = vdwg.mxu0
      %2561 = vmatprep.subr.bf16.mxu0 0
      %2562 = vmatpush1.bf16.msra.mxu0 %v1844
      %2563 = vmatprep.subr.bf16.mxu0 0
      %2564 = vmatpush1.bf16.msra.mxu0 %v1843
      %2565 = vmatprep.subr.bf16.mxu0 0
      %2566 = vmatpush1.bf16.msra.mxu0 %v1842
      %2567 = vmatprep.subr.bf16.mxu0 0
      %2568 = vmatpush1.bf16.msra.mxu0 %v1841
      %2569 = vmatprep.subr.bf16.mxu0 0
      %2570 = vmatpush1.bf16.msra.mxu0 %v1840
      %2571 = vmatprep.subr.bf16.mxu0 0
      %2572 = vmatpush1.bf16.msra.mxu0 %v1839
      %2573 = vmatprep.subr.bf16.mxu0 0
      %2574 = vmatpush1.bf16.msra.mxu0 %v1838
      %2575 = vmatprep.subr.bf16.mxu0 0
      %2576 = vmatpush1.bf16.msra.mxu0 %v1837
      %2577 = vmatprep.subr.bf16.mxu0 0
      %2578 = vmatpush2.bf16.msra.mxu0 0
      %2579 = vmatprep.subr.bf16.mxu0 0
      %2580 = vmatpush2.bf16.msra.mxu0 0
      %2581 = vmatprep.subr.bf16.mxu0 0
      %2582 = vmatpush2.bf16.msra.mxu0 0
      %2583 = vmatprep.subr.bf16.mxu0 0
      %2584 = vmatpush2.bf16.msra.mxu0 0
      %2585 = vmatprep.subr.bf16.mxu0 0
      %2586 = vmatpush2.bf16.msra.mxu0 0
      %2587 = vmatprep.subr.bf16.mxu0 0
      %2588 = vmatpush2.bf16.msra.mxu0 0
      %2589 = vmatprep.subr.bf16.mxu0 0
      %2590 = vmatpush2.bf16.msra.mxu0 0
      %2591 = vmatprep.subr.bf16.mxu0 0
      %2592 = vmatpush2.bf16.msra.mxu0 0
      %2593 = vmatprep.mubr.bf16.mxu0 0
      %2594 = vmatmul.mubr.bf16.gmra.mxu0 %v1205
      %v2595 = vpop.f32.mrf.mxu0
      %v2596 = vadd.f32 %v2435, %v2595
      %v2597 = vpop.f32.mrf.mxu0
      %v2598 = vpop.f32.mrf.mxu0
      %v2599 = vadd.f32 %v2438, %v2598
      %v2600 = vpop.f32.mrf.mxu0
      %2601 = vmatprep.mubr.bf16.mxu0 0
      %2602 = vmatmul.mubr.bf16.gmra.mxu0 %v1214
      %v2603 = vpop.f32.mrf.mxu0
      %v2604 = vadd.f32 %v2443, %v2603
      %v2605 = vpop.f32.mrf.mxu0
      %v2606 = vpop.f32.mrf.mxu0
      %v2607 = vadd.f32 %v2446, %v2606
      %v2608 = vpop.f32.mrf.mxu0
      %2609 = vmatprep.mubr.bf16.mxu0 0
      %2610 = vmatmul.mubr.bf16.gmra.mxu0 %v1223
      %v2611 = vpop.f32.mrf.mxu0
      %v2612 = vadd.f32 %v2451, %v2611
      %v2613 = vpop.f32.mrf.mxu0
      %v2614 = vpop.f32.mrf.mxu0
      %v2615 = vadd.f32 %v2454, %v2614
      %v2616 = vpop.f32.mrf.mxu0
      %2617 = vmatprep.mubr.bf16.mxu0 0
      %2618 = vmatmul.mubr.bf16.gmra.mxu0 %v1232
      %v2619 = vpop.f32.mrf.mxu0
      %v2620 = vadd.f32 %v2459, %v2619
      %v2621 = vpop.f32.mrf.mxu0
      %v2622 = vpop.f32.mrf.mxu0
      %v2623 = vadd.f32 %v2462, %v2622
      %v2624 = vpop.f32.mrf.mxu0
      %2625 = vmatprep.mubr.bf16.mxu0 0
      %2626 = vmatmul.mubr.bf16.gmra.mxu0 %v1241
      %v2627 = vpop.f32.mrf.mxu0
      %v2628 = vadd.f32 %v2467, %v2627
      %v2629 = vpop.f32.mrf.mxu0
      %v2630 = vpop.f32.mrf.mxu0
      %v2631 = vadd.f32 %v2470, %v2630
      %v2632 = vpop.f32.mrf.mxu0
      %2633 = vmatprep.mubr.bf16.mxu0 0
      %2634 = vmatmul.mubr.bf16.gmra.mxu0 %v1250
      %v2635 = vpop.f32.mrf.mxu0
      %v2636 = vadd.f32 %v2475, %v2635
      %v2637 = vpop.f32.mrf.mxu0
      %v2638 = vpop.f32.mrf.mxu0
      %v2639 = vadd.f32 %v2478, %v2638
      %v2640 = vpop.f32.mrf.mxu0
      %2641 = vmatprep.mubr.bf16.mxu0 0
      %2642 = vmatmul.mubr.bf16.gmra.mxu0 %v1259
      %v2643 = vpop.f32.mrf.mxu0
      %v2644 = vadd.f32 %v2483, %v2643
      %v2645 = vpop.f32.mrf.mxu0
      %v2646 = vpop.f32.mrf.mxu0
      %v2647 = vadd.f32 %v2486, %v2646
      %v2648 = vpop.f32.mrf.mxu0
      %2649 = vmatprep.mubr.bf16.mxu0 0
      %2650 = vmatmul.mubr.bf16.gmra.mxu0 %v1268
      %v2651 = vpop.f32.mrf.mxu0
      %v2652 = vadd.f32 %v2491, %v2651
      %v2653 = vpop.f32.mrf.mxu0
      %v2654 = vpop.f32.mrf.mxu0
      %v2655 = vadd.f32 %v2494, %v2654
      %v2656 = vpop.f32.mrf.mxu0
      %2657 = vmatprep.mubr.bf16.mxu0 0
      %2658 = vmatmul.mubr.bf16.gmra.mxu0 %v1277
      %v2659 = vpop.f32.mrf.mxu0
      %v2660 = vadd.f32 %v2499, %v2659
      %v2661 = vpop.f32.mrf.mxu0
      %v2662 = vpop.f32.mrf.mxu0
      %v2663 = vadd.f32 %v2502, %v2662
      %v2664 = vpop.f32.mrf.mxu0
      %2665 = vmatprep.mubr.bf16.mxu0 0
      %2666 = vmatmul.mubr.bf16.gmra.mxu0 %v1286
      %v2667 = vpop.f32.mrf.mxu0
      %v2668 = vadd.f32 %v2507, %v2667
      %v2669 = vpop.f32.mrf.mxu0
      %v2670 = vpop.f32.mrf.mxu0
      %v2671 = vadd.f32 %v2510, %v2670
      %v2672 = vpop.f32.mrf.mxu0
      %2673 = vmatprep.mubr.bf16.mxu0 0
      %2674 = vmatmul.mubr.bf16.gmra.mxu0 %v1295
      %v2675 = vpop.f32.mrf.mxu0
      %v2676 = vadd.f32 %v2515, %v2675
      %v2677 = vpop.f32.mrf.mxu0
      %v2678 = vpop.f32.mrf.mxu0
      %v2679 = vadd.f32 %v2518, %v2678
      %v2680 = vpop.f32.mrf.mxu0
      %2681 = vmatprep.mubr.bf16.mxu0 0
      %2682 = vmatmul.mubr.bf16.gmra.mxu0 %v1304
      %v2683 = vpop.f32.mrf.mxu0
      %v2684 = vadd.f32 %v2523, %v2683
      %v2685 = vpop.f32.mrf.mxu0
      %v2686 = vpop.f32.mrf.mxu0
      %v2687 = vadd.f32 %v2526, %v2686
      %v2688 = vpop.f32.mrf.mxu0
      %2689 = vmatprep.mubr.bf16.mxu0 0
      %2690 = vmatmul.mubr.bf16.gmra.mxu0 %v1313
      %v2691 = vpop.f32.mrf.mxu0
      %v2692 = vadd.f32 %v2531, %v2691
      %v2693 = vpop.f32.mrf.mxu0
      %v2694 = vpop.f32.mrf.mxu0
      %v2695 = vadd.f32 %v2534, %v2694
      %v2696 = vpop.f32.mrf.mxu0
      %2697 = vmatprep.mubr.bf16.mxu0 0
      %2698 = vmatmul.mubr.bf16.gmra.mxu0 %v1322
      %v2699 = vpop.f32.mrf.mxu0
      %v2700 = vadd.f32 %v2539, %v2699
      %v2701 = vpop.f32.mrf.mxu0
      %v2702 = vpop.f32.mrf.mxu0
      %v2703 = vadd.f32 %v2542, %v2702
      %v2704 = vpop.f32.mrf.mxu0
      %2705 = vmatprep.mubr.bf16.mxu0 0
      %2706 = vmatmul.mubr.bf16.gmra.mxu0 %v1331
      %v2707 = vpop.f32.mrf.mxu0
      %v2708 = vadd.f32 %v2547, %v2707
      %v2709 = vpop.f32.mrf.mxu0
      %v2710 = vpop.f32.mrf.mxu0
      %v2711 = vadd.f32 %v2550, %v2710
      %v2712 = vpop.f32.mrf.mxu0
      %2713 = vmatprep.mubr.bf16.mxu0 0
      %2714 = vmatmul.mubr.bf16.gmra.mxu0 %v1340
      %v2715 = vpop.f32.mrf.mxu0
      %v2716 = vadd.f32 %v2555, %v2715
      %v2717 = vpop.f32.mrf.mxu0
      %v2718 = vpop.f32.mrf.mxu0
      %v2719 = vadd.f32 %v2558, %v2718
      %v2720 = vpop.f32.mrf.mxu0
      %2721 = vdwg.mxu0
      %v2722 = vld [vmem:[%s415] sm:$0x1]
      %v2724 = vlaneseq
      %v2725 = vshrl.u32 %v2724, 7
      %v2726 = vsub.s32 0, %v2725
      %v2727 = vrot.slane %v2722, %v2726
      %v2729 = vmul.f32 %v2596, %v2727
      %v2730 = vmul.f32 %v2599, %v2727
      %v2731 = vmul.f32 %v2604, %v2727
      %v2732 = vmul.f32 %v2607, %v2727
      %v2733 = vmul.f32 %v2612, %v2727
      %v2734 = vmul.f32 %v2615, %v2727
      %v2735 = vmul.f32 %v2620, %v2727
      %v2736 = vmul.f32 %v2623, %v2727
      %v2737 = vmul.f32 %v2628, %v2727
      %v2738 = vmul.f32 %v2631, %v2727
      %v2739 = vmul.f32 %v2636, %v2727
      %v2740 = vmul.f32 %v2639, %v2727
      %v2741 = vmul.f32 %v2644, %v2727
      %v2742 = vmul.f32 %v2647, %v2727
      %v2743 = vmul.f32 %v2652, %v2727
      %v2744 = vmul.f32 %v2655, %v2727
      %v2745 = vmul.f32 %v2660, %v2727
      %v2746 = vmul.f32 %v2663, %v2727
      %v2747 = vmul.f32 %v2668, %v2727
      %v2748 = vmul.f32 %v2671, %v2727
      %v2749 = vmul.f32 %v2676, %v2727
      %v2750 = vmul.f32 %v2679, %v2727
      %v2751 = vmul.f32 %v2684, %v2727
      %v2752 = vmul.f32 %v2687, %v2727
      %v2753 = vmul.f32 %v2692, %v2727
      %v2754 = vmul.f32 %v2695, %v2727
      %v2755 = vmul.f32 %v2700, %v2727
      %v2756 = vmul.f32 %v2703, %v2727
      %v2757 = vmul.f32 %v2708, %v2727
      %v2758 = vmul.f32 %v2711, %v2727
      %v2759 = vmul.f32 %v2716, %v2727
      %v2760 = vmul.f32 %v2719, %v2727
      %v2761 = vld [vmem:[%s418] sm:$0x1]
      %v2763 = vlaneseq
      %v2764 = vshrl.u32 %v2763, 7
      %v2765 = vsub.s32 0, %v2764
      %v2766 = vrot.slane %v2761, %v2765
      %v2768 = vadd.f32 %v2729, %v2766
      %v2769 = vadd.f32 %v2730, %v2766
      %v2770 = vadd.f32 %v2731, %v2766
      %v2771 = vadd.f32 %v2732, %v2766
      %v2772 = vadd.f32 %v2733, %v2766
      %v2773 = vadd.f32 %v2734, %v2766
      %v2774 = vadd.f32 %v2735, %v2766
      %v2775 = vadd.f32 %v2736, %v2766
      %v2776 = vadd.f32 %v2737, %v2766
      %v2777 = vadd.f32 %v2738, %v2766
      %v2778 = vadd.f32 %v2739, %v2766
      %v2779 = vadd.f32 %v2740, %v2766
      %v2780 = vadd.f32 %v2741, %v2766
      %v2781 = vadd.f32 %v2742, %v2766
      %v2782 = vadd.f32 %v2743, %v2766
      %v2783 = vadd.f32 %v2744, %v2766
      %v2784 = vadd.f32 %v2745, %v2766
      %v2785 = vadd.f32 %v2746, %v2766
      %v2786 = vadd.f32 %v2747, %v2766
      %v2787 = vadd.f32 %v2748, %v2766
      %v2788 = vadd.f32 %v2749, %v2766
      %v2789 = vadd.f32 %v2750, %v2766
      %v2790 = vadd.f32 %v2751, %v2766
      %v2791 = vadd.f32 %v2752, %v2766
      %v2792 = vadd.f32 %v2753, %v2766
      %v2793 = vadd.f32 %v2754, %v2766
      %v2794 = vadd.f32 %v2755, %v2766
      %v2795 = vadd.f32 %v2756, %v2766
      %v2796 = vadd.f32 %v2757, %v2766
      %v2797 = vadd.f32 %v2758, %v2766
      %v2798 = vadd.f32 %v2759, %v2766
      %v2799 = vadd.f32 %v2760, %v2766
      %v2800 = vld [vmem:[%s423] sm:$0xf]
      %v2801 = vld [vmem:[%s423 + $0x4] sm:$0xf]
      %v2802 = vld [vmem:[%s423 + $0x8] sm:$0xf]
      %v2803 = vld [vmem:[%s423 + $0xc] sm:$0xf]
      %v2804 = vld [vmem:[%s423 + $0x10] sm:$0xf]
      %v2805 = vld [vmem:[%s423 + $0x14] sm:$0xf]
      %v2806 = vld [vmem:[%s423 + $0x18] sm:$0xf]
      %v2807 = vld [vmem:[%s423 + $0x1c] sm:$0xf]
      %v2808 = vld [vmem:[%s423 + $0x20] sm:$0xf]
      %v2809 = vld [vmem:[%s423 + $0x24] sm:$0xf]
      %v2810 = vld [vmem:[%s423 + $0x28] sm:$0xf]
      %v2811 = vld [vmem:[%s423 + $0x2c] sm:$0xf]
      %v2812 = vld [vmem:[%s423 + $0x30] sm:$0xf]
      %v2813 = vld [vmem:[%s423 + $0x34] sm:$0xf]
      %v2814 = vld [vmem:[%s423 + $0x38] sm:$0xf]
      %v2815 = vld [vmem:[%s423 + $0x3c] sm:$0xf]
      %v2816 = vld [vmem:[%s423 + $0x40] sm:$0xf]
      %v2817 = vld [vmem:[%s423 + $0x44] sm:$0xf]
      %v2818 = vld [vmem:[%s423 + $0x48] sm:$0xf]
      %v2819 = vld [vmem:[%s423 + $0x4c] sm:$0xf]
      %v2820 = vld [vmem:[%s423 + $0x50] sm:$0xf]
      %v2821 = vld [vmem:[%s423 + $0x54] sm:$0xf]
      %v2822 = vld [vmem:[%s423 + $0x58] sm:$0xf]
      %v2823 = vld [vmem:[%s423 + $0x5c] sm:$0xf]
      %v2824 = vld [vmem:[%s423 + $0x60] sm:$0xf]
      %v2825 = vld [vmem:[%s423 + $0x64] sm:$0xf]
      %v2826 = vld [vmem:[%s423 + $0x68] sm:$0xf]
      %v2827 = vld [vmem:[%s423 + $0x6c] sm:$0xf]
      %v2828 = vld [vmem:[%s423 + $0x70] sm:$0xf]
      %v2829 = vld [vmem:[%s423 + $0x74] sm:$0xf]
      %v2830 = vld [vmem:[%s423 + $0x78] sm:$0xf]
      %v2831 = vld [vmem:[%s423 + $0x7c] sm:$0xf]
      %v2832 = vld [vmem:[%s428] sm:$0xf]
      %v2833 = vld [vmem:[%s428 + $0x4] sm:$0xf]
      %v2834 = vld [vmem:[%s428 + $0x8] sm:$0xf]
      %v2835 = vld [vmem:[%s428 + $0xc] sm:$0xf]
      %v2836 = vld [vmem:[%s428 + $0x10] sm:$0xf]
      %v2837 = vld [vmem:[%s428 + $0x14] sm:$0xf]
      %v2838 = vld [vmem:[%s428 + $0x18] sm:$0xf]
      %v2839 = vld [vmem:[%s428 + $0x1c] sm:$0xf]
      %v2840 = vld [vmem:[%s428 + $0x20] sm:$0xf]
      %v2841 = vld [vmem:[%s428 + $0x24] sm:$0xf]
      %v2842 = vld [vmem:[%s428 + $0x28] sm:$0xf]
      %v2843 = vld [vmem:[%s428 + $0x2c] sm:$0xf]
      %v2844 = vld [vmem:[%s428 + $0x30] sm:$0xf]
      %v2845 = vld [vmem:[%s428 + $0x34] sm:$0xf]
      %v2846 = vld [vmem:[%s428 + $0x38] sm:$0xf]
      %v2847 = vld [vmem:[%s428 + $0x3c] sm:$0xf]
      %v2880 = vunpack.c.l.b16 %v2800
      %v2881 = vunpack.c.l.b16 %v2801
      %v2882 = vunpack.c.l.b16 %v2802
      %v2883 = vunpack.c.l.b16 %v2803
      %v2884 = vunpack.c.l.b16 %v2804
      %v2885 = vunpack.c.l.b16 %v2805
      %v2886 = vunpack.c.l.b16 %v2806
      %v2887 = vunpack.c.l.b16 %v2807
      %v2888 = vunpack.c.l.b16 %v2808
      %v2889 = vunpack.c.l.b16 %v2809
      %v2890 = vunpack.c.l.b16 %v2810
      %v2891 = vunpack.c.l.b16 %v2811
      %v2892 = vunpack.c.l.b16 %v2812
      %v2893 = vunpack.c.l.b16 %v2813
      %v2894 = vunpack.c.l.b16 %v2814
      %v2895 = vunpack.c.l.b16 %v2815
      %v2896 = vunpack.c.l.b16 %v2816
      %v2897 = vunpack.c.l.b16 %v2817
      %v2898 = vunpack.c.l.b16 %v2818
      %v2899 = vunpack.c.l.b16 %v2819
      %v2900 = vunpack.c.l.b16 %v2820
      %v2901 = vunpack.c.l.b16 %v2821
      %v2902 = vunpack.c.l.b16 %v2822
      %v2903 = vunpack.c.l.b16 %v2823
      %v2904 = vunpack.c.l.b16 %v2824
      %v2905 = vunpack.c.l.b16 %v2825
      %v2906 = vunpack.c.l.b16 %v2826
      %v2907 = vunpack.c.l.b16 %v2827
      %v2908 = vunpack.c.l.b16 %v2828
      %v2909 = vunpack.c.l.b16 %v2829
      %v2910 = vunpack.c.l.b16 %v2830
      %v2911 = vunpack.c.l.b16 %v2831
      %v2912 = vpack.c.b16 %v2881, %v2880
      %v2913 = vpack.c.b16 %v2883, %v2882
      %v2914 = vpack.c.b16 %v2885, %v2884
      %v2915 = vpack.c.b16 %v2887, %v2886
      %v2916 = vpack.c.b16 %v2889, %v2888
      %v2917 = vpack.c.b16 %v2891, %v2890
      %v2918 = vpack.c.b16 %v2893, %v2892
      %v2919 = vpack.c.b16 %v2895, %v2894
      %v2920 = vpack.c.b16 %v2897, %v2896
      %v2921 = vpack.c.b16 %v2899, %v2898
      %v2922 = vpack.c.b16 %v2901, %v2900
      %v2923 = vpack.c.b16 %v2903, %v2902
      %v2924 = vpack.c.b16 %v2905, %v2904
      %v2925 = vpack.c.b16 %v2907, %v2906
      %v2926 = vpack.c.b16 %v2909, %v2908
      %v2927 = vpack.c.b16 %v2911, %v2910
      %v2960 = vunpack.c.l.b16 %v2832
      %v2961 = vunpack.c.l.b16 %v2833
      %v2962 = vunpack.c.l.b16 %v2834
      %v2963 = vunpack.c.l.b16 %v2835
      %v2964 = vunpack.c.l.b16 %v2836
      %v2965 = vunpack.c.l.b16 %v2837
      %v2966 = vunpack.c.l.b16 %v2838
      %v2967 = vunpack.c.l.b16 %v2839
      %v2968 = vunpack.c.l.b16 %v2840
      %v2969 = vunpack.c.l.b16 %v2841
      %v2970 = vunpack.c.l.b16 %v2842
      %v2971 = vunpack.c.l.b16 %v2843
      %v2972 = vunpack.c.l.b16 %v2844
      %v2973 = vunpack.c.l.b16 %v2845
      %v2974 = vunpack.c.l.b16 %v2846
      %v2975 = vunpack.c.l.b16 %v2847
      %v2976 = vpack.c.b16 %v2961, %v2960
      %v2977 = vpack.c.b16 %v2963, %v2962
      %v2978 = vpack.c.b16 %v2965, %v2964
      %v2979 = vpack.c.b16 %v2967, %v2966
      %v2980 = vpack.c.b16 %v2969, %v2968
      %v2981 = vpack.c.b16 %v2971, %v2970
      %v2982 = vpack.c.b16 %v2973, %v2972
      %v2983 = vpack.c.b16 %v2975, %v2974
      %2992 = vmatprep.subr.bf16.mxu0 0
      %2993 = vmatpush1.bf16.msra.mxu0 %v2983
      %2994 = vmatprep.subr.bf16.mxu0 0
      %2995 = vmatpush1.bf16.msra.mxu0 %v2982
      %2996 = vmatprep.subr.bf16.mxu0 0
      %2997 = vmatpush1.bf16.msra.mxu0 %v2981
      %2998 = vmatprep.subr.bf16.mxu0 0
      %2999 = vmatpush1.bf16.msra.mxu0 %v2980
      %3000 = vmatprep.subr.bf16.mxu0 0
      %3001 = vmatpush1.bf16.msra.mxu0 %v2979
      %3002 = vmatprep.subr.bf16.mxu0 0
      %3003 = vmatpush1.bf16.msra.mxu0 %v2978
      %3004 = vmatprep.subr.bf16.mxu0 0
      %3005 = vmatpush1.bf16.msra.mxu0 %v2977
      %3006 = vmatprep.subr.bf16.mxu0 0
      %3007 = vmatpush1.bf16.msra.mxu0 %v2976
      %3008 = vmatprep.subr.bf16.mxu0 0
      %3009 = vmatpush2.bf16.msra.mxu0 0
      %3010 = vmatprep.subr.bf16.mxu0 0
      %3011 = vmatpush2.bf16.msra.mxu0 0
      %3012 = vmatprep.subr.bf16.mxu0 0
      %3013 = vmatpush2.bf16.msra.mxu0 0
      %3014 = vmatprep.subr.bf16.mxu0 0
      %3015 = vmatpush2.bf16.msra.mxu0 0
      %3016 = vmatprep.subr.bf16.mxu0 0
      %3017 = vmatpush2.bf16.msra.mxu0 0
      %3018 = vmatprep.subr.bf16.mxu0 0
      %3019 = vmatpush2.bf16.msra.mxu0 0
      %3020 = vmatprep.subr.bf16.mxu0 0
      %3021 = vmatpush2.bf16.msra.mxu0 0
      %3022 = vmatprep.subr.bf16.mxu0 0
      %3023 = vmatpush2.bf16.msra.mxu0 0
      %3024 = vmatprep.mubr.bf16.mxu0 0
      %3025 = vmatmul.mubr.bf16.gmra.mxu0 %v2912
      %v3026 = vpop.f32.mrf.mxu0
      %v3027 = vadd.f32 0.0, %v3026
      %v3028 = vpop.f32.mrf.mxu0
      %v3029 = vpop.f32.mrf.mxu0
      %v3030 = vadd.f32 0.0, %v3029
      %v3031 = vpop.f32.mrf.mxu0
      %3032 = vmatprep.mubr.bf16.mxu0 0
      %3033 = vmatmul.mubr.bf16.gmra.mxu0 %v2913
      %v3034 = vpop.f32.mrf.mxu0
      %v3035 = vadd.f32 0.0, %v3034
      %v3036 = vpop.f32.mrf.mxu0
      %v3037 = vpop.f32.mrf.mxu0
      %v3038 = vadd.f32 0.0, %v3037
      %v3039 = vpop.f32.mrf.mxu0
      %3040 = vmatprep.mubr.bf16.mxu0 0
      %3041 = vmatmul.mubr.bf16.gmra.mxu0 %v2914
      %v3042 = vpop.f32.mrf.mxu0
      %v3043 = vadd.f32 0.0, %v3042
      %v3044 = vpop.f32.mrf.mxu0
      %v3045 = vpop.f32.mrf.mxu0
      %v3046 = vadd.f32 0.0, %v3045
      %v3047 = vpop.f32.mrf.mxu0
      %3048 = vmatprep.mubr.bf16.mxu0 0
      %3049 = vmatmul.mubr.bf16.gmra.mxu0 %v2915
      %v3050 = vpop.f32.mrf.mxu0
      %v3051 = vadd.f32 0.0, %v3050
      %v3052 = vpop.f32.mrf.mxu0
      %v3053 = vpop.f32.mrf.mxu0
      %v3054 = vadd.f32 0.0, %v3053
      %v3055 = vpop.f32.mrf.mxu0
      %3056 = vmatprep.mubr.bf16.mxu0 0
      %3057 = vmatmul.mubr.bf16.gmra.mxu0 %v2916
      %v3058 = vpop.f32.mrf.mxu0
      %v3059 = vadd.f32 0.0, %v3058
      %v3060 = vpop.f32.mrf.mxu0
      %v3061 = vpop.f32.mrf.mxu0
      %v3062 = vadd.f32 0.0, %v3061
      %v3063 = vpop.f32.mrf.mxu0
      %3064 = vmatprep.mubr.bf16.mxu0 0
      %3065 = vmatmul.mubr.bf16.gmra.mxu0 %v2917
      %v3066 = vpop.f32.mrf.mxu0
      %v3067 = vadd.f32 0.0, %v3066
      %v3068 = vpop.f32.mrf.mxu0
      %v3069 = vpop.f32.mrf.mxu0
      %v3070 = vadd.f32 0.0, %v3069
      %v3071 = vpop.f32.mrf.mxu0
      %3072 = vmatprep.mubr.bf16.mxu0 0
      %3073 = vmatmul.mubr.bf16.gmra.mxu0 %v2918
      %v3074 = vpop.f32.mrf.mxu0
      %v3075 = vadd.f32 0.0, %v3074
      %v3076 = vpop.f32.mrf.mxu0
      %v3077 = vpop.f32.mrf.mxu0
      %v3078 = vadd.f32 0.0, %v3077
      %v3079 = vpop.f32.mrf.mxu0
      %3080 = vmatprep.mubr.bf16.mxu0 0
      %3081 = vmatmul.mubr.bf16.gmra.mxu0 %v2919
      %v3082 = vpop.f32.mrf.mxu0
      %v3083 = vadd.f32 0.0, %v3082
      %v3084 = vpop.f32.mrf.mxu0
      %v3085 = vpop.f32.mrf.mxu0
      %v3086 = vadd.f32 0.0, %v3085
      %v3087 = vpop.f32.mrf.mxu0
      %3088 = vmatprep.mubr.bf16.mxu0 0
      %3089 = vmatmul.mubr.bf16.gmra.mxu0 %v2920
      %v3090 = vpop.f32.mrf.mxu0
      %v3091 = vadd.f32 0.0, %v3090
      %v3092 = vpop.f32.mrf.mxu0
      %v3093 = vpop.f32.mrf.mxu0
      %v3094 = vadd.f32 0.0, %v3093
      %v3095 = vpop.f32.mrf.mxu0
      %3096 = vmatprep.mubr.bf16.mxu0 0
      %3097 = vmatmul.mubr.bf16.gmra.mxu0 %v2921
      %v3098 = vpop.f32.mrf.mxu0
      %v3099 = vadd.f32 0.0, %v3098
      %v3100 = vpop.f32.mrf.mxu0
      %v3101 = vpop.f32.mrf.mxu0
      %v3102 = vadd.f32 0.0, %v3101
      %v3103 = vpop.f32.mrf.mxu0
      %3104 = vmatprep.mubr.bf16.mxu0 0
      %3105 = vmatmul.mubr.bf16.gmra.mxu0 %v2922
      %v3106 = vpop.f32.mrf.mxu0
      %v3107 = vadd.f32 0.0, %v3106
      %v3108 = vpop.f32.mrf.mxu0
      %v3109 = vpop.f32.mrf.mxu0
      %v3110 = vadd.f32 0.0, %v3109
      %v3111 = vpop.f32.mrf.mxu0
      %3112 = vmatprep.mubr.bf16.mxu0 0
      %3113 = vmatmul.mubr.bf16.gmra.mxu0 %v2923
      %v3114 = vpop.f32.mrf.mxu0
      %v3115 = vadd.f32 0.0, %v3114
      %v3116 = vpop.f32.mrf.mxu0
      %v3117 = vpop.f32.mrf.mxu0
      %v3118 = vadd.f32 0.0, %v3117
      %v3119 = vpop.f32.mrf.mxu0
      %3120 = vmatprep.mubr.bf16.mxu0 0
      %3121 = vmatmul.mubr.bf16.gmra.mxu0 %v2924
      %v3122 = vpop.f32.mrf.mxu0
      %v3123 = vadd.f32 0.0, %v3122
      %v3124 = vpop.f32.mrf.mxu0
      %v3125 = vpop.f32.mrf.mxu0
      %v3126 = vadd.f32 0.0, %v3125
      %v3127 = vpop.f32.mrf.mxu0
      %3128 = vmatprep.mubr.bf16.mxu0 0
      %3129 = vmatmul.mubr.bf16.gmra.mxu0 %v2925
      %v3130 = vpop.f32.mrf.mxu0
      %v3131 = vadd.f32 0.0, %v3130
      %v3132 = vpop.f32.mrf.mxu0
      %v3133 = vpop.f32.mrf.mxu0
      %v3134 = vadd.f32 0.0, %v3133
      %v3135 = vpop.f32.mrf.mxu0
      %3136 = vmatprep.mubr.bf16.mxu0 0
      %3137 = vmatmul.mubr.bf16.gmra.mxu0 %v2926
      %v3138 = vpop.f32.mrf.mxu0
      %v3139 = vadd.f32 0.0, %v3138
      %v3140 = vpop.f32.mrf.mxu0
      %v3141 = vpop.f32.mrf.mxu0
      %v3142 = vadd.f32 0.0, %v3141
      %v3143 = vpop.f32.mrf.mxu0
      %3144 = vmatprep.mubr.bf16.mxu0 0
      %3145 = vmatmul.mubr.bf16.gmra.mxu0 %v2927
      %v3146 = vpop.f32.mrf.mxu0
      %v3147 = vadd.f32 0.0, %v3146
      %v3148 = vpop.f32.mrf.mxu0
      %v3149 = vpop.f32.mrf.mxu0
      %v3150 = vadd.f32 0.0, %v3149
      %v3151 = vpop.f32.mrf.mxu0
      %3152 = vdwg.mxu0
      %v3153 = vld [vmem:[%s431] sm:$0x1]
      %v3155 = vlaneseq
      %v3156 = vshrl.u32 %v3155, 7
      %v3157 = vsub.s32 0, %v3156
      %v3158 = vrot.slane %v3153, %v3157
      %v3160 = vmul.f32 %v3027, %v3158
      %v3161 = vmul.f32 %v3030, %v3158
      %v3162 = vmul.f32 %v3035, %v3158
      %v3163 = vmul.f32 %v3038, %v3158
      %v3164 = vmul.f32 %v3043, %v3158
      %v3165 = vmul.f32 %v3046, %v3158
      %v3166 = vmul.f32 %v3051, %v3158
      %v3167 = vmul.f32 %v3054, %v3158
      %v3168 = vmul.f32 %v3059, %v3158
      %v3169 = vmul.f32 %v3062, %v3158
      %v3170 = vmul.f32 %v3067, %v3158
      %v3171 = vmul.f32 %v3070, %v3158
      %v3172 = vmul.f32 %v3075, %v3158
      %v3173 = vmul.f32 %v3078, %v3158
      %v3174 = vmul.f32 %v3083, %v3158
      %v3175 = vmul.f32 %v3086, %v3158
      %v3176 = vmul.f32 %v3091, %v3158
      %v3177 = vmul.f32 %v3094, %v3158
      %v3178 = vmul.f32 %v3099, %v3158
      %v3179 = vmul.f32 %v3102, %v3158
      %v3180 = vmul.f32 %v3107, %v3158
      %v3181 = vmul.f32 %v3110, %v3158
      %v3182 = vmul.f32 %v3115, %v3158
      %v3183 = vmul.f32 %v3118, %v3158
      %v3184 = vmul.f32 %v3123, %v3158
      %v3185 = vmul.f32 %v3126, %v3158
      %v3186 = vmul.f32 %v3131, %v3158
      %v3187 = vmul.f32 %v3134, %v3158
      %v3188 = vmul.f32 %v3139, %v3158
      %v3189 = vmul.f32 %v3142, %v3158
      %v3190 = vmul.f32 %v3147, %v3158
      %v3191 = vmul.f32 %v3150, %v3158
      %v3192 = vld [vmem:[%s434] sm:$0x1]
      %v3194 = vlaneseq
      %v3195 = vshrl.u32 %v3194, 7
      %v3196 = vsub.s32 0, %v3195
      %v3197 = vrot.slane %v3192, %v3196
      %v3199 = vadd.f32 %v3160, %v3197
      %v3200 = vadd.f32 %v3161, %v3197
      %v3201 = vadd.f32 %v3162, %v3197
      %v3202 = vadd.f32 %v3163, %v3197
      %v3203 = vadd.f32 %v3164, %v3197
      %v3204 = vadd.f32 %v3165, %v3197
      %v3205 = vadd.f32 %v3166, %v3197
      %v3206 = vadd.f32 %v3167, %v3197
      %v3207 = vadd.f32 %v3168, %v3197
      %v3208 = vadd.f32 %v3169, %v3197
      %v3209 = vadd.f32 %v3170, %v3197
      %v3210 = vadd.f32 %v3171, %v3197
      %v3211 = vadd.f32 %v3172, %v3197
      %v3212 = vadd.f32 %v3173, %v3197
      %v3213 = vadd.f32 %v3174, %v3197
      %v3214 = vadd.f32 %v3175, %v3197
      %v3215 = vadd.f32 %v3176, %v3197
      %v3216 = vadd.f32 %v3177, %v3197
      %v3217 = vadd.f32 %v3178, %v3197
      %v3218 = vadd.f32 %v3179, %v3197
      %v3219 = vadd.f32 %v3180, %v3197
      %v3220 = vadd.f32 %v3181, %v3197
      %v3221 = vadd.f32 %v3182, %v3197
      %v3222 = vadd.f32 %v3183, %v3197
      %v3223 = vadd.f32 %v3184, %v3197
      %v3224 = vadd.f32 %v3185, %v3197
      %v3225 = vadd.f32 %v3186, %v3197
      %v3226 = vadd.f32 %v3187, %v3197
      %v3227 = vadd.f32 %v3188, %v3197
      %v3228 = vadd.f32 %v3189, %v3197
      %v3229 = vadd.f32 %v3190, %v3197
      %v3230 = vadd.f32 %v3191, %v3197
      %v3231 = vadd.f32 %v2768, %v3199
      %v3232 = vadd.f32 %v2769, %v3200
      %v3233 = vadd.f32 %v2770, %v3201
      %v3234 = vadd.f32 %v2771, %v3202
      %v3235 = vadd.f32 %v2772, %v3203
      %v3236 = vadd.f32 %v2773, %v3204
      %v3237 = vadd.f32 %v2774, %v3205
      %v3238 = vadd.f32 %v2775, %v3206
      %v3239 = vadd.f32 %v2776, %v3207
      %v3240 = vadd.f32 %v2777, %v3208
      %v3241 = vadd.f32 %v2778, %v3209
      %v3242 = vadd.f32 %v2779, %v3210
      %v3243 = vadd.f32 %v2780, %v3211
      %v3244 = vadd.f32 %v2781, %v3212
      %v3245 = vadd.f32 %v2782, %v3213
      %v3246 = vadd.f32 %v2783, %v3214
      %v3247 = vadd.f32 %v2784, %v3215
      %v3248 = vadd.f32 %v2785, %v3216
      %v3249 = vadd.f32 %v2786, %v3217
      %v3250 = vadd.f32 %v2787, %v3218
      %v3251 = vadd.f32 %v2788, %v3219
      %v3252 = vadd.f32 %v2789, %v3220
      %v3253 = vadd.f32 %v2790, %v3221
      %v3254 = vadd.f32 %v2791, %v3222
      %v3255 = vadd.f32 %v2792, %v3223
      %v3256 = vadd.f32 %v2793, %v3224
      %v3257 = vadd.f32 %v2794, %v3225
      %v3258 = vadd.f32 %v2795, %v3226
      %v3259 = vadd.f32 %v2796, %v3227
      %v3260 = vadd.f32 %v2797, %v3228
      %v3261 = vadd.f32 %v2798, %v3229
      %v3262 = vadd.f32 %v2799, %v3230
      %v3263 = vmax.f32 %v3231, 0.0
      %v3264 = vmax.f32 %v3232, 0.0
      %v3265 = vmax.f32 %v3233, 0.0
      %v3266 = vmax.f32 %v3234, 0.0
      %v3267 = vmax.f32 %v3235, 0.0
      %v3268 = vmax.f32 %v3236, 0.0
      %v3269 = vmax.f32 %v3237, 0.0
      %v3270 = vmax.f32 %v3238, 0.0
      %v3271 = vmax.f32 %v3239, 0.0
      %v3272 = vmax.f32 %v3240, 0.0
      %v3273 = vmax.f32 %v3241, 0.0
      %v3274 = vmax.f32 %v3242, 0.0
      %v3275 = vmax.f32 %v3243, 0.0
      %v3276 = vmax.f32 %v3244, 0.0
      %v3277 = vmax.f32 %v3245, 0.0
      %v3278 = vmax.f32 %v3246, 0.0
      %v3279 = vmax.f32 %v3247, 0.0
      %v3280 = vmax.f32 %v3248, 0.0
      %v3281 = vmax.f32 %v3249, 0.0
      %v3282 = vmax.f32 %v3250, 0.0
      %v3283 = vmax.f32 %v3251, 0.0
      %v3284 = vmax.f32 %v3252, 0.0
      %v3285 = vmax.f32 %v3253, 0.0
      %v3286 = vmax.f32 %v3254, 0.0
      %v3287 = vmax.f32 %v3255, 0.0
      %v3288 = vmax.f32 %v3256, 0.0
      %v3289 = vmax.f32 %v3257, 0.0
      %v3290 = vmax.f32 %v3258, 0.0
      %v3291 = vmax.f32 %v3259, 0.0
      %v3292 = vmax.f32 %v3260, 0.0
      %v3293 = vmax.f32 %v3261, 0.0
      %v3294 = vmax.f32 %v3262, 0.0
      %3295 = vst [vmem:[%s442] sm:$0xff] %v3263
      %3296 = vst [vmem:[%s442 + $0x8] sm:$0xff] %v3264
      %3297 = vst [vmem:[%s442 + $0x10] sm:$0xff] %v3265
      %3298 = vst [vmem:[%s442 + $0x18] sm:$0xff] %v3266
      %3299 = vst [vmem:[%s442 + $0x20] sm:$0xff] %v3267
      %3300 = vst [vmem:[%s442 + $0x28] sm:$0xff] %v3268
      %3301 = vst [vmem:[%s442 + $0x30] sm:$0xff] %v3269
      %3302 = vst [vmem:[%s442 + $0x38] sm:$0xff] %v3270
      %3303 = vst [vmem:[%s442 + $0x40] sm:$0xff] %v3271
      %3304 = vst [vmem:[%s442 + $0x48] sm:$0xff] %v3272
      %3305 = vst [vmem:[%s442 + $0x50] sm:$0xff] %v3273
      %3306 = vst [vmem:[%s442 + $0x58] sm:$0xff] %v3274
      %3307 = vst [vmem:[%s442 + $0x60] sm:$0xff] %v3275
      %3308 = vst [vmem:[%s442 + $0x68] sm:$0xff] %v3276
      %3309 = vst [vmem:[%s442 + $0x70] sm:$0xff] %v3277
      %3310 = vst [vmem:[%s442 + $0x78] sm:$0xff] %v3278
      %3311 = vst [vmem:[%s442 + $0x80] sm:$0xff] %v3279
      %3312 = vst [vmem:[%s442 + $0x88] sm:$0xff] %v3280
      %3313 = vst [vmem:[%s442 + $0x90] sm:$0xff] %v3281
      %3314 = vst [vmem:[%s442 + $0x98] sm:$0xff] %v3282
      %3315 = vst [vmem:[%s442 + $0xa0] sm:$0xff] %v3283
      %3316 = vst [vmem:[%s442 + $0xa8] sm:$0xff] %v3284
      %3317 = vst [vmem:[%s442 + $0xb0] sm:$0xff] %v3285
      %3318 = vst [vmem:[%s442 + $0xb8] sm:$0xff] %v3286
      %3319 = vst [vmem:[%s442 + $0xc0] sm:$0xff] %v3287
      %3320 = vst [vmem:[%s442 + $0xc8] sm:$0xff] %v3288
      %3321 = vst [vmem:[%s442 + $0xd0] sm:$0xff] %v3289
      %3322 = vst [vmem:[%s442 + $0xd8] sm:$0xff] %v3290
      %3323 = vst [vmem:[%s442 + $0xe0] sm:$0xff] %v3291
      %3324 = vst [vmem:[%s442 + $0xe8] sm:$0xff] %v3292
      %3325 = vst [vmem:[%s442 + $0xf0] sm:$0xff] %v3293
      %3326 = vst [vmem:[%s442 + $0xf8] sm:$0xff] %v3294
      %s3327 = smul.u32 32, %s23
      %p3328 = scmp.lt.s32.totalorder %s3327, 63
      %s3329 = scalar_select %p3328, %s3327, 63
      %p3330 = scmp.lt.s32.totalorder %s24, 0
      %s3331 = scalar_select %p3330, %s24, 0
      %s3332 = sadd.s32 %s3331, %s3329
      %s3333 = smul.addr %s3332, 8
      %s3334 = scalar_lea.vmem %s8, %s3333
      // Predicated region
      $region53: #{block_forward_pallas.3} parent=51 // pred_check
        %p3335 = pneg %p259
      $region54: #{block_forward_pallas.3} parent=51 // pred_check_branch
        %3337 = sbr.rel (%p3335) target = $region56
      $region55: #{block_forward_pallas.3} parent=51 // pred_region
        %s3338 = smul.u32 32, %s23
      $region56: #{block_forward_pallas.3} parent=51 // pred_fallthru
        _
    $region52: #{block_forward_pallas.3} parent=5 // pred_fallthru
      _
    %p3339 = scmp.le.s32.totalorder 2, %s14
    // Predicated region
    $region57: #{block_forward_pallas.3} parent=5 // pred_check
      %p3340 = pneg %p3339
    $region58: #{block_forward_pallas.3} parent=5 // pred_check_branch
      %3342 = sbr.rel (%p3340) target = $region60
    $region59: #{block_forward_pallas.3} parent=5 // pred_region
      %s3343 = ssub.s32 %s14, 2
      // Predicated region
      $region61: #{block_forward_pallas.3} parent=59 // pred_check
        %p3344 = pneg %p265
      $region62: #{block_forward_pallas.3} parent=59 // pred_check_branch
        %3346 = sbr.rel (%p3344) target = $region64
      $region63: #{block_forward_pallas.3} parent=59 // pred_region
        %s3347 = smul.u32 32, %s25
        %p3348 = scmp.lt.s32.totalorder %s3347, 63
        %s3349 = scalar_select %p3348, %s3347, 63
        %p3350 = scmp.lt.s32.totalorder %s26, 0
        %s3351 = scalar_select %p3350, %s26, 0
        %s3352 = sadd.s32 %s3351, %s3349
        %s3353 = smul.addr %s3352, 8
        %s3354 = scalar_lea.vmem %s8, %s3353
      $region64: #{block_forward_pallas.3} parent=59 // pred_fallthru
        _
    $region60: #{block_forward_pallas.3} parent=5 // pred_fallthru
      _
  $region6: #{block_forward_pallas.3} parent=0 // loop_footer
    %s18 = sadd.s32 1, %s14
  $region7: #{block_forward_pallas.3} parent=0 // loop_footer_branch
    %13 = sbr.rel target = $region3
  $region8: #{block_forward_pallas.3} parent=0 // loop_exit
    _

</llo_original>
